<compile_context>
chip_gen: v5e
topology: v5e:2x2
jax: 0.10.0
libtpu: 0.0.40
codegen_flags: <defaults>
</compile_context>

<pallas_src>
import numpy as np
import jax
import jax.numpy as jnp
from jax.experimental import pallas as pl
from jax.experimental.pallas import tpu as pltpu


def _round_up(x, m):
    return ((x + m - 1) // m) * m


def _attention_kernel(keys_ref, vals_ref, wa_ref, ba_ref, wo_ref, bo_ref, out_ref):
    keys = keys_ref[...].astype(jnp.float32)   # (BB, K)
    vals = vals_ref[...].astype(jnp.float32)   # (BB, V, T) native layout; upcast: v5e VPU has no bf16

    # attention_linear, batched over the whole chunk (MXU, M = BB)
    q = jnp.dot(keys, wa_ref[...], preferred_element_type=jnp.float32) + ba_ref[...]   # (BB, V)

    # attention_weights[b, t] = sum_v q[b, v] * values[b, v, t]
    # VPU broadcast-multiply + sublane reduction; keepdims keeps T on lanes so the result
    # re-broadcasts against vals without a lane<->sublane relayout.
    scores = jnp.sum(vals * q[:, :, None], axis=1, keepdims=True)                       # (BB, 1, T)

    # attended[b, v] = sum_t values[b, v, t] * attention_weights[b, t]
    # VPU broadcast-multiply + lane reduction; result lands with V on lanes -> MXU-ready.
    attended = jnp.sum(vals * scores, axis=2)                                           # (BB, V)

    # output_projection, batched over the chunk (MXU, M = BB)
    out = jnp.dot(attended, wo_ref[...], preferred_element_type=jnp.float32) + bo_ref[...]
    out_ref[...] = out.astype(out_ref.dtype)


def attention_forward(keys, values, params, *, batch_block=64):
    """keys: (B, 1, K); values: (B, V, T) in the module's native layout. Returns (B, O)."""
    B, S, K = keys.shape
    assert S == 1, "module's squeeze(2) requires a single query per batch element"
    Bv, V, T = values.shape
    assert Bv == B
    O = params["w_out"].shape[-1]

    keys2d = keys.reshape(B, K)   # tiny, metadata-only

    # ---- batch-block selection --------------------------------------------------------
    # The (BB, V, T) values block is lane-padded in VMEM (T rounds up to 128), double-
    # buffered, and in-kernel elementwise temporaries are of the same size.  Budget
    # conservatively so we stay under v5e's 16 MiB default scoped VMEM without touching
    # vmem_limit_bytes (v7x only has 64 MiB physical VMEM).
    itemsize = jnp.dtype(values.dtype).itemsize
    padded_row_bytes = _round_up(V, 8) * _round_up(T, 128) * itemsize
    vmem_budget = 12 * 1024 * 1024
    bb_cap = max(8, vmem_budget // (6 * padded_row_bytes))
    BB = int(min(batch_block, B, bb_cap))
    if BB < B:
        BB = max(8, (BB // 8) * 8)   # keep (8,128)-friendly block shapes for the 2-D operands
    grid = (pl.cdiv(B, BB),)         # ragged tail handled by Pallas boundary masking (no jnp.pad)
    # NOTE: on v7x (2 TensorCores) prefer a batch_block giving an even number of grid
    # steps >= 2; on v5e/v6e (single TC) the fewest, largest steps win.
    # TODO(synk): if T grows so that 2*BB*V*T*itemsize nears the scoped-VMEM limit, add a
    # second "arbitrary" grid axis over T with a (BB, V) f32 accumulator instead of shrinking BB.

    wa = params["w_attn"].astype(jnp.float32)                 # (K, V)
    ba = params["b_attn"].reshape(1, V).astype(jnp.float32)   # (1, V)
    wo = params["w_out"].astype(jnp.float32)                  # (V, O)
    bo = params["b_out"].reshape(1, O).astype(jnp.float32)    # (1, O)

    flops = 2 * B * (K * V + 2 * V * T + V * O)
    bytes_accessed = int(values.size) * itemsize + int(keys2d.size) * keys2d.dtype.itemsize \
        + (wa.size + ba.size + wo.size + bo.size) * 4 + B * O * 4

    out = pl.pallas_call(
        _attention_kernel,
        out_shape=jax.ShapeDtypeStruct((B, O), jnp.float32),
        grid_spec=pltpu.PrefetchScalarGridSpec(
            num_scalar_prefetch=0,
            grid=grid,
            in_specs=[
                pl.BlockSpec((BB, K), lambda i: (i, 0)),         # query chunk
                pl.BlockSpec((BB, V, T), lambda i: (i, 0, 0)),   # values chunk, native layout
                pl.BlockSpec((K, V), lambda i: (0, 0)),          # attention_linear weight
                pl.BlockSpec((1, V), lambda i: (0, 0)),          # attention_linear bias
                pl.BlockSpec((V, O), lambda i: (0, 0)),          # output_projection weight
                pl.BlockSpec((1, O), lambda i: (0, 0)),          # output_projection bias
            ],
            out_specs=pl.BlockSpec((BB, O), lambda i: (i, 0)),
        ),
        compiler_params=pltpu.CompilerParams(
            # batch chunks are fully independent -> shard across TensorCores on v7x
            dimension_semantics=("parallel",),
        ),
        cost_estimate=pl.CostEstimate(flops=int(flops), transcendentals=0,
                                      bytes_accessed=int(bytes_accessed)),
    )(keys2d, values, wa, ba, wo, bo)

    return out


# ---------------- pure-JAX reference (mirrors the PyTorch ops exactly) ----------------
def _attention_ref(keys, values, params):
    wa, ba = params["w_attn"], params["b_attn"]
    wo, bo = params["w_out"], params["b_out"]
    k = jnp.einsum("bsk,kv->bsv", keys, wa) + ba              # attention_linear      (B,1,V)
    aw = jnp.einsum("bsv,bvt->bst", k, values)                # matmul(keys, values)  (B,1,T)
    aw = jnp.transpose(aw, (0, 2, 1))                         # .transpose(1,2)       (B,T,1)
    av = jnp.einsum("bvt,bts->bvs", values, aw)[:, :, 0]      # matmul + squeeze(2)   (B,V)
    return av @ wo + bo                                       # output_projection     (B,O)


if __name__ == "__main__":
    B, T = 16, 16
    key_dim, value_dim, output_dim = 128, 128, 128

    root = jax.random.PRNGKey(0)
    ks = jax.random.split(root, 6)

    def linear_init(kw, kb, fan_in, fan_out):
        bound = 1.0 / float(np.sqrt(fan_in))
        w = jax.random.uniform(kw, (fan_in, fan_out), jnp.float32, -bound, bound)
        b = jax.random.uniform(kb, (fan_out,), jnp.float32, -bound, bound)
        return w, b

    w_attn, b_attn = linear_init(ks[0], ks[1], key_dim, value_dim)
    w_out, b_out = linear_init(ks[2], ks[3], value_dim, output_dim)
    params = {"w_attn": w_attn, "b_attn": b_attn, "w_out": w_out, "b_out": b_out}

    keys = jax.random.normal(ks[4], (B, 1, key_dim), jnp.float32)
    values = jax.random.normal(ks[5], (B, value_dim, T), jnp.float32)

    out = jax.block_until_ready(attention_forward(keys, values, params))

    ref = np.asarray(_attention_ref(keys, values, params))
    out_np = np.asarray(out)
    assert out_np.shape == (B, output_dim)

    # scale-relative tolerance (MXU f32 matmuls use multi-pass bf16; error is scale-free)
    scale = float(np.max(np.abs(ref))) + 1e-6
    max_err = float(np.max(np.abs(out_np - ref)))
    assert max_err <= 2e-2 * scale, f"max_err={max_err}, scale={scale}"
    print("KERNEL_OK")
</pallas_src>

<mosaic_0001>
module attributes {stable_mosaic.version = 11 : i64} {
  func.func @_attention_kernel(%arg0: i32, %arg1: memref<16x128xf32, #tpu.memory_space<vmem>>, %arg2: memref<16x128x16xf32, #tpu.memory_space<vmem>>, %arg3: memref<128x128xf32, #tpu.memory_space<vmem>>, %arg4: memref<1x128xf32, #tpu.memory_space<vmem>>, %arg5: memref<128x128xf32, #tpu.memory_space<vmem>>, %arg6: memref<1x128xf32, #tpu.memory_space<vmem>>, %arg7: memref<16x128xf32, #tpu.memory_space<vmem>>) attributes {dimension_semantics = [#tpu.dimension_semantics<parallel>], iteration_bounds = array<i64: 1>, scalar_prefetch = 0 : i64, scratch_operands = 0 : i64, tpu.core_type = #tpu.core_type<tc>, window_params = [{transform_indices = @transform_0, window_bounds = array<i64: 16, 128>}, {transform_indices = @transform_1, window_bounds = array<i64: 16, 128, 16>}, {pipeline_mode = #tpu.pipeline_mode<synchronous>, transform_indices = @transform_2, window_bounds = array<i64: 128, 128>}, {pipeline_mode = #tpu.pipeline_mode<synchronous>, transform_indices = @transform_3, window_bounds = array<i64: 1, 128>}, {pipeline_mode = #tpu.pipeline_mode<synchronous>, transform_indices = @transform_4, window_bounds = array<i64: 128, 128>}, {pipeline_mode = #tpu.pipeline_mode<synchronous>, transform_indices = @transform_5, window_bounds = array<i64: 1, 128>}, {transform_indices = @transform_6, window_bounds = array<i64: 16, 128>}]} {
    %c0 = arith.constant 0 : index
    %c0_0 = arith.constant 0 : index
    %0 = vector.load %arg1[%c0, %c0_0] : memref<16x128xf32, #tpu.memory_space<vmem>>, vector<16x128xf32>
    %c0_1 = arith.constant 0 : index
    %c0_2 = arith.constant 0 : index
    %c0_3 = arith.constant 0 : index
    %1 = vector.load %arg2[%c0_1, %c0_2, %c0_3] : memref<16x128x16xf32, #tpu.memory_space<vmem>>, vector<16x128x16xf32>
    %c0_4 = arith.constant 0 : index
    %c0_5 = arith.constant 0 : index
    %2 = vector.load %arg3[%c0_4, %c0_5] : memref<128x128xf32, #tpu.memory_space<vmem>>, vector<128x128xf32>
    %cst = arith.constant dense<0.000000e+00> : vector<16x128xf32>
    %3 = tpu.matmul %0, %2, %cst {dimension_numbers = #tpu.dot_dimension_numbers<[1], [0], [0], [1], [0, 0, 1, 1], [], []>} : vector<16x128xf32>, vector<128x128xf32>, vector<16x128xf32> -> vector<16x128xf32>
    %c0_6 = arith.constant 0 : index
    %c0_7 = arith.constant 0 : index
    %4 = vector.load %arg4[%c0_6, %c0_7] : memref<1x128xf32, #tpu.memory_space<vmem>>, vector<1x128xf32>
    %5 = vector.broadcast %4 : vector<1x128xf32> to vector<16x128xf32>
    %6 = arith.addf %3, %5 : vector<16x128xf32>
    %7 = vector.shape_cast %6 : vector<16x128xf32> to vector<16x128x1xf32>
    %8 = vector.broadcast %7 : vector<16x128x1xf32> to vector<16x128x16xf32>
    %9 = arith.mulf %1, %8 : vector<16x128x16xf32>
    %cst_8 = arith.constant dense<0.000000e+00> : vector<16x16xf32>
    %10 = vector.multi_reduction <add>, %9, %cst_8 [1] : vector<16x128x16xf32> to vector<16x16xf32>
    %11 = vector.shape_cast %10 : vector<16x16xf32> to vector<16x1x16xf32>
    %12 = vector.broadcast %11 : vector<16x1x16xf32> to vector<16x128x16xf32>
    %13 = arith.mulf %1, %12 : vector<16x128x16xf32>
    %cst_9 = arith.constant dense<0.000000e+00> : vector<16x128xf32>
    %14 = vector.multi_reduction <add>, %13, %cst_9 [2] : vector<16x128x16xf32> to vector<16x128xf32>
    %c0_10 = arith.constant 0 : index
    %c0_11 = arith.constant 0 : index
    %15 = vector.load %arg5[%c0_10, %c0_11] : memref<128x128xf32, #tpu.memory_space<vmem>>, vector<128x128xf32>
    %cst_12 = arith.constant dense<0.000000e+00> : vector<16x128xf32>
    %16 = tpu.matmul %14, %15, %cst_12 {dimension_numbers = #tpu.dot_dimension_numbers<[1], [0], [0], [1], [0, 0, 1, 1], [], []>} : vector<16x128xf32>, vector<128x128xf32>, vector<16x128xf32> -> vector<16x128xf32>
    %c0_13 = arith.constant 0 : index
    %c0_14 = arith.constant 0 : index
    %17 = vector.load %arg6[%c0_13, %c0_14] : memref<1x128xf32, #tpu.memory_space<vmem>>, vector<1x128xf32>
    %18 = vector.broadcast %17 : vector<1x128xf32> to vector<16x128xf32>
    %19 = arith.addf %16, %18 : vector<16x128xf32>
    %c0_15 = arith.constant 0 : index
    %c0_16 = arith.constant 0 : index
    %20 = vector.load %arg7[%c0_15, %c0_16] : memref<16x128xf32, #tpu.memory_space<vmem>>, vector<16x128xf32>
    tpu.vector_store %arg7[%c0_15, %c0_16], %19 {strides = array<i32>} : memref<16x128xf32, #tpu.memory_space<vmem>>, vector<16x128xf32>,
    return
  }
  func.func @transform_0(%arg0: i32) -> (i32, i32) {
    %c0_i32 = arith.constant 0 : i32
    %c0_i32_0 = arith.constant 0 : i32
    return %arg0, %c0_i32 : i32, i32
  }
  func.func @transform_1(%arg0: i32) -> (i32, i32, i32) {
    %c0_i32 = arith.constant 0 : i32
    %c0_i32_0 = arith.constant 0 : i32
    %c0_i32_1 = arith.constant 0 : i32
    return %arg0, %c0_i32, %c0_i32_0 : i32, i32, i32
  }
  func.func @transform_2(%arg0: i32) -> (i32, i32) {
    %c0_i32 = arith.constant 0 : i32
    %c0_i32_0 = arith.constant 0 : i32
    %c0_i32_1 = arith.constant 0 : i32
    return %c0_i32, %c0_i32_0 : i32, i32
  }
  func.func @transform_3(%arg0: i32) -> (i32, i32) {
    %c0_i32 = arith.constant 0 : i32
    %c0_i32_0 = arith.constant 0 : i32
    %c0_i32_1 = arith.constant 0 : i32
    return %c0_i32, %c0_i32_0 : i32, i32
  }
  func.func @transform_4(%arg0: i32) -> (i32, i32) {
    %c0_i32 = arith.constant 0 : i32
    %c0_i32_0 = arith.constant 0 : i32
    %c0_i32_1 = arith.constant 0 : i32
    return %c0_i32, %c0_i32_0 : i32, i32
  }
  func.func @transform_5(%arg0: i32) -> (i32, i32) {
    %c0_i32 = arith.constant 0 : i32
    %c0_i32_0 = arith.constant 0 : i32
    %c0_i32_1 = arith.constant 0 : i32
    return %c0_i32, %c0_i32_0 : i32, i32
  }
  func.func @transform_6(%arg0: i32) -> (i32, i32) {
    %c0_i32 = arith.constant 0 : i32
    %c0_i32_0 = arith.constant 0 : i32
    return %arg0, %c0_i32 : i32, i32
  }
}

</mosaic_0001>

<llo_original>
// kernel: tpu_custom_call.1
$region0: #{tpu_custom_call.1}
  #allocation0 [shape = 'u32[]', space=smem, size = 0x4, offset = 0x4, fixed_abs, tag = 'smem constant byte address 0x4 - core index']
  #allocation1 [shape = 'u32[72,128]{1,0:T(1,128)}', space=vmem, size = 0x9000, scoped, tag = 'internal scratch']
  %s0 = inlined_call_operand.vmem [shape: f32[16,128], index: 0, kind: input, shape index: {}]
  %s1 = inlined_call_operand.vmem [shape: f32[16,128,16], index: 1, kind: input, shape index: {}]
  %s2 = inlined_call_operand.vmem [shape: f32[128,128], index: 2, kind: input, shape index: {}]
  %s3 = inlined_call_operand.vmem [shape: f32[1,128], index: 3, kind: input, shape index: {}]
  %s4 = inlined_call_operand.vmem [shape: f32[128,128], index: 4, kind: input, shape index: {}]
  %s5 = inlined_call_operand.vmem [shape: f32[1,128], index: 5, kind: input, shape index: {}]
  %s6 = inlined_call_operand.hbm [shape: f32[16,128], index: 6, kind: output, shape index: {}]
  %s7 = sld [smem:[#allocation0]]
  $region34: #{tpu_custom_call.1} parent=0
    _
  %s9 = ssub.s32 1, %s7
  %s10 = scalar_select 0, %s9, %s7
  $region1: #{tpu_custom_call.1} parent=0
    #allocation2 [shape = 'u8[8192]{0}', space=vmem, size = 0x2000, scoped, tag = 'output window, operand 0, single buffered']
    #allocation3 [shape = 's32[1]{0}', space=sflag, size = 0x4, scoped, tag = 'scoped memory for tpu_custom_call.1']
    %11 = vsyncpa [#allocation3], 0
    // Predicated region
    $region2: #{tpu_custom_call.1} parent=1 // pred_check
      _
    $region3: #{tpu_custom_call.1} parent=1 // pred_check_branch
      %13 = sbr.rel (0) target = $region5
    $region4: #{tpu_custom_call.1} parent=1 // pred_region
      _
    $region5: #{tpu_custom_call.1} parent=1 // pred_fallthru
      _
    // Predicated region
    $region6: #{tpu_custom_call.1} parent=1 // pred_check
      _
    $region7: #{tpu_custom_call.1} parent=1 // pred_check_branch
      %15 = sbr.rel (0) target = $region9
    $region8: #{tpu_custom_call.1} parent=1 // pred_region
      _
    $region9: #{tpu_custom_call.1} parent=1 // pred_fallthru
      _
    // Predicated region
    $region10: #{tpu_custom_call.1} parent=1 // pred_check
      _
    $region11: #{tpu_custom_call.1} parent=1 // pred_check_branch
      %17 = sbr.rel (0) target = $region13
    $region12: #{tpu_custom_call.1} parent=1 // pred_region
      _
    $region13: #{tpu_custom_call.1} parent=1 // pred_fallthru
      _
    // Predicated region
    $region14: #{tpu_custom_call.1} parent=1 // pred_check
      _
    $region15: #{tpu_custom_call.1} parent=1 // pred_check_branch
      %19 = sbr.rel (0) target = $region17
    $region16: #{tpu_custom_call.1} parent=1 // pred_region
      _
    $region17: #{tpu_custom_call.1} parent=1 // pred_fallthru
      _
    // Predicated region
    $region18: #{tpu_custom_call.1} parent=1 // pred_check
      _
    $region19: #{tpu_custom_call.1} parent=1 // pred_check_branch
      %21 = sbr.rel (0) target = $region21
    $region20: #{tpu_custom_call.1} parent=1 // pred_region
      _
    $region21: #{tpu_custom_call.1} parent=1 // pred_fallthru
      _
    // Predicated region
    $region22: #{tpu_custom_call.1} parent=1 // pred_check
      _
    $region23: #{tpu_custom_call.1} parent=1 // pred_check_branch
      %23 = sbr.rel (0) target = $region25
    $region24: #{tpu_custom_call.1} parent=1 // pred_region
      _
    $region25: #{tpu_custom_call.1} parent=1 // pred_fallthru
      _
    %v24 = vld [vmem:[%s0] sm:$0xff]
    %v25 = vld [vmem:[%s0 + $0x8] sm:$0xff]
    %v26 = vld [vmem:[%s1] sm:$0xff]
    %v27 = vld [vmem:[%s1 + $0x8] sm:$0xff]
    %v28 = vld [vmem:[%s1 + $0x10] sm:$0xff]
    %v29 = vld [vmem:[%s1 + $0x18] sm:$0xff]
    %v30 = vld [vmem:[%s1 + $0x20] sm:$0xff]
    %v31 = vld [vmem:[%s1 + $0x28] sm:$0xff]
    %v32 = vld [vmem:[%s1 + $0x30] sm:$0xff]
    %v33 = vld [vmem:[%s1 + $0x38] sm:$0xff]
    %v34 = vld [vmem:[%s1 + $0x40] sm:$0xff]
    %v35 = vld [vmem:[%s1 + $0x48] sm:$0xff]
    %v36 = vld [vmem:[%s1 + $0x50] sm:$0xff]
    %v37 = vld [vmem:[%s1 + $0x58] sm:$0xff]
    %v38 = vld [vmem:[%s1 + $0x60] sm:$0xff]
    %v39 = vld [vmem:[%s1 + $0x68] sm:$0xff]
    %v40 = vld [vmem:[%s1 + $0x70] sm:$0xff]
    %v41 = vld [vmem:[%s1 + $0x78] sm:$0xff]
    %v42 = vld [vmem:[%s1 + $0x80] sm:$0xff]
    %v43 = vld [vmem:[%s1 + $0x88] sm:$0xff]
    %v44 = vld [vmem:[%s1 + $0x90] sm:$0xff]
    %v45 = vld [vmem:[%s1 + $0x98] sm:$0xff]
    %v46 = vld [vmem:[%s1 + $0xa0] sm:$0xff]
    %v47 = vld [vmem:[%s1 + $0xa8] sm:$0xff]
    %v48 = vld [vmem:[%s1 + $0xb0] sm:$0xff]
    %v49 = vld [vmem:[%s1 + $0xb8] sm:$0xff]
    %v50 = vld [vmem:[%s1 + $0xc0] sm:$0xff]
    %v51 = vld [vmem:[%s1 + $0xc8] sm:$0xff]
    %v52 = vld [vmem:[%s1 + $0xd0] sm:$0xff]
    %v53 = vld [vmem:[%s1 + $0xd8] sm:$0xff]
    %v54 = vld [vmem:[%s1 + $0xe0] sm:$0xff]
    %v55 = vld [vmem:[%s1 + $0xe8] sm:$0xff]
    %v56 = vld [vmem:[%s1 + $0xf0] sm:$0xff]
    %v57 = vld [vmem:[%s1 + $0xf8] sm:$0xff]
    %v58 = vld [vmem:[%s1 + $0x100] sm:$0xff]
    %v59 = vld [vmem:[%s1 + $0x108] sm:$0xff]
    %v60 = vld [vmem:[%s1 + $0x110] sm:$0xff]
    %v61 = vld [vmem:[%s1 + $0x118] sm:$0xff]
    %v62 = vld [vmem:[%s1 + $0x120] sm:$0xff]
    %v63 = vld [vmem:[%s1 + $0x128] sm:$0xff]
    %v64 = vld [vmem:[%s1 + $0x130] sm:$0xff]
    %v65 = vld [vmem:[%s1 + $0x138] sm:$0xff]
    %v66 = vld [vmem:[%s1 + $0x140] sm:$0xff]
    %v67 = vld [vmem:[%s1 + $0x148] sm:$0xff]
    %v68 = vld [vmem:[%s1 + $0x150] sm:$0xff]
    %v69 = vld [vmem:[%s1 + $0x158] sm:$0xff]
    %v70 = vld [vmem:[%s1 + $0x160] sm:$0xff]
    %v71 = vld [vmem:[%s1 + $0x168] sm:$0xff]
    %v72 = vld [vmem:[%s1 + $0x170] sm:$0xff]
    %v73 = vld [vmem:[%s1 + $0x178] sm:$0xff]
    %v74 = vld [vmem:[%s1 + $0x180] sm:$0xff]
    %v75 = vld [vmem:[%s1 + $0x188] sm:$0xff]
    %v76 = vld [vmem:[%s1 + $0x190] sm:$0xff]
    %v77 = vld [vmem:[%s1 + $0x198] sm:$0xff]
    %v78 = vld [vmem:[%s1 + $0x1a0] sm:$0xff]
    %v79 = vld [vmem:[%s1 + $0x1a8] sm:$0xff]
    %v80 = vld [vmem:[%s1 + $0x1b0] sm:$0xff]
    %v81 = vld [vmem:[%s1 + $0x1b8] sm:$0xff]
    %v82 = vld [vmem:[%s1 + $0x1c0] sm:$0xff]
    %v83 = vld [vmem:[%s1 + $0x1c8] sm:$0xff]
    %v84 = vld [vmem:[%s1 + $0x1d0] sm:$0xff]
    %v85 = vld [vmem:[%s1 + $0x1d8] sm:$0xff]
    %v86 = vld [vmem:[%s1 + $0x1e0] sm:$0xff]
    %v87 = vld [vmem:[%s1 + $0x1e8] sm:$0xff]
    %v88 = vld [vmem:[%s1 + $0x1f0] sm:$0xff]
    %v89 = vld [vmem:[%s1 + $0x1f8] sm:$0xff]
    %v90 = vld [vmem:[%s1 + $0x200] sm:$0xff]
    %v91 = vld [vmem:[%s1 + $0x208] sm:$0xff]
    %v92 = vld [vmem:[%s1 + $0x210] sm:$0xff]
    %v93 = vld [vmem:[%s1 + $0x218] sm:$0xff]
    %v94 = vld [vmem:[%s1 + $0x220] sm:$0xff]
    %v95 = vld [vmem:[%s1 + $0x228] sm:$0xff]
    %v96 = vld [vmem:[%s1 + $0x230] sm:$0xff]
    %v97 = vld [vmem:[%s1 + $0x238] sm:$0xff]
    %v98 = vld [vmem:[%s1 + $0x240] sm:$0xff]
    %v99 = vld [vmem:[%s1 + $0x248] sm:$0xff]
    %v100 = vld [vmem:[%s1 + $0x250] sm:$0xff]
    %v101 = vld [vmem:[%s1 + $0x258] sm:$0xff]
    %v102 = vld [vmem:[%s1 + $0x260] sm:$0xff]
    %v103 = vld [vmem:[%s1 + $0x268] sm:$0xff]
    %v104 = vld [vmem:[%s1 + $0x270] sm:$0xff]
    %v105 = vld [vmem:[%s1 + $0x278] sm:$0xff]
    %v106 = vld [vmem:[%s1 + $0x280] sm:$0xff]
    %v107 = vld [vmem:[%s1 + $0x288] sm:$0xff]
    %v108 = vld [vmem:[%s1 + $0x290] sm:$0xff]
    %v109 = vld [vmem:[%s1 + $0x298] sm:$0xff]
    %v110 = vld [vmem:[%s1 + $0x2a0] sm:$0xff]
    %v111 = vld [vmem:[%s1 + $0x2a8] sm:$0xff]
    %v112 = vld [vmem:[%s1 + $0x2b0] sm:$0xff]
    %v113 = vld [vmem:[%s1 + $0x2b8] sm:$0xff]
    %v114 = vld [vmem:[%s1 + $0x2c0] sm:$0xff]
    %v115 = vld [vmem:[%s1 + $0x2c8] sm:$0xff]
    %v116 = vld [vmem:[%s1 + $0x2d0] sm:$0xff]
    %v117 = vld [vmem:[%s1 + $0x2d8] sm:$0xff]
    %v118 = vld [vmem:[%s1 + $0x2e0] sm:$0xff]
    %v119 = vld [vmem:[%s1 + $0x2e8] sm:$0xff]
    %v120 = vld [vmem:[%s1 + $0x2f0] sm:$0xff]
    %v121 = vld [vmem:[%s1 + $0x2f8] sm:$0xff]
    %v122 = vld [vmem:[%s1 + $0x300] sm:$0xff]
    %v123 = vld [vmem:[%s1 + $0x308] sm:$0xff]
    %v124 = vld [vmem:[%s1 + $0x310] sm:$0xff]
    %v125 = vld [vmem:[%s1 + $0x318] sm:$0xff]
    %v126 = vld [vmem:[%s1 + $0x320] sm:$0xff]
    %v127 = vld [vmem:[%s1 + $0x328] sm:$0xff]
    %v128 = vld [vmem:[%s1 + $0x330] sm:$0xff]
    %v129 = vld [vmem:[%s1 + $0x338] sm:$0xff]
    %v130 = vld [vmem:[%s1 + $0x340] sm:$0xff]
    %v131 = vld [vmem:[%s1 + $0x348] sm:$0xff]
    %v132 = vld [vmem:[%s1 + $0x350] sm:$0xff]
    %v133 = vld [vmem:[%s1 + $0x358] sm:$0xff]
    %v134 = vld [vmem:[%s1 + $0x360] sm:$0xff]
    %v135 = vld [vmem:[%s1 + $0x368] sm:$0xff]
    %v136 = vld [vmem:[%s1 + $0x370] sm:$0xff]
    %v137 = vld [vmem:[%s1 + $0x378] sm:$0xff]
    %v138 = vld [vmem:[%s1 + $0x380] sm:$0xff]
    %v139 = vld [vmem:[%s1 + $0x388] sm:$0xff]
    %v140 = vld [vmem:[%s1 + $0x390] sm:$0xff]
    %v141 = vld [vmem:[%s1 + $0x398] sm:$0xff]
    %v142 = vld [vmem:[%s1 + $0x3a0] sm:$0xff]
    %v143 = vld [vmem:[%s1 + $0x3a8] sm:$0xff]
    %v144 = vld [vmem:[%s1 + $0x3b0] sm:$0xff]
    %v145 = vld [vmem:[%s1 + $0x3b8] sm:$0xff]
    %v146 = vld [vmem:[%s1 + $0x3c0] sm:$0xff]
    %v147 = vld [vmem:[%s1 + $0x3c8] sm:$0xff]
    %v148 = vld [vmem:[%s1 + $0x3d0] sm:$0xff]
    %v149 = vld [vmem:[%s1 + $0x3d8] sm:$0xff]
    %v150 = vld [vmem:[%s1 + $0x3e0] sm:$0xff]
    %v151 = vld [vmem:[%s1 + $0x3e8] sm:$0xff]
    %v152 = vld [vmem:[%s1 + $0x3f0] sm:$0xff]
    %v153 = vld [vmem:[%s1 + $0x3f8] sm:$0xff]
    %v154 = vld [vmem:[%s1 + $0x400] sm:$0xff]
    %v155 = vld [vmem:[%s1 + $0x408] sm:$0xff]
    %v156 = vld [vmem:[%s1 + $0x410] sm:$0xff]
    %v157 = vld [vmem:[%s1 + $0x418] sm:$0xff]
    %v158 = vld [vmem:[%s1 + $0x420] sm:$0xff]
    %v159 = vld [vmem:[%s1 + $0x428] sm:$0xff]
    %v160 = vld [vmem:[%s1 + $0x430] sm:$0xff]
    %v161 = vld [vmem:[%s1 + $0x438] sm:$0xff]
    %v162 = vld [vmem:[%s1 + $0x440] sm:$0xff]
    %v163 = vld [vmem:[%s1 + $0x448] sm:$0xff]
    %v164 = vld [vmem:[%s1 + $0x450] sm:$0xff]
    %v165 = vld [vmem:[%s1 + $0x458] sm:$0xff]
    %v166 = vld [vmem:[%s1 + $0x460] sm:$0xff]
    %v167 = vld [vmem:[%s1 + $0x468] sm:$0xff]
    %v168 = vld [vmem:[%s1 + $0x470] sm:$0xff]
    %v169 = vld [vmem:[%s1 + $0x478] sm:$0xff]
    %v170 = vld [vmem:[%s1 + $0x480] sm:$0xff]
    %v171 = vld [vmem:[%s1 + $0x488] sm:$0xff]
    %v172 = vld [vmem:[%s1 + $0x490] sm:$0xff]
    %v173 = vld [vmem:[%s1 + $0x498] sm:$0xff]
    %v174 = vld [vmem:[%s1 + $0x4a0] sm:$0xff]
    %v175 = vld [vmem:[%s1 + $0x4a8] sm:$0xff]
    %v176 = vld [vmem:[%s1 + $0x4b0] sm:$0xff]
    %v177 = vld [vmem:[%s1 + $0x4b8] sm:$0xff]
    %v178 = vld [vmem:[%s1 + $0x4c0] sm:$0xff]
    %v179 = vld [vmem:[%s1 + $0x4c8] sm:$0xff]
    %v180 = vld [vmem:[%s1 + $0x4d0] sm:$0xff]
    %v181 = vld [vmem:[%s1 + $0x4d8] sm:$0xff]
    %v182 = vld [vmem:[%s1 + $0x4e0] sm:$0xff]
    %v183 = vld [vmem:[%s1 + $0x4e8] sm:$0xff]
    %v184 = vld [vmem:[%s1 + $0x4f0] sm:$0xff]
    %v185 = vld [vmem:[%s1 + $0x4f8] sm:$0xff]
    %v186 = vld [vmem:[%s1 + $0x500] sm:$0xff]
    %v187 = vld [vmem:[%s1 + $0x508] sm:$0xff]
    %v188 = vld [vmem:[%s1 + $0x510] sm:$0xff]
    %v189 = vld [vmem:[%s1 + $0x518] sm:$0xff]
    %v190 = vld [vmem:[%s1 + $0x520] sm:$0xff]
    %v191 = vld [vmem:[%s1 + $0x528] sm:$0xff]
    %v192 = vld [vmem:[%s1 + $0x530] sm:$0xff]
    %v193 = vld [vmem:[%s1 + $0x538] sm:$0xff]
    %v194 = vld [vmem:[%s1 + $0x540] sm:$0xff]
    %v195 = vld [vmem:[%s1 + $0x548] sm:$0xff]
    %v196 = vld [vmem:[%s1 + $0x550] sm:$0xff]
    %v197 = vld [vmem:[%s1 + $0x558] sm:$0xff]
    %v198 = vld [vmem:[%s1 + $0x560] sm:$0xff]
    %v199 = vld [vmem:[%s1 + $0x568] sm:$0xff]
    %v200 = vld [vmem:[%s1 + $0x570] sm:$0xff]
    %v201 = vld [vmem:[%s1 + $0x578] sm:$0xff]
    %v202 = vld [vmem:[%s1 + $0x580] sm:$0xff]
    %v203 = vld [vmem:[%s1 + $0x588] sm:$0xff]
    %v204 = vld [vmem:[%s1 + $0x590] sm:$0xff]
    %v205 = vld [vmem:[%s1 + $0x598] sm:$0xff]
    %v206 = vld [vmem:[%s1 + $0x5a0] sm:$0xff]
    %v207 = vld [vmem:[%s1 + $0x5a8] sm:$0xff]
    %v208 = vld [vmem:[%s1 + $0x5b0] sm:$0xff]
    %v209 = vld [vmem:[%s1 + $0x5b8] sm:$0xff]
    %v210 = vld [vmem:[%s1 + $0x5c0] sm:$0xff]
    %v211 = vld [vmem:[%s1 + $0x5c8] sm:$0xff]
    %v212 = vld [vmem:[%s1 + $0x5d0] sm:$0xff]
    %v213 = vld [vmem:[%s1 + $0x5d8] sm:$0xff]
    %v214 = vld [vmem:[%s1 + $0x5e0] sm:$0xff]
    %v215 = vld [vmem:[%s1 + $0x5e8] sm:$0xff]
    %v216 = vld [vmem:[%s1 + $0x5f0] sm:$0xff]
    %v217 = vld [vmem:[%s1 + $0x5f8] sm:$0xff]
    %v218 = vld [vmem:[%s1 + $0x600] sm:$0xff]
    %v219 = vld [vmem:[%s1 + $0x608] sm:$0xff]
    %v220 = vld [vmem:[%s1 + $0x610] sm:$0xff]
    %v221 = vld [vmem:[%s1 + $0x618] sm:$0xff]
    %v222 = vld [vmem:[%s1 + $0x620] sm:$0xff]
    %v223 = vld [vmem:[%s1 + $0x628] sm:$0xff]
    %v224 = vld [vmem:[%s1 + $0x630] sm:$0xff]
    %v225 = vld [vmem:[%s1 + $0x638] sm:$0xff]
    %v226 = vld [vmem:[%s1 + $0x640] sm:$0xff]
    %v227 = vld [vmem:[%s1 + $0x648] sm:$0xff]
    %v228 = vld [vmem:[%s1 + $0x650] sm:$0xff]
    %v229 = vld [vmem:[%s1 + $0x658] sm:$0xff]
    %v230 = vld [vmem:[%s1 + $0x660] sm:$0xff]
    %v231 = vld [vmem:[%s1 + $0x668] sm:$0xff]
    %v232 = vld [vmem:[%s1 + $0x670] sm:$0xff]
    %v233 = vld [vmem:[%s1 + $0x678] sm:$0xff]
    %v234 = vld [vmem:[%s1 + $0x680] sm:$0xff]
    %v235 = vld [vmem:[%s1 + $0x688] sm:$0xff]
    %v236 = vld [vmem:[%s1 + $0x690] sm:$0xff]
    %v237 = vld [vmem:[%s1 + $0x698] sm:$0xff]
    %v238 = vld [vmem:[%s1 + $0x6a0] sm:$0xff]
    %v239 = vld [vmem:[%s1 + $0x6a8] sm:$0xff]
    %v240 = vld [vmem:[%s1 + $0x6b0] sm:$0xff]
    %v241 = vld [vmem:[%s1 + $0x6b8] sm:$0xff]
    %v242 = vld [vmem:[%s1 + $0x6c0] sm:$0xff]
    %v243 = vld [vmem:[%s1 + $0x6c8] sm:$0xff]
    %v244 = vld [vmem:[%s1 + $0x6d0] sm:$0xff]
    %v245 = vld [vmem:[%s1 + $0x6d8] sm:$0xff]
    %v246 = vld [vmem:[%s1 + $0x6e0] sm:$0xff]
    %v247 = vld [vmem:[%s1 + $0x6e8] sm:$0xff]
    %v248 = vld [vmem:[%s1 + $0x6f0] sm:$0xff]
    %v249 = vld [vmem:[%s1 + $0x6f8] sm:$0xff]
    %v250 = vld [vmem:[%s1 + $0x700] sm:$0xff]
    %v251 = vld [vmem:[%s1 + $0x708] sm:$0xff]
    %v252 = vld [vmem:[%s1 + $0x710] sm:$0xff]
    %v253 = vld [vmem:[%s1 + $0x718] sm:$0xff]
    %v254 = vld [vmem:[%s1 + $0x720] sm:$0xff]
    %v255 = vld [vmem:[%s1 + $0x728] sm:$0xff]
    %v256 = vld [vmem:[%s1 + $0x730] sm:$0xff]
    %v257 = vld [vmem:[%s1 + $0x738] sm:$0xff]
    %v258 = vld [vmem:[%s1 + $0x740] sm:$0xff]
    %v259 = vld [vmem:[%s1 + $0x748] sm:$0xff]
    %v260 = vld [vmem:[%s1 + $0x750] sm:$0xff]
    %v261 = vld [vmem:[%s1 + $0x758] sm:$0xff]
    %v262 = vld [vmem:[%s1 + $0x760] sm:$0xff]
    %v263 = vld [vmem:[%s1 + $0x768] sm:$0xff]
    %v264 = vld [vmem:[%s1 + $0x770] sm:$0xff]
    %v265 = vld [vmem:[%s1 + $0x778] sm:$0xff]
    %v266 = vld [vmem:[%s1 + $0x780] sm:$0xff]
    %v267 = vld [vmem:[%s1 + $0x788] sm:$0xff]
    %v268 = vld [vmem:[%s1 + $0x790] sm:$0xff]
    %v269 = vld [vmem:[%s1 + $0x798] sm:$0xff]
    %v270 = vld [vmem:[%s1 + $0x7a0] sm:$0xff]
    %v271 = vld [vmem:[%s1 + $0x7a8] sm:$0xff]
    %v272 = vld [vmem:[%s1 + $0x7b0] sm:$0xff]
    %v273 = vld [vmem:[%s1 + $0x7b8] sm:$0xff]
    %v274 = vld [vmem:[%s1 + $0x7c0] sm:$0xff]
    %v275 = vld [vmem:[%s1 + $0x7c8] sm:$0xff]
    %v276 = vld [vmem:[%s1 + $0x7d0] sm:$0xff]
    %v277 = vld [vmem:[%s1 + $0x7d8] sm:$0xff]
    %v278 = vld [vmem:[%s1 + $0x7e0] sm:$0xff]
    %v279 = vld [vmem:[%s1 + $0x7e8] sm:$0xff]
    %v280 = vld [vmem:[%s1 + $0x7f0] sm:$0xff]
    %v281 = vld [vmem:[%s1 + $0x7f8] sm:$0xff]
    %v282 = vld [vmem:[%s2] sm:$0xff]
    %v283 = vld [vmem:[%s2 + $0x8] sm:$0xff]
    %v284 = vld [vmem:[%s2 + $0x10] sm:$0xff]
    %v285 = vld [vmem:[%s2 + $0x18] sm:$0xff]
    %v286 = vld [vmem:[%s2 + $0x20] sm:$0xff]
    %v287 = vld [vmem:[%s2 + $0x28] sm:$0xff]
    %v288 = vld [vmem:[%s2 + $0x30] sm:$0xff]
    %v289 = vld [vmem:[%s2 + $0x38] sm:$0xff]
    %v290 = vld [vmem:[%s2 + $0x40] sm:$0xff]
    %v291 = vld [vmem:[%s2 + $0x48] sm:$0xff]
    %v292 = vld [vmem:[%s2 + $0x50] sm:$0xff]
    %v293 = vld [vmem:[%s2 + $0x58] sm:$0xff]
    %v294 = vld [vmem:[%s2 + $0x60] sm:$0xff]
    %v295 = vld [vmem:[%s2 + $0x68] sm:$0xff]
    %v296 = vld [vmem:[%s2 + $0x70] sm:$0xff]
    %v297 = vld [vmem:[%s2 + $0x78] sm:$0xff]
    %v298 = vld [vmem:[%s3] sm:$0x1]
    %v300 = vperm.slane %v298, 0
    %302 = vmatpush.msra.mxu0 %v297
    %303 = vmatpush.msra.mxu0 %v296
    %304 = vmatpush.msra.mxu0 %v295
    %305 = vmatpush.msra.mxu0 %v294
    %306 = vmatpush.msra.mxu0 %v293
    %307 = vmatpush.msra.mxu0 %v292
    %308 = vmatpush.msra.mxu0 %v291
    %309 = vmatpush.msra.mxu0 %v290
    %310 = vmatpush.msra.mxu0 %v289
    %311 = vmatpush.msra.mxu0 %v288
    %312 = vmatpush.msra.mxu0 %v287
    %313 = vmatpush.msra.mxu0 %v286
    %314 = vmatpush.msra.mxu0 %v285
    %315 = vmatpush.msra.mxu0 %v284
    %316 = vmatpush.msra.mxu0 %v283
    %317 = vmatpush.msra.mxu0 %v282
    %318 = vmatmul.f32.gmra.mxu0 %v24
    %v319 = vpop.f32.mrf.mxu0
    %v320 = vadd.f32 %v300, %v319
    %321 = vmatmul.f32.gmra.mxu0 %v25
    %v322 = vpop.f32.mrf.mxu0
    %v323 = vadd.f32 %v300, %v322
    %324 = vdwg.mxu0
    %v325 = vperm.slane %v320, 0
    %v326 = vlaneseq
    %v327 = vshrl.u32 %v326, 7
    %329 = vset.pattern.permute.xlu0 %v327
    %330 = vperm.xlu0 %329, %v325
    %v331 = vpop.permute.xlu0 %330
    %v332 = vlaneseq
    %v333 = vshrl.u32 %v332, 7
    %v334 = vadd.s32 %v333, 8
    %335 = vset.pattern.permute.xlu0 %v334
    %336 = vperm.xlu0 %335, %v325
    %v337 = vpop.permute.xlu0 %336
    %v338 = vlaneseq
    %v339 = vshrl.u32 %v338, 7
    %v340 = vadd.s32 %v339, 16
    %341 = vset.pattern.permute.xlu0 %v340
    %342 = vperm.xlu0 %341, %v325
    %v343 = vpop.permute.xlu0 %342
    %v344 = vlaneseq
    %v345 = vshrl.u32 %v344, 7
    %v346 = vadd.s32 %v345, 24
    %347 = vset.pattern.permute.xlu0 %v346
    %348 = vperm.xlu0 %347, %v325
    %v349 = vpop.permute.xlu0 %348
    %v350 = vlaneseq
    %v351 = vshrl.u32 %v350, 7
    %v352 = vadd.s32 %v351, 32
    %353 = vset.pattern.permute.xlu0 %v352
    %354 = vperm.xlu0 %353, %v325
    %v355 = vpop.permute.xlu0 %354
    %v356 = vlaneseq
    %v357 = vshrl.u32 %v356, 7
    %v358 = vadd.s32 %v357, 40
    %359 = vset.pattern.permute.xlu0 %v358
    %360 = vperm.xlu0 %359, %v325
    %v361 = vpop.permute.xlu0 %360
    %v362 = vlaneseq
    %v363 = vshrl.u32 %v362, 7
    %v364 = vadd.s32 %v363, 48
    %365 = vset.pattern.permute.xlu0 %v364
    %366 = vperm.xlu0 %365, %v325
    %v367 = vpop.permute.xlu0 %366
    %v368 = vlaneseq
    %v369 = vshrl.u32 %v368, 7
    %v370 = vadd.s32 %v369, 56
    %371 = vset.pattern.permute.xlu0 %v370
    %372 = vperm.xlu0 %371, %v325
    %v373 = vpop.permute.xlu0 %372
    %v374 = vlaneseq
    %v375 = vshrl.u32 %v374, 7
    %v376 = vadd.s32 %v375, 64
    %377 = vset.pattern.permute.xlu0 %v376
    %378 = vperm.xlu0 %377, %v325
    %v379 = vpop.permute.xlu0 %378
    %v380 = vlaneseq
    %v381 = vshrl.u32 %v380, 7
    %v382 = vadd.s32 %v381, 72
    %383 = vset.pattern.permute.xlu0 %v382
    %384 = vperm.xlu0 %383, %v325
    %v385 = vpop.permute.xlu0 %384
    %v386 = vlaneseq
    %v387 = vshrl.u32 %v386, 7
    %v388 = vadd.s32 %v387, 80
    %389 = vset.pattern.permute.xlu0 %v388
    %390 = vperm.xlu0 %389, %v325
    %v391 = vpop.permute.xlu0 %390
    %v392 = vlaneseq
    %v393 = vshrl.u32 %v392, 7
    %v394 = vadd.s32 %v393, 88
    %395 = vset.pattern.permute.xlu0 %v394
    %396 = vperm.xlu0 %395, %v325
    %v397 = vpop.permute.xlu0 %396
    %v398 = vlaneseq
    %v399 = vshrl.u32 %v398, 7
    %v400 = vadd.s32 %v399, 96
    %401 = vset.pattern.permute.xlu0 %v400
    %402 = vperm.xlu0 %401, %v325
    %v403 = vpop.permute.xlu0 %402
    %v404 = vlaneseq
    %v405 = vshrl.u32 %v404, 7
    %v406 = vadd.s32 %v405, 104
    %407 = vset.pattern.permute.xlu0 %v406
    %408 = vperm.xlu0 %407, %v325
    %v409 = vpop.permute.xlu0 %408
    %v410 = vlaneseq
    %v411 = vshrl.u32 %v410, 7
    %v412 = vadd.s32 %v411, 112
    %413 = vset.pattern.permute.xlu0 %v412
    %414 = vperm.xlu0 %413, %v325
    %v415 = vpop.permute.xlu0 %414
    %v416 = vlaneseq
    %v417 = vshrl.u32 %v416, 7
    %v418 = vadd.s32 %v417, 120
    %419 = vset.pattern.permute.xlu0 %v418
    %420 = vperm.xlu0 %419, %v325
    %v421 = vpop.permute.xlu0 %420
    %v422 = vperm.slane %v320, 1
    %v423 = vlaneseq
    %v424 = vshrl.u32 %v423, 7
    %426 = vset.pattern.permute.xlu0 %v424
    %427 = vperm.xlu0 %426, %v422
    %v428 = vpop.permute.xlu0 %427
    %v429 = vlaneseq
    %v430 = vshrl.u32 %v429, 7
    %v431 = vadd.s32 %v430, 8
    %432 = vset.pattern.permute.xlu0 %v431
    %433 = vperm.xlu0 %432, %v422
    %v434 = vpop.permute.xlu0 %433
    %v435 = vlaneseq
    %v436 = vshrl.u32 %v435, 7
    %v437 = vadd.s32 %v436, 16
    %438 = vset.pattern.permute.xlu0 %v437
    %439 = vperm.xlu0 %438, %v422
    %v440 = vpop.permute.xlu0 %439
    %v441 = vlaneseq
    %v442 = vshrl.u32 %v441, 7
    %v443 = vadd.s32 %v442, 24
    %444 = vset.pattern.permute.xlu0 %v443
    %445 = vperm.xlu0 %444, %v422
    %v446 = vpop.permute.xlu0 %445
    %v447 = vlaneseq
    %v448 = vshrl.u32 %v447, 7
    %v449 = vadd.s32 %v448, 32
    %450 = vset.pattern.permute.xlu0 %v449
    %451 = vperm.xlu0 %450, %v422
    %v452 = vpop.permute.xlu0 %451
    %v453 = vlaneseq
    %v454 = vshrl.u32 %v453, 7
    %v455 = vadd.s32 %v454, 40
    %456 = vset.pattern.permute.xlu0 %v455
    %457 = vperm.xlu0 %456, %v422
    %v458 = vpop.permute.xlu0 %457
    %v459 = vlaneseq
    %v460 = vshrl.u32 %v459, 7
    %v461 = vadd.s32 %v460, 48
    %462 = vset.pattern.permute.xlu0 %v461
    %463 = vperm.xlu0 %462, %v422
    %v464 = vpop.permute.xlu0 %463
    %v465 = vlaneseq
    %v466 = vshrl.u32 %v465, 7
    %v467 = vadd.s32 %v466, 56
    %468 = vset.pattern.permute.xlu0 %v467
    %469 = vperm.xlu0 %468, %v422
    %v470 = vpop.permute.xlu0 %469
    %v471 = vlaneseq
    %v472 = vshrl.u32 %v471, 7
    %v473 = vadd.s32 %v472, 64
    %474 = vset.pattern.permute.xlu0 %v473
    %475 = vperm.xlu0 %474, %v422
    %v476 = vpop.permute.xlu0 %475
    %v477 = vlaneseq
    %v478 = vshrl.u32 %v477, 7
    %v479 = vadd.s32 %v478, 72
    %480 = vset.pattern.permute.xlu0 %v479
    %481 = vperm.xlu0 %480, %v422
    %v482 = vpop.permute.xlu0 %481
    %v483 = vlaneseq
    %v484 = vshrl.u32 %v483, 7
    %v485 = vadd.s32 %v484, 80
    %486 = vset.pattern.permute.xlu0 %v485
    %487 = vperm.xlu0 %486, %v422
    %v488 = vpop.permute.xlu0 %487
    %v489 = vlaneseq
    %v490 = vshrl.u32 %v489, 7
    %v491 = vadd.s32 %v490, 88
    %492 = vset.pattern.permute.xlu0 %v491
    %493 = vperm.xlu0 %492, %v422
    %v494 = vpop.permute.xlu0 %493
    %v495 = vlaneseq
    %v496 = vshrl.u32 %v495, 7
    %v497 = vadd.s32 %v496, 96
    %498 = vset.pattern.permute.xlu0 %v497
    %499 = vperm.xlu0 %498, %v422
    %v500 = vpop.permute.xlu0 %499
    %v501 = vlaneseq
    %v502 = vshrl.u32 %v501, 7
    %v503 = vadd.s32 %v502, 104
    %504 = vset.pattern.permute.xlu0 %v503
    %505 = vperm.xlu0 %504, %v422
    %v506 = vpop.permute.xlu0 %505
    %v507 = vlaneseq
    %v508 = vshrl.u32 %v507, 7
    %v509 = vadd.s32 %v508, 112
    %510 = vset.pattern.permute.xlu0 %v509
    %511 = vperm.xlu0 %510, %v422
    %v512 = vpop.permute.xlu0 %511
    %v513 = vlaneseq
    %v514 = vshrl.u32 %v513, 7
    %v515 = vadd.s32 %v514, 120
    %516 = vset.pattern.permute.xlu0 %v515
    %517 = vperm.xlu0 %516, %v422
    %v518 = vpop.permute.xlu0 %517
    %v519 = vperm.slane %v320, 2
    %v520 = vlaneseq
    %v521 = vshrl.u32 %v520, 7
    %523 = vset.pattern.permute.xlu0 %v521
    %524 = vperm.xlu0 %523, %v519
    %v525 = vpop.permute.xlu0 %524
    %v526 = vlaneseq
    %v527 = vshrl.u32 %v526, 7
    %v528 = vadd.s32 %v527, 8
    %529 = vset.pattern.permute.xlu0 %v528
    %530 = vperm.xlu0 %529, %v519
    %v531 = vpop.permute.xlu0 %530
    %v532 = vlaneseq
    %v533 = vshrl.u32 %v532, 7
    %v534 = vadd.s32 %v533, 16
    %535 = vset.pattern.permute.xlu0 %v534
    %536 = vperm.xlu0 %535, %v519
    %v537 = vpop.permute.xlu0 %536
    %v538 = vlaneseq
    %v539 = vshrl.u32 %v538, 7
    %v540 = vadd.s32 %v539, 24
    %541 = vset.pattern.permute.xlu0 %v540
    %542 = vperm.xlu0 %541, %v519
    %v543 = vpop.permute.xlu0 %542
    %v544 = vlaneseq
    %v545 = vshrl.u32 %v544, 7
    %v546 = vadd.s32 %v545, 32
    %547 = vset.pattern.permute.xlu0 %v546
    %548 = vperm.xlu0 %547, %v519
    %v549 = vpop.permute.xlu0 %548
    %v550 = vlaneseq
    %v551 = vshrl.u32 %v550, 7
    %v552 = vadd.s32 %v551, 40
    %553 = vset.pattern.permute.xlu0 %v552
    %554 = vperm.xlu0 %553, %v519
    %v555 = vpop.permute.xlu0 %554
    %v556 = vlaneseq
    %v557 = vshrl.u32 %v556, 7
    %v558 = vadd.s32 %v557, 48
    %559 = vset.pattern.permute.xlu0 %v558
    %560 = vperm.xlu0 %559, %v519
    %v561 = vpop.permute.xlu0 %560
    %v562 = vlaneseq
    %v563 = vshrl.u32 %v562, 7
    %v564 = vadd.s32 %v563, 56
    %565 = vset.pattern.permute.xlu0 %v564
    %566 = vperm.xlu0 %565, %v519
    %v567 = vpop.permute.xlu0 %566
    %v568 = vlaneseq
    %v569 = vshrl.u32 %v568, 7
    %v570 = vadd.s32 %v569, 64
    %571 = vset.pattern.permute.xlu0 %v570
    %572 = vperm.xlu0 %571, %v519
    %v573 = vpop.permute.xlu0 %572
    %v574 = vlaneseq
    %v575 = vshrl.u32 %v574, 7
    %v576 = vadd.s32 %v575, 72
    %577 = vset.pattern.permute.xlu0 %v576
    %578 = vperm.xlu0 %577, %v519
    %v579 = vpop.permute.xlu0 %578
    %v580 = vlaneseq
    %v581 = vshrl.u32 %v580, 7
    %v582 = vadd.s32 %v581, 80
    %583 = vset.pattern.permute.xlu0 %v582
    %584 = vperm.xlu0 %583, %v519
    %v585 = vpop.permute.xlu0 %584
    %v586 = vlaneseq
    %v587 = vshrl.u32 %v586, 7
    %v588 = vadd.s32 %v587, 88
    %589 = vset.pattern.permute.xlu0 %v588
    %590 = vperm.xlu0 %589, %v519
    %v591 = vpop.permute.xlu0 %590
    %v592 = vlaneseq
    %v593 = vshrl.u32 %v592, 7
    %v594 = vadd.s32 %v593, 96
    %595 = vset.pattern.permute.xlu0 %v594
    %596 = vperm.xlu0 %595, %v519
    %v597 = vpop.permute.xlu0 %596
    %v598 = vlaneseq
    %v599 = vshrl.u32 %v598, 7
    %v600 = vadd.s32 %v599, 104
    %601 = vset.pattern.permute.xlu0 %v600
    %602 = vperm.xlu0 %601, %v519
    %v603 = vpop.permute.xlu0 %602
    %v604 = vlaneseq
    %v605 = vshrl.u32 %v604, 7
    %v606 = vadd.s32 %v605, 112
    %607 = vset.pattern.permute.xlu0 %v606
    %608 = vperm.xlu0 %607, %v519
    %v609 = vpop.permute.xlu0 %608
    %v610 = vlaneseq
    %v611 = vshrl.u32 %v610, 7
    %v612 = vadd.s32 %v611, 120
    %613 = vset.pattern.permute.xlu0 %v612
    %614 = vperm.xlu0 %613, %v519
    %v615 = vpop.permute.xlu0 %614
    %v616 = vperm.slane %v320, 3
    %v617 = vlaneseq
    %v618 = vshrl.u32 %v617, 7
    %620 = vset.pattern.permute.xlu0 %v618
    %621 = vperm.xlu0 %620, %v616
    %v622 = vpop.permute.xlu0 %621
    %v623 = vlaneseq
    %v624 = vshrl.u32 %v623, 7
    %v625 = vadd.s32 %v624, 8
    %626 = vset.pattern.permute.xlu0 %v625
    %627 = vperm.xlu0 %626, %v616
    %v628 = vpop.permute.xlu0 %627
    %v629 = vlaneseq
    %v630 = vshrl.u32 %v629, 7
    %v631 = vadd.s32 %v630, 16
    %632 = vset.pattern.permute.xlu0 %v631
    %633 = vperm.xlu0 %632, %v616
    %v634 = vpop.permute.xlu0 %633
    %v635 = vlaneseq
    %v636 = vshrl.u32 %v635, 7
    %v637 = vadd.s32 %v636, 24
    %638 = vset.pattern.permute.xlu0 %v637
    %639 = vperm.xlu0 %638, %v616
    %v640 = vpop.permute.xlu0 %639
    %v641 = vlaneseq
    %v642 = vshrl.u32 %v641, 7
    %v643 = vadd.s32 %v642, 32
    %644 = vset.pattern.permute.xlu0 %v643
    %645 = vperm.xlu0 %644, %v616
    %v646 = vpop.permute.xlu0 %645
    %v647 = vlaneseq
    %v648 = vshrl.u32 %v647, 7
    %v649 = vadd.s32 %v648, 40
    %650 = vset.pattern.permute.xlu0 %v649
    %651 = vperm.xlu0 %650, %v616
    %v652 = vpop.permute.xlu0 %651
    %v653 = vlaneseq
    %v654 = vshrl.u32 %v653, 7
    %v655 = vadd.s32 %v654, 48
    %656 = vset.pattern.permute.xlu0 %v655
    %657 = vperm.xlu0 %656, %v616
    %v658 = vpop.permute.xlu0 %657
    %v659 = vlaneseq
    %v660 = vshrl.u32 %v659, 7
    %v661 = vadd.s32 %v660, 56
    %662 = vset.pattern.permute.xlu0 %v661
    %663 = vperm.xlu0 %662, %v616
    %v664 = vpop.permute.xlu0 %663
    %v665 = vlaneseq
    %v666 = vshrl.u32 %v665, 7
    %v667 = vadd.s32 %v666, 64
    %668 = vset.pattern.permute.xlu0 %v667
    %669 = vperm.xlu0 %668, %v616
    %v670 = vpop.permute.xlu0 %669
    %v671 = vlaneseq
    %v672 = vshrl.u32 %v671, 7
    %v673 = vadd.s32 %v672, 72
    %674 = vset.pattern.permute.xlu0 %v673
    %675 = vperm.xlu0 %674, %v616
    %v676 = vpop.permute.xlu0 %675
    %v677 = vlaneseq
    %v678 = vshrl.u32 %v677, 7
    %v679 = vadd.s32 %v678, 80
    %680 = vset.pattern.permute.xlu0 %v679
    %681 = vperm.xlu0 %680, %v616
    %v682 = vpop.permute.xlu0 %681
    %v683 = vlaneseq
    %v684 = vshrl.u32 %v683, 7
    %v685 = vadd.s32 %v684, 88
    %686 = vset.pattern.permute.xlu0 %v685
    %687 = vperm.xlu0 %686, %v616
    %v688 = vpop.permute.xlu0 %687
    %v689 = vlaneseq
    %v690 = vshrl.u32 %v689, 7
    %v691 = vadd.s32 %v690, 96
    %692 = vset.pattern.permute.xlu0 %v691
    %693 = vperm.xlu0 %692, %v616
    %v694 = vpop.permute.xlu0 %693
    %v695 = vlaneseq
    %v696 = vshrl.u32 %v695, 7
    %v697 = vadd.s32 %v696, 104
    %698 = vset.pattern.permute.xlu0 %v697
    %699 = vperm.xlu0 %698, %v616
    %v700 = vpop.permute.xlu0 %699
    %v701 = vlaneseq
    %v702 = vshrl.u32 %v701, 7
    %v703 = vadd.s32 %v702, 112
    %704 = vset.pattern.permute.xlu0 %v703
    %705 = vperm.xlu0 %704, %v616
    %v706 = vpop.permute.xlu0 %705
    %v707 = vlaneseq
    %v708 = vshrl.u32 %v707, 7
    %v709 = vadd.s32 %v708, 120
    %710 = vset.pattern.permute.xlu0 %v709
    %711 = vperm.xlu0 %710, %v616
    %v712 = vpop.permute.xlu0 %711
    %v713 = vperm.slane %v320, 4
    %v714 = vlaneseq
    %v715 = vshrl.u32 %v714, 7
    %717 = vset.pattern.permute.xlu0 %v715
    %718 = vperm.xlu0 %717, %v713
    %v719 = vpop.permute.xlu0 %718
    %v720 = vlaneseq
    %v721 = vshrl.u32 %v720, 7
    %v722 = vadd.s32 %v721, 8
    %723 = vset.pattern.permute.xlu0 %v722
    %724 = vperm.xlu0 %723, %v713
    %v725 = vpop.permute.xlu0 %724
    %v726 = vlaneseq
    %v727 = vshrl.u32 %v726, 7
    %v728 = vadd.s32 %v727, 16
    %729 = vset.pattern.permute.xlu0 %v728
    %730 = vperm.xlu0 %729, %v713
    %v731 = vpop.permute.xlu0 %730
    %v732 = vlaneseq
    %v733 = vshrl.u32 %v732, 7
    %v734 = vadd.s32 %v733, 24
    %735 = vset.pattern.permute.xlu0 %v734
    %736 = vperm.xlu0 %735, %v713
    %v737 = vpop.permute.xlu0 %736
    %v738 = vlaneseq
    %v739 = vshrl.u32 %v738, 7
    %v740 = vadd.s32 %v739, 32
    %741 = vset.pattern.permute.xlu0 %v740
    %742 = vperm.xlu0 %741, %v713
    %v743 = vpop.permute.xlu0 %742
    %v744 = vlaneseq
    %v745 = vshrl.u32 %v744, 7
    %v746 = vadd.s32 %v745, 40
    %747 = vset.pattern.permute.xlu0 %v746
    %748 = vperm.xlu0 %747, %v713
    %v749 = vpop.permute.xlu0 %748
    %v750 = vlaneseq
    %v751 = vshrl.u32 %v750, 7
    %v752 = vadd.s32 %v751, 48
    %753 = vset.pattern.permute.xlu0 %v752
    %754 = vperm.xlu0 %753, %v713
    %v755 = vpop.permute.xlu0 %754
    %v756 = vlaneseq
    %v757 = vshrl.u32 %v756, 7
    %v758 = vadd.s32 %v757, 56
    %759 = vset.pattern.permute.xlu0 %v758
    %760 = vperm.xlu0 %759, %v713
    %v761 = vpop.permute.xlu0 %760
    %v762 = vlaneseq
    %v763 = vshrl.u32 %v762, 7
    %v764 = vadd.s32 %v763, 64
    %765 = vset.pattern.permute.xlu0 %v764
    %766 = vperm.xlu0 %765, %v713
    %v767 = vpop.permute.xlu0 %766
    %v768 = vlaneseq
    %v769 = vshrl.u32 %v768, 7
    %v770 = vadd.s32 %v769, 72
    %771 = vset.pattern.permute.xlu0 %v770
    %772 = vperm.xlu0 %771, %v713
    %v773 = vpop.permute.xlu0 %772
    %v774 = vlaneseq
    %v775 = vshrl.u32 %v774, 7
    %v776 = vadd.s32 %v775, 80
    %777 = vset.pattern.permute.xlu0 %v776
    %778 = vperm.xlu0 %777, %v713
    %v779 = vpop.permute.xlu0 %778
    %v780 = vlaneseq
    %v781 = vshrl.u32 %v780, 7
    %v782 = vadd.s32 %v781, 88
    %783 = vset.pattern.permute.xlu0 %v782
    %784 = vperm.xlu0 %783, %v713
    %v785 = vpop.permute.xlu0 %784
    %v786 = vlaneseq
    %v787 = vshrl.u32 %v786, 7
    %v788 = vadd.s32 %v787, 96
    %789 = vset.pattern.permute.xlu0 %v788
    %790 = vperm.xlu0 %789, %v713
    %v791 = vpop.permute.xlu0 %790
    %v792 = vlaneseq
    %v793 = vshrl.u32 %v792, 7
    %v794 = vadd.s32 %v793, 104
    %795 = vset.pattern.permute.xlu0 %v794
    %796 = vperm.xlu0 %795, %v713
    %v797 = vpop.permute.xlu0 %796
    %v798 = vlaneseq
    %v799 = vshrl.u32 %v798, 7
    %v800 = vadd.s32 %v799, 112
    %801 = vset.pattern.permute.xlu0 %v800
    %802 = vperm.xlu0 %801, %v713
    %v803 = vpop.permute.xlu0 %802
    %v804 = vlaneseq
    %v805 = vshrl.u32 %v804, 7
    %v806 = vadd.s32 %v805, 120
    %807 = vset.pattern.permute.xlu0 %v806
    %808 = vperm.xlu0 %807, %v713
    %v809 = vpop.permute.xlu0 %808
    %v810 = vperm.slane %v320, 5
    %v811 = vlaneseq
    %v812 = vshrl.u32 %v811, 7
    %814 = vset.pattern.permute.xlu0 %v812
    %815 = vperm.xlu0 %814, %v810
    %v816 = vpop.permute.xlu0 %815
    %v817 = vlaneseq
    %v818 = vshrl.u32 %v817, 7
    %v819 = vadd.s32 %v818, 8
    %820 = vset.pattern.permute.xlu0 %v819
    %821 = vperm.xlu0 %820, %v810
    %v822 = vpop.permute.xlu0 %821
    %v823 = vlaneseq
    %v824 = vshrl.u32 %v823, 7
    %v825 = vadd.s32 %v824, 16
    %826 = vset.pattern.permute.xlu0 %v825
    %827 = vperm.xlu0 %826, %v810
    %v828 = vpop.permute.xlu0 %827
    %v829 = vlaneseq
    %v830 = vshrl.u32 %v829, 7
    %v831 = vadd.s32 %v830, 24
    %832 = vset.pattern.permute.xlu0 %v831
    %833 = vperm.xlu0 %832, %v810
    %v834 = vpop.permute.xlu0 %833
    %v835 = vlaneseq
    %v836 = vshrl.u32 %v835, 7
    %v837 = vadd.s32 %v836, 32
    %838 = vset.pattern.permute.xlu0 %v837
    %839 = vperm.xlu0 %838, %v810
    %v840 = vpop.permute.xlu0 %839
    %v841 = vlaneseq
    %v842 = vshrl.u32 %v841, 7
    %v843 = vadd.s32 %v842, 40
    %844 = vset.pattern.permute.xlu0 %v843
    %845 = vperm.xlu0 %844, %v810
    %v846 = vpop.permute.xlu0 %845
    %v847 = vlaneseq
    %v848 = vshrl.u32 %v847, 7
    %v849 = vadd.s32 %v848, 48
    %850 = vset.pattern.permute.xlu0 %v849
    %851 = vperm.xlu0 %850, %v810
    %v852 = vpop.permute.xlu0 %851
    %v853 = vlaneseq
    %v854 = vshrl.u32 %v853, 7
    %v855 = vadd.s32 %v854, 56
    %856 = vset.pattern.permute.xlu0 %v855
    %857 = vperm.xlu0 %856, %v810
    %v858 = vpop.permute.xlu0 %857
    %v859 = vlaneseq
    %v860 = vshrl.u32 %v859, 7
    %v861 = vadd.s32 %v860, 64
    %862 = vset.pattern.permute.xlu0 %v861
    %863 = vperm.xlu0 %862, %v810
    %v864 = vpop.permute.xlu0 %863
    %v865 = vlaneseq
    %v866 = vshrl.u32 %v865, 7
    %v867 = vadd.s32 %v866, 72
    %868 = vset.pattern.permute.xlu0 %v867
    %869 = vperm.xlu0 %868, %v810
    %v870 = vpop.permute.xlu0 %869
    %v871 = vlaneseq
    %v872 = vshrl.u32 %v871, 7
    %v873 = vadd.s32 %v872, 80
    %874 = vset.pattern.permute.xlu0 %v873
    %875 = vperm.xlu0 %874, %v810
    %v876 = vpop.permute.xlu0 %875
    %v877 = vlaneseq
    %v878 = vshrl.u32 %v877, 7
    %v879 = vadd.s32 %v878, 88
    %880 = vset.pattern.permute.xlu0 %v879
    %881 = vperm.xlu0 %880, %v810
    %v882 = vpop.permute.xlu0 %881
    %v883 = vlaneseq
    %v884 = vshrl.u32 %v883, 7
    %v885 = vadd.s32 %v884, 96
    %886 = vset.pattern.permute.xlu0 %v885
    %887 = vperm.xlu0 %886, %v810
    %v888 = vpop.permute.xlu0 %887
    %v889 = vlaneseq
    %v890 = vshrl.u32 %v889, 7
    %v891 = vadd.s32 %v890, 104
    %892 = vset.pattern.permute.xlu0 %v891
    %893 = vperm.xlu0 %892, %v810
    %v894 = vpop.permute.xlu0 %893
    %v895 = vlaneseq
    %v896 = vshrl.u32 %v895, 7
    %v897 = vadd.s32 %v896, 112
    %898 = vset.pattern.permute.xlu0 %v897
    %899 = vperm.xlu0 %898, %v810
    %v900 = vpop.permute.xlu0 %899
    %v901 = vlaneseq
    %v902 = vshrl.u32 %v901, 7
    %v903 = vadd.s32 %v902, 120
    %904 = vset.pattern.permute.xlu0 %v903
    %905 = vperm.xlu0 %904, %v810
    %v906 = vpop.permute.xlu0 %905
    %v907 = vperm.slane %v320, 6
    %v908 = vlaneseq
    %v909 = vshrl.u32 %v908, 7
    %911 = vset.pattern.permute.xlu0 %v909
    %912 = vperm.xlu0 %911, %v907
    %v913 = vpop.permute.xlu0 %912
    %v914 = vlaneseq
    %v915 = vshrl.u32 %v914, 7
    %v916 = vadd.s32 %v915, 8
    %917 = vset.pattern.permute.xlu0 %v916
    %918 = vperm.xlu0 %917, %v907
    %v919 = vpop.permute.xlu0 %918
    %v920 = vlaneseq
    %v921 = vshrl.u32 %v920, 7
    %v922 = vadd.s32 %v921, 16
    %923 = vset.pattern.permute.xlu0 %v922
    %924 = vperm.xlu0 %923, %v907
    %v925 = vpop.permute.xlu0 %924
    %v926 = vlaneseq
    %v927 = vshrl.u32 %v926, 7
    %v928 = vadd.s32 %v927, 24
    %929 = vset.pattern.permute.xlu0 %v928
    %930 = vperm.xlu0 %929, %v907
    %v931 = vpop.permute.xlu0 %930
    %v932 = vlaneseq
    %v933 = vshrl.u32 %v932, 7
    %v934 = vadd.s32 %v933, 32
    %935 = vset.pattern.permute.xlu0 %v934
    %936 = vperm.xlu0 %935, %v907
    %v937 = vpop.permute.xlu0 %936
    %v938 = vlaneseq
    %v939 = vshrl.u32 %v938, 7
    %v940 = vadd.s32 %v939, 40
    %941 = vset.pattern.permute.xlu0 %v940
    %942 = vperm.xlu0 %941, %v907
    %v943 = vpop.permute.xlu0 %942
    %v944 = vlaneseq
    %v945 = vshrl.u32 %v944, 7
    %v946 = vadd.s32 %v945, 48
    %947 = vset.pattern.permute.xlu0 %v946
    %948 = vperm.xlu0 %947, %v907
    %v949 = vpop.permute.xlu0 %948
    %v950 = vlaneseq
    %v951 = vshrl.u32 %v950, 7
    %v952 = vadd.s32 %v951, 56
    %953 = vset.pattern.permute.xlu0 %v952
    %954 = vperm.xlu0 %953, %v907
    %v955 = vpop.permute.xlu0 %954
    %v956 = vlaneseq
    %v957 = vshrl.u32 %v956, 7
    %v958 = vadd.s32 %v957, 64
    %959 = vset.pattern.permute.xlu0 %v958
    %960 = vperm.xlu0 %959, %v907
    %v961 = vpop.permute.xlu0 %960
    %v962 = vlaneseq
    %v963 = vshrl.u32 %v962, 7
    %v964 = vadd.s32 %v963, 72
    %965 = vset.pattern.permute.xlu0 %v964
    %966 = vperm.xlu0 %965, %v907
    %v967 = vpop.permute.xlu0 %966
    %v968 = vlaneseq
    %v969 = vshrl.u32 %v968, 7
    %v970 = vadd.s32 %v969, 80
    %971 = vset.pattern.permute.xlu0 %v970
    %972 = vperm.xlu0 %971, %v907
    %v973 = vpop.permute.xlu0 %972
    %v974 = vlaneseq
    %v975 = vshrl.u32 %v974, 7
    %v976 = vadd.s32 %v975, 88
    %977 = vset.pattern.permute.xlu0 %v976
    %978 = vperm.xlu0 %977, %v907
    %v979 = vpop.permute.xlu0 %978
    %v980 = vlaneseq
    %v981 = vshrl.u32 %v980, 7
    %v982 = vadd.s32 %v981, 96
    %983 = vset.pattern.permute.xlu0 %v982
    %984 = vperm.xlu0 %983, %v907
    %v985 = vpop.permute.xlu0 %984
    %v986 = vlaneseq
    %v987 = vshrl.u32 %v986, 7
    %v988 = vadd.s32 %v987, 104
    %989 = vset.pattern.permute.xlu0 %v988
    %990 = vperm.xlu0 %989, %v907
    %v991 = vpop.permute.xlu0 %990
    %v992 = vlaneseq
    %v993 = vshrl.u32 %v992, 7
    %v994 = vadd.s32 %v993, 112
    %995 = vset.pattern.permute.xlu0 %v994
    %996 = vperm.xlu0 %995, %v907
    %v997 = vpop.permute.xlu0 %996
    %v998 = vlaneseq
    %v999 = vshrl.u32 %v998, 7
    %v1000 = vadd.s32 %v999, 120
    %1001 = vset.pattern.permute.xlu0 %v1000
    %1002 = vperm.xlu0 %1001, %v907
    %v1003 = vpop.permute.xlu0 %1002
    %v1004 = vperm.slane %v320, 7
    %v1005 = vlaneseq
    %v1006 = vshrl.u32 %v1005, 7
    %1008 = vset.pattern.permute.xlu0 %v1006
    %1009 = vperm.xlu0 %1008, %v1004
    %v1010 = vpop.permute.xlu0 %1009
    %v1011 = vlaneseq
    %v1012 = vshrl.u32 %v1011, 7
    %v1013 = vadd.s32 %v1012, 8
    %1014 = vset.pattern.permute.xlu0 %v1013
    %1015 = vperm.xlu0 %1014, %v1004
    %v1016 = vpop.permute.xlu0 %1015
    %v1017 = vlaneseq
    %v1018 = vshrl.u32 %v1017, 7
    %v1019 = vadd.s32 %v1018, 16
    %1020 = vset.pattern.permute.xlu0 %v1019
    %1021 = vperm.xlu0 %1020, %v1004
    %v1022 = vpop.permute.xlu0 %1021
    %v1023 = vlaneseq
    %v1024 = vshrl.u32 %v1023, 7
    %v1025 = vadd.s32 %v1024, 24
    %1026 = vset.pattern.permute.xlu0 %v1025
    %1027 = vperm.xlu0 %1026, %v1004
    %v1028 = vpop.permute.xlu0 %1027
    %v1029 = vlaneseq
    %v1030 = vshrl.u32 %v1029, 7
    %v1031 = vadd.s32 %v1030, 32
    %1032 = vset.pattern.permute.xlu0 %v1031
    %1033 = vperm.xlu0 %1032, %v1004
    %v1034 = vpop.permute.xlu0 %1033
    %v1035 = vlaneseq
    %v1036 = vshrl.u32 %v1035, 7
    %v1037 = vadd.s32 %v1036, 40
    %1038 = vset.pattern.permute.xlu0 %v1037
    %1039 = vperm.xlu0 %1038, %v1004
    %v1040 = vpop.permute.xlu0 %1039
    %v1041 = vlaneseq
    %v1042 = vshrl.u32 %v1041, 7
    %v1043 = vadd.s32 %v1042, 48
    %1044 = vset.pattern.permute.xlu0 %v1043
    %1045 = vperm.xlu0 %1044, %v1004
    %v1046 = vpop.permute.xlu0 %1045
    %v1047 = vlaneseq
    %v1048 = vshrl.u32 %v1047, 7
    %v1049 = vadd.s32 %v1048, 56
    %1050 = vset.pattern.permute.xlu0 %v1049
    %1051 = vperm.xlu0 %1050, %v1004
    %v1052 = vpop.permute.xlu0 %1051
    %v1053 = vlaneseq
    %v1054 = vshrl.u32 %v1053, 7
    %v1055 = vadd.s32 %v1054, 64
    %1056 = vset.pattern.permute.xlu0 %v1055
    %1057 = vperm.xlu0 %1056, %v1004
    %v1058 = vpop.permute.xlu0 %1057
    %v1059 = vlaneseq
    %v1060 = vshrl.u32 %v1059, 7
    %v1061 = vadd.s32 %v1060, 72
    %1062 = vset.pattern.permute.xlu0 %v1061
    %1063 = vperm.xlu0 %1062, %v1004
    %v1064 = vpop.permute.xlu0 %1063
    %v1065 = vlaneseq
    %v1066 = vshrl.u32 %v1065, 7
    %v1067 = vadd.s32 %v1066, 80
    %1068 = vset.pattern.permute.xlu0 %v1067
    %1069 = vperm.xlu0 %1068, %v1004
    %v1070 = vpop.permute.xlu0 %1069
    %v1071 = vlaneseq
    %v1072 = vshrl.u32 %v1071, 7
    %v1073 = vadd.s32 %v1072, 88
    %1074 = vset.pattern.permute.xlu0 %v1073
    %1075 = vperm.xlu0 %1074, %v1004
    %v1076 = vpop.permute.xlu0 %1075
    %v1077 = vlaneseq
    %v1078 = vshrl.u32 %v1077, 7
    %v1079 = vadd.s32 %v1078, 96
    %1080 = vset.pattern.permute.xlu0 %v1079
    %1081 = vperm.xlu0 %1080, %v1004
    %v1082 = vpop.permute.xlu0 %1081
    %v1083 = vlaneseq
    %v1084 = vshrl.u32 %v1083, 7
    %v1085 = vadd.s32 %v1084, 104
    %1086 = vset.pattern.permute.xlu0 %v1085
    %1087 = vperm.xlu0 %1086, %v1004
    %v1088 = vpop.permute.xlu0 %1087
    %v1089 = vlaneseq
    %v1090 = vshrl.u32 %v1089, 7
    %v1091 = vadd.s32 %v1090, 112
    %1092 = vset.pattern.permute.xlu0 %v1091
    %1093 = vperm.xlu0 %1092, %v1004
    %v1094 = vpop.permute.xlu0 %1093
    %v1095 = vlaneseq
    %v1096 = vshrl.u32 %v1095, 7
    %v1097 = vadd.s32 %v1096, 120
    %1098 = vset.pattern.permute.xlu0 %v1097
    %1099 = vperm.xlu0 %1098, %v1004
    %v1100 = vpop.permute.xlu0 %1099
    %v1101 = vperm.slane %v323, 0
    %v1102 = vlaneseq
    %v1103 = vshrl.u32 %v1102, 7
    %1105 = vset.pattern.permute.xlu0 %v1103
    %1106 = vperm.xlu0 %1105, %v1101
    %v1107 = vpop.permute.xlu0 %1106
    %v1108 = vlaneseq
    %v1109 = vshrl.u32 %v1108, 7
    %v1110 = vadd.s32 %v1109, 8
    %1111 = vset.pattern.permute.xlu0 %v1110
    %1112 = vperm.xlu0 %1111, %v1101
    %v1113 = vpop.permute.xlu0 %1112
    %v1114 = vlaneseq
    %v1115 = vshrl.u32 %v1114, 7
    %v1116 = vadd.s32 %v1115, 16
    %1117 = vset.pattern.permute.xlu0 %v1116
    %1118 = vperm.xlu0 %1117, %v1101
    %v1119 = vpop.permute.xlu0 %1118
    %v1120 = vlaneseq
    %v1121 = vshrl.u32 %v1120, 7
    %v1122 = vadd.s32 %v1121, 24
    %1123 = vset.pattern.permute.xlu0 %v1122
    %1124 = vperm.xlu0 %1123, %v1101
    %v1125 = vpop.permute.xlu0 %1124
    %v1126 = vlaneseq
    %v1127 = vshrl.u32 %v1126, 7
    %v1128 = vadd.s32 %v1127, 32
    %1129 = vset.pattern.permute.xlu0 %v1128
    %1130 = vperm.xlu0 %1129, %v1101
    %v1131 = vpop.permute.xlu0 %1130
    %v1132 = vlaneseq
    %v1133 = vshrl.u32 %v1132, 7
    %v1134 = vadd.s32 %v1133, 40
    %1135 = vset.pattern.permute.xlu0 %v1134
    %1136 = vperm.xlu0 %1135, %v1101
    %v1137 = vpop.permute.xlu0 %1136
    %v1138 = vlaneseq
    %v1139 = vshrl.u32 %v1138, 7
    %v1140 = vadd.s32 %v1139, 48
    %1141 = vset.pattern.permute.xlu0 %v1140
    %1142 = vperm.xlu0 %1141, %v1101
    %v1143 = vpop.permute.xlu0 %1142
    %v1144 = vlaneseq
    %v1145 = vshrl.u32 %v1144, 7
    %v1146 = vadd.s32 %v1145, 56
    %1147 = vset.pattern.permute.xlu0 %v1146
    %1148 = vperm.xlu0 %1147, %v1101
    %v1149 = vpop.permute.xlu0 %1148
    %v1150 = vlaneseq
    %v1151 = vshrl.u32 %v1150, 7
    %v1152 = vadd.s32 %v1151, 64
    %1153 = vset.pattern.permute.xlu0 %v1152
    %1154 = vperm.xlu0 %1153, %v1101
    %v1155 = vpop.permute.xlu0 %1154
    %v1156 = vlaneseq
    %v1157 = vshrl.u32 %v1156, 7
    %v1158 = vadd.s32 %v1157, 72
    %1159 = vset.pattern.permute.xlu0 %v1158
    %1160 = vperm.xlu0 %1159, %v1101
    %v1161 = vpop.permute.xlu0 %1160
    %v1162 = vlaneseq
    %v1163 = vshrl.u32 %v1162, 7
    %v1164 = vadd.s32 %v1163, 80
    %1165 = vset.pattern.permute.xlu0 %v1164
    %1166 = vperm.xlu0 %1165, %v1101
    %v1167 = vpop.permute.xlu0 %1166
    %v1168 = vlaneseq
    %v1169 = vshrl.u32 %v1168, 7
    %v1170 = vadd.s32 %v1169, 88
    %1171 = vset.pattern.permute.xlu0 %v1170
    %1172 = vperm.xlu0 %1171, %v1101
    %v1173 = vpop.permute.xlu0 %1172
    %v1174 = vlaneseq
    %v1175 = vshrl.u32 %v1174, 7
    %v1176 = vadd.s32 %v1175, 96
    %1177 = vset.pattern.permute.xlu0 %v1176
    %1178 = vperm.xlu0 %1177, %v1101
    %v1179 = vpop.permute.xlu0 %1178
    %v1180 = vlaneseq
    %v1181 = vshrl.u32 %v1180, 7
    %v1182 = vadd.s32 %v1181, 104
    %1183 = vset.pattern.permute.xlu0 %v1182
    %1184 = vperm.xlu0 %1183, %v1101
    %v1185 = vpop.permute.xlu0 %1184
    %v1186 = vlaneseq
    %v1187 = vshrl.u32 %v1186, 7
    %v1188 = vadd.s32 %v1187, 112
    %1189 = vset.pattern.permute.xlu0 %v1188
    %1190 = vperm.xlu0 %1189, %v1101
    %v1191 = vpop.permute.xlu0 %1190
    %v1192 = vlaneseq
    %v1193 = vshrl.u32 %v1192, 7
    %v1194 = vadd.s32 %v1193, 120
    %1195 = vset.pattern.permute.xlu0 %v1194
    %1196 = vperm.xlu0 %1195, %v1101
    %v1197 = vpop.permute.xlu0 %1196
    %v1198 = vperm.slane %v323, 1
    %v1199 = vlaneseq
    %v1200 = vshrl.u32 %v1199, 7
    %1202 = vset.pattern.permute.xlu0 %v1200
    %1203 = vperm.xlu0 %1202, %v1198
    %v1204 = vpop.permute.xlu0 %1203
    %v1205 = vlaneseq
    %v1206 = vshrl.u32 %v1205, 7
    %v1207 = vadd.s32 %v1206, 8
    %1208 = vset.pattern.permute.xlu0 %v1207
    %1209 = vperm.xlu0 %1208, %v1198
    %v1210 = vpop.permute.xlu0 %1209
    %v1211 = vlaneseq
    %v1212 = vshrl.u32 %v1211, 7
    %v1213 = vadd.s32 %v1212, 16
    %1214 = vset.pattern.permute.xlu0 %v1213
    %1215 = vperm.xlu0 %1214, %v1198
    %v1216 = vpop.permute.xlu0 %1215
    %v1217 = vlaneseq
    %v1218 = vshrl.u32 %v1217, 7
    %v1219 = vadd.s32 %v1218, 24
    %1220 = vset.pattern.permute.xlu0 %v1219
    %1221 = vperm.xlu0 %1220, %v1198
    %v1222 = vpop.permute.xlu0 %1221
    %v1223 = vlaneseq
    %v1224 = vshrl.u32 %v1223, 7
    %v1225 = vadd.s32 %v1224, 32
    %1226 = vset.pattern.permute.xlu0 %v1225
    %1227 = vperm.xlu0 %1226, %v1198
    %v1228 = vpop.permute.xlu0 %1227
    %v1229 = vlaneseq
    %v1230 = vshrl.u32 %v1229, 7
    %v1231 = vadd.s32 %v1230, 40
    %1232 = vset.pattern.permute.xlu0 %v1231
    %1233 = vperm.xlu0 %1232, %v1198
    %v1234 = vpop.permute.xlu0 %1233
    %v1235 = vlaneseq
    %v1236 = vshrl.u32 %v1235, 7
    %v1237 = vadd.s32 %v1236, 48
    %1238 = vset.pattern.permute.xlu0 %v1237
    %1239 = vperm.xlu0 %1238, %v1198
    %v1240 = vpop.permute.xlu0 %1239
    %v1241 = vlaneseq
    %v1242 = vshrl.u32 %v1241, 7
    %v1243 = vadd.s32 %v1242, 56
    %1244 = vset.pattern.permute.xlu0 %v1243
    %1245 = vperm.xlu0 %1244, %v1198
    %v1246 = vpop.permute.xlu0 %1245
    %v1247 = vlaneseq
    %v1248 = vshrl.u32 %v1247, 7
    %v1249 = vadd.s32 %v1248, 64
    %1250 = vset.pattern.permute.xlu0 %v1249
    %1251 = vperm.xlu0 %1250, %v1198
    %v1252 = vpop.permute.xlu0 %1251
    %v1253 = vlaneseq
    %v1254 = vshrl.u32 %v1253, 7
    %v1255 = vadd.s32 %v1254, 72
    %1256 = vset.pattern.permute.xlu0 %v1255
    %1257 = vperm.xlu0 %1256, %v1198
    %v1258 = vpop.permute.xlu0 %1257
    %v1259 = vlaneseq
    %v1260 = vshrl.u32 %v1259, 7
    %v1261 = vadd.s32 %v1260, 80
    %1262 = vset.pattern.permute.xlu0 %v1261
    %1263 = vperm.xlu0 %1262, %v1198
    %v1264 = vpop.permute.xlu0 %1263
    %v1265 = vlaneseq
    %v1266 = vshrl.u32 %v1265, 7
    %v1267 = vadd.s32 %v1266, 88
    %1268 = vset.pattern.permute.xlu0 %v1267
    %1269 = vperm.xlu0 %1268, %v1198
    %v1270 = vpop.permute.xlu0 %1269
    %v1271 = vlaneseq
    %v1272 = vshrl.u32 %v1271, 7
    %v1273 = vadd.s32 %v1272, 96
    %1274 = vset.pattern.permute.xlu0 %v1273
    %1275 = vperm.xlu0 %1274, %v1198
    %v1276 = vpop.permute.xlu0 %1275
    %v1277 = vlaneseq
    %v1278 = vshrl.u32 %v1277, 7
    %v1279 = vadd.s32 %v1278, 104
    %1280 = vset.pattern.permute.xlu0 %v1279
    %1281 = vperm.xlu0 %1280, %v1198
    %v1282 = vpop.permute.xlu0 %1281
    %v1283 = vlaneseq
    %v1284 = vshrl.u32 %v1283, 7
    %v1285 = vadd.s32 %v1284, 112
    %1286 = vset.pattern.permute.xlu0 %v1285
    %1287 = vperm.xlu0 %1286, %v1198
    %v1288 = vpop.permute.xlu0 %1287
    %v1289 = vlaneseq
    %v1290 = vshrl.u32 %v1289, 7
    %v1291 = vadd.s32 %v1290, 120
    %1292 = vset.pattern.permute.xlu0 %v1291
    %1293 = vperm.xlu0 %1292, %v1198
    %v1294 = vpop.permute.xlu0 %1293
    %v1295 = vperm.slane %v323, 2
    %v1296 = vlaneseq
    %v1297 = vshrl.u32 %v1296, 7
    %1299 = vset.pattern.permute.xlu0 %v1297
    %1300 = vperm.xlu0 %1299, %v1295
    %v1301 = vpop.permute.xlu0 %1300
    %v1302 = vlaneseq
    %v1303 = vshrl.u32 %v1302, 7
    %v1304 = vadd.s32 %v1303, 8
    %1305 = vset.pattern.permute.xlu0 %v1304
    %1306 = vperm.xlu0 %1305, %v1295
    %v1307 = vpop.permute.xlu0 %1306
    %v1308 = vlaneseq
    %v1309 = vshrl.u32 %v1308, 7
    %v1310 = vadd.s32 %v1309, 16
    %1311 = vset.pattern.permute.xlu0 %v1310
    %1312 = vperm.xlu0 %1311, %v1295
    %v1313 = vpop.permute.xlu0 %1312
    %v1314 = vlaneseq
    %v1315 = vshrl.u32 %v1314, 7
    %v1316 = vadd.s32 %v1315, 24
    %1317 = vset.pattern.permute.xlu0 %v1316
    %1318 = vperm.xlu0 %1317, %v1295
    %v1319 = vpop.permute.xlu0 %1318
    %v1320 = vlaneseq
    %v1321 = vshrl.u32 %v1320, 7
    %v1322 = vadd.s32 %v1321, 32
    %1323 = vset.pattern.permute.xlu0 %v1322
    %1324 = vperm.xlu0 %1323, %v1295
    %v1325 = vpop.permute.xlu0 %1324
    %v1326 = vlaneseq
    %v1327 = vshrl.u32 %v1326, 7
    %v1328 = vadd.s32 %v1327, 40
    %1329 = vset.pattern.permute.xlu0 %v1328
    %1330 = vperm.xlu0 %1329, %v1295
    %v1331 = vpop.permute.xlu0 %1330
    %v1332 = vlaneseq
    %v1333 = vshrl.u32 %v1332, 7
    %v1334 = vadd.s32 %v1333, 48
    %1335 = vset.pattern.permute.xlu0 %v1334
    %1336 = vperm.xlu0 %1335, %v1295
    %v1337 = vpop.permute.xlu0 %1336
    %v1338 = vlaneseq
    %v1339 = vshrl.u32 %v1338, 7
    %v1340 = vadd.s32 %v1339, 56
    %1341 = vset.pattern.permute.xlu0 %v1340
    %1342 = vperm.xlu0 %1341, %v1295
    %v1343 = vpop.permute.xlu0 %1342
    %v1344 = vlaneseq
    %v1345 = vshrl.u32 %v1344, 7
    %v1346 = vadd.s32 %v1345, 64
    %1347 = vset.pattern.permute.xlu0 %v1346
    %1348 = vperm.xlu0 %1347, %v1295
    %v1349 = vpop.permute.xlu0 %1348
    %v1350 = vlaneseq
    %v1351 = vshrl.u32 %v1350, 7
    %v1352 = vadd.s32 %v1351, 72
    %1353 = vset.pattern.permute.xlu0 %v1352
    %1354 = vperm.xlu0 %1353, %v1295
    %v1355 = vpop.permute.xlu0 %1354
    %v1356 = vlaneseq
    %v1357 = vshrl.u32 %v1356, 7
    %v1358 = vadd.s32 %v1357, 80
    %1359 = vset.pattern.permute.xlu0 %v1358
    %1360 = vperm.xlu0 %1359, %v1295
    %v1361 = vpop.permute.xlu0 %1360
    %v1362 = vlaneseq
    %v1363 = vshrl.u32 %v1362, 7
    %v1364 = vadd.s32 %v1363, 88
    %1365 = vset.pattern.permute.xlu0 %v1364
    %1366 = vperm.xlu0 %1365, %v1295
    %v1367 = vpop.permute.xlu0 %1366
    %v1368 = vlaneseq
    %v1369 = vshrl.u32 %v1368, 7
    %v1370 = vadd.s32 %v1369, 96
    %1371 = vset.pattern.permute.xlu0 %v1370
    %1372 = vperm.xlu0 %1371, %v1295
    %v1373 = vpop.permute.xlu0 %1372
    %v1374 = vlaneseq
    %v1375 = vshrl.u32 %v1374, 7
    %v1376 = vadd.s32 %v1375, 104
    %1377 = vset.pattern.permute.xlu0 %v1376
    %1378 = vperm.xlu0 %1377, %v1295
    %v1379 = vpop.permute.xlu0 %1378
    %v1380 = vlaneseq
    %v1381 = vshrl.u32 %v1380, 7
    %v1382 = vadd.s32 %v1381, 112
    %1383 = vset.pattern.permute.xlu0 %v1382
    %1384 = vperm.xlu0 %1383, %v1295
    %v1385 = vpop.permute.xlu0 %1384
    %v1386 = vlaneseq
    %v1387 = vshrl.u32 %v1386, 7
    %v1388 = vadd.s32 %v1387, 120
    %1389 = vset.pattern.permute.xlu0 %v1388
    %1390 = vperm.xlu0 %1389, %v1295
    %v1391 = vpop.permute.xlu0 %1390
    %v1392 = vperm.slane %v323, 3
    %v1393 = vlaneseq
    %v1394 = vshrl.u32 %v1393, 7
    %1396 = vset.pattern.permute.xlu0 %v1394
    %1397 = vperm.xlu0 %1396, %v1392
    %v1398 = vpop.permute.xlu0 %1397
    %v1399 = vlaneseq
    %v1400 = vshrl.u32 %v1399, 7
    %v1401 = vadd.s32 %v1400, 8
    %1402 = vset.pattern.permute.xlu0 %v1401
    %1403 = vperm.xlu0 %1402, %v1392
    %v1404 = vpop.permute.xlu0 %1403
    %v1405 = vlaneseq
    %v1406 = vshrl.u32 %v1405, 7
    %v1407 = vadd.s32 %v1406, 16
    %1408 = vset.pattern.permute.xlu0 %v1407
    %1409 = vperm.xlu0 %1408, %v1392
    %v1410 = vpop.permute.xlu0 %1409
    %v1411 = vlaneseq
    %v1412 = vshrl.u32 %v1411, 7
    %v1413 = vadd.s32 %v1412, 24
    %1414 = vset.pattern.permute.xlu0 %v1413
    %1415 = vperm.xlu0 %1414, %v1392
    %v1416 = vpop.permute.xlu0 %1415
    %v1417 = vlaneseq
    %v1418 = vshrl.u32 %v1417, 7
    %v1419 = vadd.s32 %v1418, 32
    %1420 = vset.pattern.permute.xlu0 %v1419
    %1421 = vperm.xlu0 %1420, %v1392
    %v1422 = vpop.permute.xlu0 %1421
    %v1423 = vlaneseq
    %v1424 = vshrl.u32 %v1423, 7
    %v1425 = vadd.s32 %v1424, 40
    %1426 = vset.pattern.permute.xlu0 %v1425
    %1427 = vperm.xlu0 %1426, %v1392
    %v1428 = vpop.permute.xlu0 %1427
    %v1429 = vlaneseq
    %v1430 = vshrl.u32 %v1429, 7
    %v1431 = vadd.s32 %v1430, 48
    %1432 = vset.pattern.permute.xlu0 %v1431
    %1433 = vperm.xlu0 %1432, %v1392
    %v1434 = vpop.permute.xlu0 %1433
    %v1435 = vlaneseq
    %v1436 = vshrl.u32 %v1435, 7
    %v1437 = vadd.s32 %v1436, 56
    %1438 = vset.pattern.permute.xlu0 %v1437
    %1439 = vperm.xlu0 %1438, %v1392
    %v1440 = vpop.permute.xlu0 %1439
    %v1441 = vlaneseq
    %v1442 = vshrl.u32 %v1441, 7
    %v1443 = vadd.s32 %v1442, 64
    %1444 = vset.pattern.permute.xlu0 %v1443
    %1445 = vperm.xlu0 %1444, %v1392
    %v1446 = vpop.permute.xlu0 %1445
    %v1447 = vlaneseq
    %v1448 = vshrl.u32 %v1447, 7
    %v1449 = vadd.s32 %v1448, 72
    %1450 = vset.pattern.permute.xlu0 %v1449
    %1451 = vperm.xlu0 %1450, %v1392
    %v1452 = vpop.permute.xlu0 %1451
    %v1453 = vlaneseq
    %v1454 = vshrl.u32 %v1453, 7
    %v1455 = vadd.s32 %v1454, 80
    %1456 = vset.pattern.permute.xlu0 %v1455
    %1457 = vperm.xlu0 %1456, %v1392
    %v1458 = vpop.permute.xlu0 %1457
    %v1459 = vlaneseq
    %v1460 = vshrl.u32 %v1459, 7
    %v1461 = vadd.s32 %v1460, 88
    %1462 = vset.pattern.permute.xlu0 %v1461
    %1463 = vperm.xlu0 %1462, %v1392
    %v1464 = vpop.permute.xlu0 %1463
    %v1465 = vlaneseq
    %v1466 = vshrl.u32 %v1465, 7
    %v1467 = vadd.s32 %v1466, 96
    %1468 = vset.pattern.permute.xlu0 %v1467
    %1469 = vperm.xlu0 %1468, %v1392
    %v1470 = vpop.permute.xlu0 %1469
    %v1471 = vlaneseq
    %v1472 = vshrl.u32 %v1471, 7
    %v1473 = vadd.s32 %v1472, 104
    %1474 = vset.pattern.permute.xlu0 %v1473
    %1475 = vperm.xlu0 %1474, %v1392
    %v1476 = vpop.permute.xlu0 %1475
    %v1477 = vlaneseq
    %v1478 = vshrl.u32 %v1477, 7
    %v1479 = vadd.s32 %v1478, 112
    %1480 = vset.pattern.permute.xlu0 %v1479
    %1481 = vperm.xlu0 %1480, %v1392
    %v1482 = vpop.permute.xlu0 %1481
    %v1483 = vlaneseq
    %v1484 = vshrl.u32 %v1483, 7
    %v1485 = vadd.s32 %v1484, 120
    %1486 = vset.pattern.permute.xlu0 %v1485
    %1487 = vperm.xlu0 %1486, %v1392
    %v1488 = vpop.permute.xlu0 %1487
    %v1489 = vperm.slane %v323, 4
    %v1490 = vlaneseq
    %v1491 = vshrl.u32 %v1490, 7
    %1493 = vset.pattern.permute.xlu0 %v1491
    %1494 = vperm.xlu0 %1493, %v1489
    %v1495 = vpop.permute.xlu0 %1494
    %v1496 = vlaneseq
    %v1497 = vshrl.u32 %v1496, 7
    %v1498 = vadd.s32 %v1497, 8
    %1499 = vset.pattern.permute.xlu0 %v1498
    %1500 = vperm.xlu0 %1499, %v1489
    %v1501 = vpop.permute.xlu0 %1500
    %v1502 = vlaneseq
    %v1503 = vshrl.u32 %v1502, 7
    %v1504 = vadd.s32 %v1503, 16
    %1505 = vset.pattern.permute.xlu0 %v1504
    %1506 = vperm.xlu0 %1505, %v1489
    %v1507 = vpop.permute.xlu0 %1506
    %v1508 = vlaneseq
    %v1509 = vshrl.u32 %v1508, 7
    %v1510 = vadd.s32 %v1509, 24
    %1511 = vset.pattern.permute.xlu0 %v1510
    %1512 = vperm.xlu0 %1511, %v1489
    %v1513 = vpop.permute.xlu0 %1512
    %v1514 = vlaneseq
    %v1515 = vshrl.u32 %v1514, 7
    %v1516 = vadd.s32 %v1515, 32
    %1517 = vset.pattern.permute.xlu0 %v1516
    %1518 = vperm.xlu0 %1517, %v1489
    %v1519 = vpop.permute.xlu0 %1518
    %v1520 = vlaneseq
    %v1521 = vshrl.u32 %v1520, 7
    %v1522 = vadd.s32 %v1521, 40
    %1523 = vset.pattern.permute.xlu0 %v1522
    %1524 = vperm.xlu0 %1523, %v1489
    %v1525 = vpop.permute.xlu0 %1524
    %v1526 = vlaneseq
    %v1527 = vshrl.u32 %v1526, 7
    %v1528 = vadd.s32 %v1527, 48
    %1529 = vset.pattern.permute.xlu0 %v1528
    %1530 = vperm.xlu0 %1529, %v1489
    %v1531 = vpop.permute.xlu0 %1530
    %v1532 = vlaneseq
    %v1533 = vshrl.u32 %v1532, 7
    %v1534 = vadd.s32 %v1533, 56
    %1535 = vset.pattern.permute.xlu0 %v1534
    %1536 = vperm.xlu0 %1535, %v1489
    %v1537 = vpop.permute.xlu0 %1536
    %v1538 = vlaneseq
    %v1539 = vshrl.u32 %v1538, 7
    %v1540 = vadd.s32 %v1539, 64
    %1541 = vset.pattern.permute.xlu0 %v1540
    %1542 = vperm.xlu0 %1541, %v1489
    %v1543 = vpop.permute.xlu0 %1542
    %v1544 = vlaneseq
    %v1545 = vshrl.u32 %v1544, 7
    %v1546 = vadd.s32 %v1545, 72
    %1547 = vset.pattern.permute.xlu0 %v1546
    %1548 = vperm.xlu0 %1547, %v1489
    %v1549 = vpop.permute.xlu0 %1548
    %v1550 = vlaneseq
    %v1551 = vshrl.u32 %v1550, 7
    %v1552 = vadd.s32 %v1551, 80
    %1553 = vset.pattern.permute.xlu0 %v1552
    %1554 = vperm.xlu0 %1553, %v1489
    %v1555 = vpop.permute.xlu0 %1554
    %v1556 = vlaneseq
    %v1557 = vshrl.u32 %v1556, 7
    %v1558 = vadd.s32 %v1557, 88
    %1559 = vset.pattern.permute.xlu0 %v1558
    %1560 = vperm.xlu0 %1559, %v1489
    %v1561 = vpop.permute.xlu0 %1560
    %v1562 = vlaneseq
    %v1563 = vshrl.u32 %v1562, 7
    %v1564 = vadd.s32 %v1563, 96
    %1565 = vset.pattern.permute.xlu0 %v1564
    %1566 = vperm.xlu0 %1565, %v1489
    %v1567 = vpop.permute.xlu0 %1566
    %v1568 = vlaneseq
    %v1569 = vshrl.u32 %v1568, 7
    %v1570 = vadd.s32 %v1569, 104
    %1571 = vset.pattern.permute.xlu0 %v1570
    %1572 = vperm.xlu0 %1571, %v1489
    %v1573 = vpop.permute.xlu0 %1572
    %v1574 = vlaneseq
    %v1575 = vshrl.u32 %v1574, 7
    %v1576 = vadd.s32 %v1575, 112
    %1577 = vset.pattern.permute.xlu0 %v1576
    %1578 = vperm.xlu0 %1577, %v1489
    %v1579 = vpop.permute.xlu0 %1578
    %v1580 = vlaneseq
    %v1581 = vshrl.u32 %v1580, 7
    %v1582 = vadd.s32 %v1581, 120
    %1583 = vset.pattern.permute.xlu0 %v1582
    %1584 = vperm.xlu0 %1583, %v1489
    %v1585 = vpop.permute.xlu0 %1584
    %v1586 = vperm.slane %v323, 5
    %v1587 = vlaneseq
    %v1588 = vshrl.u32 %v1587, 7
    %1590 = vset.pattern.permute.xlu0 %v1588
    %1591 = vperm.xlu0 %1590, %v1586
    %v1592 = vpop.permute.xlu0 %1591
    %v1593 = vlaneseq
    %v1594 = vshrl.u32 %v1593, 7
    %v1595 = vadd.s32 %v1594, 8
    %1596 = vset.pattern.permute.xlu0 %v1595
    %1597 = vperm.xlu0 %1596, %v1586
    %v1598 = vpop.permute.xlu0 %1597
    %v1599 = vlaneseq
    %v1600 = vshrl.u32 %v1599, 7
    %v1601 = vadd.s32 %v1600, 16
    %1602 = vset.pattern.permute.xlu0 %v1601
    %1603 = vperm.xlu0 %1602, %v1586
    %v1604 = vpop.permute.xlu0 %1603
    %v1605 = vlaneseq
    %v1606 = vshrl.u32 %v1605, 7
    %v1607 = vadd.s32 %v1606, 24
    %1608 = vset.pattern.permute.xlu0 %v1607
    %1609 = vperm.xlu0 %1608, %v1586
    %v1610 = vpop.permute.xlu0 %1609
    %v1611 = vlaneseq
    %v1612 = vshrl.u32 %v1611, 7
    %v1613 = vadd.s32 %v1612, 32
    %1614 = vset.pattern.permute.xlu0 %v1613
    %1615 = vperm.xlu0 %1614, %v1586
    %v1616 = vpop.permute.xlu0 %1615
    %v1617 = vlaneseq
    %v1618 = vshrl.u32 %v1617, 7
    %v1619 = vadd.s32 %v1618, 40
    %1620 = vset.pattern.permute.xlu0 %v1619
    %1621 = vperm.xlu0 %1620, %v1586
    %v1622 = vpop.permute.xlu0 %1621
    %v1623 = vlaneseq
    %v1624 = vshrl.u32 %v1623, 7
    %v1625 = vadd.s32 %v1624, 48
    %1626 = vset.pattern.permute.xlu0 %v1625
    %1627 = vperm.xlu0 %1626, %v1586
    %v1628 = vpop.permute.xlu0 %1627
    %v1629 = vlaneseq
    %v1630 = vshrl.u32 %v1629, 7
    %v1631 = vadd.s32 %v1630, 56
    %1632 = vset.pattern.permute.xlu0 %v1631
    %1633 = vperm.xlu0 %1632, %v1586
    %v1634 = vpop.permute.xlu0 %1633
    %v1635 = vlaneseq
    %v1636 = vshrl.u32 %v1635, 7
    %v1637 = vadd.s32 %v1636, 64
    %1638 = vset.pattern.permute.xlu0 %v1637
    %1639 = vperm.xlu0 %1638, %v1586
    %v1640 = vpop.permute.xlu0 %1639
    %v1641 = vlaneseq
    %v1642 = vshrl.u32 %v1641, 7
    %v1643 = vadd.s32 %v1642, 72
    %1644 = vset.pattern.permute.xlu0 %v1643
    %1645 = vperm.xlu0 %1644, %v1586
    %v1646 = vpop.permute.xlu0 %1645
    %v1647 = vlaneseq
    %v1648 = vshrl.u32 %v1647, 7
    %v1649 = vadd.s32 %v1648, 80
    %1650 = vset.pattern.permute.xlu0 %v1649
    %1651 = vperm.xlu0 %1650, %v1586
    %v1652 = vpop.permute.xlu0 %1651
    %v1653 = vlaneseq
    %v1654 = vshrl.u32 %v1653, 7
    %v1655 = vadd.s32 %v1654, 88
    %1656 = vset.pattern.permute.xlu0 %v1655
    %1657 = vperm.xlu0 %1656, %v1586
    %v1658 = vpop.permute.xlu0 %1657
    %v1659 = vlaneseq
    %v1660 = vshrl.u32 %v1659, 7
    %v1661 = vadd.s32 %v1660, 96
    %1662 = vset.pattern.permute.xlu0 %v1661
    %1663 = vperm.xlu0 %1662, %v1586
    %v1664 = vpop.permute.xlu0 %1663
    %v1665 = vlaneseq
    %v1666 = vshrl.u32 %v1665, 7
    %v1667 = vadd.s32 %v1666, 104
    %1668 = vset.pattern.permute.xlu0 %v1667
    %1669 = vperm.xlu0 %1668, %v1586
    %v1670 = vpop.permute.xlu0 %1669
    %v1671 = vlaneseq
    %v1672 = vshrl.u32 %v1671, 7
    %v1673 = vadd.s32 %v1672, 112
    %1674 = vset.pattern.permute.xlu0 %v1673
    %1675 = vperm.xlu0 %1674, %v1586
    %v1676 = vpop.permute.xlu0 %1675
    %v1677 = vlaneseq
    %v1678 = vshrl.u32 %v1677, 7
    %v1679 = vadd.s32 %v1678, 120
    %1680 = vset.pattern.permute.xlu0 %v1679
    %1681 = vperm.xlu0 %1680, %v1586
    %v1682 = vpop.permute.xlu0 %1681
    %v1683 = vperm.slane %v323, 6
    %v1684 = vlaneseq
    %v1685 = vshrl.u32 %v1684, 7
    %1687 = vset.pattern.permute.xlu0 %v1685
    %1688 = vperm.xlu0 %1687, %v1683
    %v1689 = vpop.permute.xlu0 %1688
    %v1690 = vlaneseq
    %v1691 = vshrl.u32 %v1690, 7
    %v1692 = vadd.s32 %v1691, 8
    %1693 = vset.pattern.permute.xlu0 %v1692
    %1694 = vperm.xlu0 %1693, %v1683
    %v1695 = vpop.permute.xlu0 %1694
    %v1696 = vlaneseq
    %v1697 = vshrl.u32 %v1696, 7
    %v1698 = vadd.s32 %v1697, 16
    %1699 = vset.pattern.permute.xlu0 %v1698
    %1700 = vperm.xlu0 %1699, %v1683
    %v1701 = vpop.permute.xlu0 %1700
    %v1702 = vlaneseq
    %v1703 = vshrl.u32 %v1702, 7
    %v1704 = vadd.s32 %v1703, 24
    %1705 = vset.pattern.permute.xlu0 %v1704
    %1706 = vperm.xlu0 %1705, %v1683
    %v1707 = vpop.permute.xlu0 %1706
    %v1708 = vlaneseq
    %v1709 = vshrl.u32 %v1708, 7
    %v1710 = vadd.s32 %v1709, 32
    %1711 = vset.pattern.permute.xlu0 %v1710
    %1712 = vperm.xlu0 %1711, %v1683
    %v1713 = vpop.permute.xlu0 %1712
    %v1714 = vlaneseq
    %v1715 = vshrl.u32 %v1714, 7
    %v1716 = vadd.s32 %v1715, 40
    %1717 = vset.pattern.permute.xlu0 %v1716
    %1718 = vperm.xlu0 %1717, %v1683
    %v1719 = vpop.permute.xlu0 %1718
    %v1720 = vlaneseq
    %v1721 = vshrl.u32 %v1720, 7
    %v1722 = vadd.s32 %v1721, 48
    %1723 = vset.pattern.permute.xlu0 %v1722
    %1724 = vperm.xlu0 %1723, %v1683
    %v1725 = vpop.permute.xlu0 %1724
    %v1726 = vlaneseq
    %v1727 = vshrl.u32 %v1726, 7
    %v1728 = vadd.s32 %v1727, 56
    %1729 = vset.pattern.permute.xlu0 %v1728
    %1730 = vperm.xlu0 %1729, %v1683
    %v1731 = vpop.permute.xlu0 %1730
    %v1732 = vlaneseq
    %v1733 = vshrl.u32 %v1732, 7
    %v1734 = vadd.s32 %v1733, 64
    %1735 = vset.pattern.permute.xlu0 %v1734
    %1736 = vperm.xlu0 %1735, %v1683
    %v1737 = vpop.permute.xlu0 %1736
    %v1738 = vlaneseq
    %v1739 = vshrl.u32 %v1738, 7
    %v1740 = vadd.s32 %v1739, 72
    %1741 = vset.pattern.permute.xlu0 %v1740
    %1742 = vperm.xlu0 %1741, %v1683
    %v1743 = vpop.permute.xlu0 %1742
    %v1744 = vlaneseq
    %v1745 = vshrl.u32 %v1744, 7
    %v1746 = vadd.s32 %v1745, 80
    %1747 = vset.pattern.permute.xlu0 %v1746
    %1748 = vperm.xlu0 %1747, %v1683
    %v1749 = vpop.permute.xlu0 %1748
    %v1750 = vlaneseq
    %v1751 = vshrl.u32 %v1750, 7
    %v1752 = vadd.s32 %v1751, 88
    %1753 = vset.pattern.permute.xlu0 %v1752
    %1754 = vperm.xlu0 %1753, %v1683
    %v1755 = vpop.permute.xlu0 %1754
    %v1756 = vlaneseq
    %v1757 = vshrl.u32 %v1756, 7
    %v1758 = vadd.s32 %v1757, 96
    %1759 = vset.pattern.permute.xlu0 %v1758
    %1760 = vperm.xlu0 %1759, %v1683
    %v1761 = vpop.permute.xlu0 %1760
    %v1762 = vlaneseq
    %v1763 = vshrl.u32 %v1762, 7
    %v1764 = vadd.s32 %v1763, 104
    %1765 = vset.pattern.permute.xlu0 %v1764
    %1766 = vperm.xlu0 %1765, %v1683
    %v1767 = vpop.permute.xlu0 %1766
    %v1768 = vlaneseq
    %v1769 = vshrl.u32 %v1768, 7
    %v1770 = vadd.s32 %v1769, 112
    %1771 = vset.pattern.permute.xlu0 %v1770
    %1772 = vperm.xlu0 %1771, %v1683
    %v1773 = vpop.permute.xlu0 %1772
    %v1774 = vlaneseq
    %v1775 = vshrl.u32 %v1774, 7
    %v1776 = vadd.s32 %v1775, 120
    %1777 = vset.pattern.permute.xlu0 %v1776
    %1778 = vperm.xlu0 %1777, %v1683
    %v1779 = vpop.permute.xlu0 %1778
    %v1780 = vperm.slane %v323, 7
    %v1781 = vlaneseq
    %v1782 = vshrl.u32 %v1781, 7
    %1784 = vset.pattern.permute.xlu0 %v1782
    %1785 = vperm.xlu0 %1784, %v1780
    %v1786 = vpop.permute.xlu0 %1785
    %v1787 = vlaneseq
    %v1788 = vshrl.u32 %v1787, 7
    %v1789 = vadd.s32 %v1788, 8
    %1790 = vset.pattern.permute.xlu0 %v1789
    %1791 = vperm.xlu0 %1790, %v1780
    %v1792 = vpop.permute.xlu0 %1791
    %v1793 = vlaneseq
    %v1794 = vshrl.u32 %v1793, 7
    %v1795 = vadd.s32 %v1794, 16
    %1796 = vset.pattern.permute.xlu0 %v1795
    %1797 = vperm.xlu0 %1796, %v1780
    %v1798 = vpop.permute.xlu0 %1797
    %v1799 = vlaneseq
    %v1800 = vshrl.u32 %v1799, 7
    %v1801 = vadd.s32 %v1800, 24
    %1802 = vset.pattern.permute.xlu0 %v1801
    %1803 = vperm.xlu0 %1802, %v1780
    %v1804 = vpop.permute.xlu0 %1803
    %v1805 = vlaneseq
    %v1806 = vshrl.u32 %v1805, 7
    %v1807 = vadd.s32 %v1806, 32
    %1808 = vset.pattern.permute.xlu0 %v1807
    %1809 = vperm.xlu0 %1808, %v1780
    %v1810 = vpop.permute.xlu0 %1809
    %v1811 = vlaneseq
    %v1812 = vshrl.u32 %v1811, 7
    %v1813 = vadd.s32 %v1812, 40
    %1814 = vset.pattern.permute.xlu0 %v1813
    %1815 = vperm.xlu0 %1814, %v1780
    %v1816 = vpop.permute.xlu0 %1815
    %v1817 = vlaneseq
    %v1818 = vshrl.u32 %v1817, 7
    %v1819 = vadd.s32 %v1818, 48
    %1820 = vset.pattern.permute.xlu0 %v1819
    %1821 = vperm.xlu0 %1820, %v1780
    %v1822 = vpop.permute.xlu0 %1821
    %v1823 = vlaneseq
    %v1824 = vshrl.u32 %v1823, 7
    %v1825 = vadd.s32 %v1824, 56
    %1826 = vset.pattern.permute.xlu0 %v1825
    %1827 = vperm.xlu0 %1826, %v1780
    %v1828 = vpop.permute.xlu0 %1827
    %v1829 = vlaneseq
    %v1830 = vshrl.u32 %v1829, 7
    %v1831 = vadd.s32 %v1830, 64
    %1832 = vset.pattern.permute.xlu0 %v1831
    %1833 = vperm.xlu0 %1832, %v1780
    %v1834 = vpop.permute.xlu0 %1833
    %v1835 = vlaneseq
    %v1836 = vshrl.u32 %v1835, 7
    %v1837 = vadd.s32 %v1836, 72
    %1838 = vset.pattern.permute.xlu0 %v1837
    %1839 = vperm.xlu0 %1838, %v1780
    %v1840 = vpop.permute.xlu0 %1839
    %v1841 = vlaneseq
    %v1842 = vshrl.u32 %v1841, 7
    %v1843 = vadd.s32 %v1842, 80
    %1844 = vset.pattern.permute.xlu0 %v1843
    %1845 = vperm.xlu0 %1844, %v1780
    %v1846 = vpop.permute.xlu0 %1845
    %v1847 = vlaneseq
    %v1848 = vshrl.u32 %v1847, 7
    %v1849 = vadd.s32 %v1848, 88
    %1850 = vset.pattern.permute.xlu0 %v1849
    %1851 = vperm.xlu0 %1850, %v1780
    %v1852 = vpop.permute.xlu0 %1851
    %v1853 = vlaneseq
    %v1854 = vshrl.u32 %v1853, 7
    %v1855 = vadd.s32 %v1854, 96
    %1856 = vset.pattern.permute.xlu0 %v1855
    %1857 = vperm.xlu0 %1856, %v1780
    %v1858 = vpop.permute.xlu0 %1857
    %v1859 = vlaneseq
    %v1860 = vshrl.u32 %v1859, 7
    %v1861 = vadd.s32 %v1860, 104
    %1862 = vset.pattern.permute.xlu0 %v1861
    %1863 = vperm.xlu0 %1862, %v1780
    %v1864 = vpop.permute.xlu0 %1863
    %v1865 = vlaneseq
    %v1866 = vshrl.u32 %v1865, 7
    %v1867 = vadd.s32 %v1866, 112
    %1868 = vset.pattern.permute.xlu0 %v1867
    %1869 = vperm.xlu0 %1868, %v1780
    %v1870 = vpop.permute.xlu0 %1869
    %v1871 = vlaneseq
    %v1872 = vshrl.u32 %v1871, 7
    %v1873 = vadd.s32 %v1872, 120
    %1874 = vset.pattern.permute.xlu0 %v1873
    %1875 = vperm.xlu0 %1874, %v1780
    %v1876 = vpop.permute.xlu0 %1875
    %v1877 = vmul.f32 %v26, %v331
    %v1878 = vmul.f32 %v27, %v337
    %v1879 = vmul.f32 %v28, %v343
    %v1880 = vmul.f32 %v29, %v349
    %v1881 = vmul.f32 %v30, %v355
    %v1882 = vmul.f32 %v31, %v361
    %v1883 = vmul.f32 %v32, %v367
    %v1884 = vmul.f32 %v33, %v373
    %v1885 = vmul.f32 %v34, %v379
    %v1886 = vmul.f32 %v35, %v385
    %v1887 = vmul.f32 %v36, %v391
    %v1888 = vmul.f32 %v37, %v397
    %v1889 = vmul.f32 %v38, %v403
    %v1890 = vmul.f32 %v39, %v409
    %v1891 = vmul.f32 %v40, %v415
    %v1892 = vmul.f32 %v41, %v421
    %v1893 = vmul.f32 %v42, %v428
    %v1894 = vmul.f32 %v43, %v434
    %v1895 = vmul.f32 %v44, %v440
    %v1896 = vmul.f32 %v45, %v446
    %v1897 = vmul.f32 %v46, %v452
    %v1898 = vmul.f32 %v47, %v458
    %v1899 = vmul.f32 %v48, %v464
    %v1900 = vmul.f32 %v49, %v470
    %v1901 = vmul.f32 %v50, %v476
    %v1902 = vmul.f32 %v51, %v482
    %v1903 = vmul.f32 %v52, %v488
    %v1904 = vmul.f32 %v53, %v494
    %v1905 = vmul.f32 %v54, %v500
    %v1906 = vmul.f32 %v55, %v506
    %v1907 = vmul.f32 %v56, %v512
    %v1908 = vmul.f32 %v57, %v518
    %v1909 = vmul.f32 %v58, %v525
    %v1910 = vmul.f32 %v59, %v531
    %v1911 = vmul.f32 %v60, %v537
    %v1912 = vmul.f32 %v61, %v543
    %v1913 = vmul.f32 %v62, %v549
    %v1914 = vmul.f32 %v63, %v555
    %v1915 = vmul.f32 %v64, %v561
    %v1916 = vmul.f32 %v65, %v567
    %v1917 = vmul.f32 %v66, %v573
    %v1918 = vmul.f32 %v67, %v579
    %v1919 = vmul.f32 %v68, %v585
    %v1920 = vmul.f32 %v69, %v591
    %v1921 = vmul.f32 %v70, %v597
    %v1922 = vmul.f32 %v71, %v603
    %v1923 = vmul.f32 %v72, %v609
    %v1924 = vmul.f32 %v73, %v615
    %v1925 = vmul.f32 %v74, %v622
    %v1926 = vmul.f32 %v75, %v628
    %v1927 = vmul.f32 %v76, %v634
    %v1928 = vmul.f32 %v77, %v640
    %v1929 = vmul.f32 %v78, %v646
    %v1930 = vmul.f32 %v79, %v652
    %v1931 = vmul.f32 %v80, %v658
    %v1932 = vmul.f32 %v81, %v664
    %v1933 = vmul.f32 %v82, %v670
    %v1934 = vmul.f32 %v83, %v676
    %v1935 = vmul.f32 %v84, %v682
    %v1936 = vmul.f32 %v85, %v688
    %v1937 = vmul.f32 %v86, %v694
    %v1938 = vmul.f32 %v87, %v700
    %v1939 = vmul.f32 %v88, %v706
    %v1940 = vmul.f32 %v89, %v712
    %v1941 = vmul.f32 %v90, %v719
    %v1942 = vmul.f32 %v91, %v725
    %v1943 = vmul.f32 %v92, %v731
    %v1944 = vmul.f32 %v93, %v737
    %v1945 = vmul.f32 %v94, %v743
    %v1946 = vmul.f32 %v95, %v749
    %v1947 = vmul.f32 %v96, %v755
    %v1948 = vmul.f32 %v97, %v761
    %v1949 = vmul.f32 %v98, %v767
    %v1950 = vmul.f32 %v99, %v773
    %v1951 = vmul.f32 %v100, %v779
    %v1952 = vmul.f32 %v101, %v785
    %v1953 = vmul.f32 %v102, %v791
    %v1954 = vmul.f32 %v103, %v797
    %v1955 = vmul.f32 %v104, %v803
    %v1956 = vmul.f32 %v105, %v809
    %v1957 = vmul.f32 %v106, %v816
    %v1958 = vmul.f32 %v107, %v822
    %v1959 = vmul.f32 %v108, %v828
    %v1960 = vmul.f32 %v109, %v834
    %v1961 = vmul.f32 %v110, %v840
    %v1962 = vmul.f32 %v111, %v846
    %v1963 = vmul.f32 %v112, %v852
    %v1964 = vmul.f32 %v113, %v858
    %v1965 = vmul.f32 %v114, %v864
    %v1966 = vmul.f32 %v115, %v870
    %v1967 = vmul.f32 %v116, %v876
    %v1968 = vmul.f32 %v117, %v882
    %v1969 = vmul.f32 %v118, %v888
    %v1970 = vmul.f32 %v119, %v894
    %v1971 = vmul.f32 %v120, %v900
    %v1972 = vmul.f32 %v121, %v906
    %v1973 = vmul.f32 %v122, %v913
    %v1974 = vmul.f32 %v123, %v919
    %v1975 = vmul.f32 %v124, %v925
    %v1976 = vmul.f32 %v125, %v931
    %v1977 = vmul.f32 %v126, %v937
    %v1978 = vmul.f32 %v127, %v943
    %v1979 = vmul.f32 %v128, %v949
    %v1980 = vmul.f32 %v129, %v955
    %v1981 = vmul.f32 %v130, %v961
    %v1982 = vmul.f32 %v131, %v967
    %v1983 = vmul.f32 %v132, %v973
    %v1984 = vmul.f32 %v133, %v979
    %v1985 = vmul.f32 %v134, %v985
    %v1986 = vmul.f32 %v135, %v991
    %v1987 = vmul.f32 %v136, %v997
    %v1988 = vmul.f32 %v137, %v1003
    %v1989 = vmul.f32 %v138, %v1010
    %v1990 = vmul.f32 %v139, %v1016
    %v1991 = vmul.f32 %v140, %v1022
    %v1992 = vmul.f32 %v141, %v1028
    %v1993 = vmul.f32 %v142, %v1034
    %v1994 = vmul.f32 %v143, %v1040
    %v1995 = vmul.f32 %v144, %v1046
    %v1996 = vmul.f32 %v145, %v1052
    %v1997 = vmul.f32 %v146, %v1058
    %v1998 = vmul.f32 %v147, %v1064
    %v1999 = vmul.f32 %v148, %v1070
    %v2000 = vmul.f32 %v149, %v1076
    %v2001 = vmul.f32 %v150, %v1082
    %v2002 = vmul.f32 %v151, %v1088
    %v2003 = vmul.f32 %v152, %v1094
    %v2004 = vmul.f32 %v153, %v1100
    %v2005 = vmul.f32 %v154, %v1107
    %v2006 = vmul.f32 %v155, %v1113
    %v2007 = vmul.f32 %v156, %v1119
    %v2008 = vmul.f32 %v157, %v1125
    %v2009 = vmul.f32 %v158, %v1131
    %v2010 = vmul.f32 %v159, %v1137
    %v2011 = vmul.f32 %v160, %v1143
    %v2012 = vmul.f32 %v161, %v1149
    %v2013 = vmul.f32 %v162, %v1155
    %v2014 = vmul.f32 %v163, %v1161
    %v2015 = vmul.f32 %v164, %v1167
    %v2016 = vmul.f32 %v165, %v1173
    %v2017 = vmul.f32 %v166, %v1179
    %v2018 = vmul.f32 %v167, %v1185
    %v2019 = vmul.f32 %v168, %v1191
    %v2020 = vmul.f32 %v169, %v1197
    %v2021 = vmul.f32 %v170, %v1204
    %v2022 = vmul.f32 %v171, %v1210
    %v2023 = vmul.f32 %v172, %v1216
    %v2024 = vmul.f32 %v173, %v1222
    %v2025 = vmul.f32 %v174, %v1228
    %v2026 = vmul.f32 %v175, %v1234
    %v2027 = vmul.f32 %v176, %v1240
    %v2028 = vmul.f32 %v177, %v1246
    %v2029 = vmul.f32 %v178, %v1252
    %v2030 = vmul.f32 %v179, %v1258
    %v2031 = vmul.f32 %v180, %v1264
    %v2032 = vmul.f32 %v181, %v1270
    %v2033 = vmul.f32 %v182, %v1276
    %v2034 = vmul.f32 %v183, %v1282
    %v2035 = vmul.f32 %v184, %v1288
    %v2036 = vmul.f32 %v185, %v1294
    %v2037 = vmul.f32 %v186, %v1301
    %v2038 = vmul.f32 %v187, %v1307
    %v2039 = vmul.f32 %v188, %v1313
    %v2040 = vmul.f32 %v189, %v1319
    %v2041 = vmul.f32 %v190, %v1325
    %v2042 = vmul.f32 %v191, %v1331
    %v2043 = vmul.f32 %v192, %v1337
    %v2044 = vmul.f32 %v193, %v1343
    %v2045 = vmul.f32 %v194, %v1349
    %v2046 = vmul.f32 %v195, %v1355
    %v2047 = vmul.f32 %v196, %v1361
    %v2048 = vmul.f32 %v197, %v1367
    %v2049 = vmul.f32 %v198, %v1373
    %v2050 = vmul.f32 %v199, %v1379
    %v2051 = vmul.f32 %v200, %v1385
    %v2052 = vmul.f32 %v201, %v1391
    %v2053 = vmul.f32 %v202, %v1398
    %v2054 = vmul.f32 %v203, %v1404
    %v2055 = vmul.f32 %v204, %v1410
    %v2056 = vmul.f32 %v205, %v1416
    %v2057 = vmul.f32 %v206, %v1422
    %v2058 = vmul.f32 %v207, %v1428
    %v2059 = vmul.f32 %v208, %v1434
    %v2060 = vmul.f32 %v209, %v1440
    %v2061 = vmul.f32 %v210, %v1446
    %v2062 = vmul.f32 %v211, %v1452
    %v2063 = vmul.f32 %v212, %v1458
    %v2064 = vmul.f32 %v213, %v1464
    %v2065 = vmul.f32 %v214, %v1470
    %v2066 = vmul.f32 %v215, %v1476
    %v2067 = vmul.f32 %v216, %v1482
    %v2068 = vmul.f32 %v217, %v1488
    %v2069 = vmul.f32 %v218, %v1495
    %v2070 = vmul.f32 %v219, %v1501
    %v2071 = vmul.f32 %v220, %v1507
    %v2072 = vmul.f32 %v221, %v1513
    %v2073 = vmul.f32 %v222, %v1519
    %v2074 = vmul.f32 %v223, %v1525
    %v2075 = vmul.f32 %v224, %v1531
    %v2076 = vmul.f32 %v225, %v1537
    %v2077 = vmul.f32 %v226, %v1543
    %v2078 = vmul.f32 %v227, %v1549
    %v2079 = vmul.f32 %v228, %v1555
    %v2080 = vmul.f32 %v229, %v1561
    %v2081 = vmul.f32 %v230, %v1567
    %v2082 = vmul.f32 %v231, %v1573
    %v2083 = vmul.f32 %v232, %v1579
    %v2084 = vmul.f32 %v233, %v1585
    %v2085 = vmul.f32 %v234, %v1592
    %v2086 = vmul.f32 %v235, %v1598
    %v2087 = vmul.f32 %v236, %v1604
    %v2088 = vmul.f32 %v237, %v1610
    %v2089 = vmul.f32 %v238, %v1616
    %v2090 = vmul.f32 %v239, %v1622
    %v2091 = vmul.f32 %v240, %v1628
    %v2092 = vmul.f32 %v241, %v1634
    %v2093 = vmul.f32 %v242, %v1640
    %v2094 = vmul.f32 %v243, %v1646
    %v2095 = vmul.f32 %v244, %v1652
    %v2096 = vmul.f32 %v245, %v1658
    %v2097 = vmul.f32 %v246, %v1664
    %v2098 = vmul.f32 %v247, %v1670
    %v2099 = vmul.f32 %v248, %v1676
    %v2100 = vmul.f32 %v249, %v1682
    %v2101 = vmul.f32 %v250, %v1689
    %v2102 = vmul.f32 %v251, %v1695
    %v2103 = vmul.f32 %v252, %v1701
    %v2104 = vmul.f32 %v253, %v1707
    %v2105 = vmul.f32 %v254, %v1713
    %v2106 = vmul.f32 %v255, %v1719
    %v2107 = vmul.f32 %v256, %v1725
    %v2108 = vmul.f32 %v257, %v1731
    %v2109 = vmul.f32 %v258, %v1737
    %v2110 = vmul.f32 %v259, %v1743
    %v2111 = vmul.f32 %v260, %v1749
    %v2112 = vmul.f32 %v261, %v1755
    %v2113 = vmul.f32 %v262, %v1761
    %v2114 = vmul.f32 %v263, %v1767
    %v2115 = vmul.f32 %v264, %v1773
    %v2116 = vmul.f32 %v265, %v1779
    %v2117 = vmul.f32 %v266, %v1786
    %v2118 = vmul.f32 %v267, %v1792
    %v2119 = vmul.f32 %v268, %v1798
    %v2120 = vmul.f32 %v269, %v1804
    %v2121 = vmul.f32 %v270, %v1810
    %v2122 = vmul.f32 %v271, %v1816
    %v2123 = vmul.f32 %v272, %v1822
    %v2124 = vmul.f32 %v273, %v1828
    %v2125 = vmul.f32 %v274, %v1834
    %v2126 = vmul.f32 %v275, %v1840
    %v2127 = vmul.f32 %v276, %v1846
    %v2128 = vmul.f32 %v277, %v1852
    %v2129 = vmul.f32 %v278, %v1858
    %v2130 = vmul.f32 %v279, %v1864
    %v2131 = vmul.f32 %v280, %v1870
    %v2132 = vmul.f32 %v281, %v1876
    %vm2133 = vcmask 130048
    %v2134 = vsel %vm2133, %v1877, 0.0
    %v2135 = vsel %vm2133, %v1878, 0.0
    %v2136 = vadd.f32 %v2134, %v2135
    %v2137 = vsel %vm2133, %v1879, 0.0
    %v2138 = vadd.f32 %v2136, %v2137
    %v2139 = vsel %vm2133, %v1880, 0.0
    %v2140 = vadd.f32 %v2138, %v2139
    %v2141 = vsel %vm2133, %v1881, 0.0
    %v2142 = vadd.f32 %v2140, %v2141
    %v2143 = vsel %vm2133, %v1882, 0.0
    %v2144 = vadd.f32 %v2142, %v2143
    %v2145 = vsel %vm2133, %v1883, 0.0
    %v2146 = vadd.f32 %v2144, %v2145
    %v2147 = vsel %vm2133, %v1884, 0.0
    %v2148 = vadd.f32 %v2146, %v2147
    %v2149 = vsel %vm2133, %v1885, 0.0
    %v2150 = vadd.f32 %v2148, %v2149
    %v2151 = vsel %vm2133, %v1886, 0.0
    %v2152 = vadd.f32 %v2150, %v2151
    %v2153 = vsel %vm2133, %v1887, 0.0
    %v2154 = vadd.f32 %v2152, %v2153
    %v2155 = vsel %vm2133, %v1888, 0.0
    %v2156 = vadd.f32 %v2154, %v2155
    %v2157 = vsel %vm2133, %v1889, 0.0
    %v2158 = vadd.f32 %v2156, %v2157
    %v2159 = vsel %vm2133, %v1890, 0.0
    %v2160 = vadd.f32 %v2158, %v2159
    %v2161 = vsel %vm2133, %v1891, 0.0
    %v2162 = vadd.f32 %v2160, %v2161
    %v2163 = vsel %vm2133, %v1892, 0.0
    %v2164 = vadd.f32 %v2162, %v2163
    %v2165 = vrot.slane %v2164, 4
    %v2166 = vadd.f32 %v2164, %v2165
    %v2167 = vrot.slane %v2166, 2
    %v2168 = vadd.f32 %v2166, %v2167
    %v2169 = vrot.slane %v2168, 1
    %v2170 = vadd.f32 %v2168, %v2169
    %v2171 = vsel %vm2133, %v1893, 0.0
    %v2172 = vsel %vm2133, %v1894, 0.0
    %v2173 = vadd.f32 %v2171, %v2172
    %v2174 = vsel %vm2133, %v1895, 0.0
    %v2175 = vadd.f32 %v2173, %v2174
    %v2176 = vsel %vm2133, %v1896, 0.0
    %v2177 = vadd.f32 %v2175, %v2176
    %v2178 = vsel %vm2133, %v1897, 0.0
    %v2179 = vadd.f32 %v2177, %v2178
    %v2180 = vsel %vm2133, %v1898, 0.0
    %v2181 = vadd.f32 %v2179, %v2180
    %v2182 = vsel %vm2133, %v1899, 0.0
    %v2183 = vadd.f32 %v2181, %v2182
    %v2184 = vsel %vm2133, %v1900, 0.0
    %v2185 = vadd.f32 %v2183, %v2184
    %v2186 = vsel %vm2133, %v1901, 0.0
    %v2187 = vadd.f32 %v2185, %v2186
    %v2188 = vsel %vm2133, %v1902, 0.0
    %v2189 = vadd.f32 %v2187, %v2188
    %v2190 = vsel %vm2133, %v1903, 0.0
    %v2191 = vadd.f32 %v2189, %v2190
    %v2192 = vsel %vm2133, %v1904, 0.0
    %v2193 = vadd.f32 %v2191, %v2192
    %v2194 = vsel %vm2133, %v1905, 0.0
    %v2195 = vadd.f32 %v2193, %v2194
    %v2196 = vsel %vm2133, %v1906, 0.0
    %v2197 = vadd.f32 %v2195, %v2196
    %v2198 = vsel %vm2133, %v1907, 0.0
    %v2199 = vadd.f32 %v2197, %v2198
    %v2200 = vsel %vm2133, %v1908, 0.0
    %v2201 = vadd.f32 %v2199, %v2200
    %v2202 = vrot.slane %v2201, 4
    %v2203 = vadd.f32 %v2201, %v2202
    %v2204 = vrot.slane %v2203, 2
    %v2205 = vadd.f32 %v2203, %v2204
    %v2206 = vrot.slane %v2205, 1
    %v2207 = vadd.f32 %v2205, %v2206
    %v2208 = vsel %vm2133, %v1909, 0.0
    %v2209 = vsel %vm2133, %v1910, 0.0
    %v2210 = vadd.f32 %v2208, %v2209
    %v2211 = vsel %vm2133, %v1911, 0.0
    %v2212 = vadd.f32 %v2210, %v2211
    %v2213 = vsel %vm2133, %v1912, 0.0
    %v2214 = vadd.f32 %v2212, %v2213
    %v2215 = vsel %vm2133, %v1913, 0.0
    %v2216 = vadd.f32 %v2214, %v2215
    %v2217 = vsel %vm2133, %v1914, 0.0
    %v2218 = vadd.f32 %v2216, %v2217
    %v2219 = vsel %vm2133, %v1915, 0.0
    %v2220 = vadd.f32 %v2218, %v2219
    %v2221 = vsel %vm2133, %v1916, 0.0
    %v2222 = vadd.f32 %v2220, %v2221
    %v2223 = vsel %vm2133, %v1917, 0.0
    %v2224 = vadd.f32 %v2222, %v2223
    %v2225 = vsel %vm2133, %v1918, 0.0
    %v2226 = vadd.f32 %v2224, %v2225
    %v2227 = vsel %vm2133, %v1919, 0.0
    %v2228 = vadd.f32 %v2226, %v2227
    %v2229 = vsel %vm2133, %v1920, 0.0
    %v2230 = vadd.f32 %v2228, %v2229
    %v2231 = vsel %vm2133, %v1921, 0.0
    %v2232 = vadd.f32 %v2230, %v2231
    %v2233 = vsel %vm2133, %v1922, 0.0
    %v2234 = vadd.f32 %v2232, %v2233
    %v2235 = vsel %vm2133, %v1923, 0.0
    %v2236 = vadd.f32 %v2234, %v2235
    %v2237 = vsel %vm2133, %v1924, 0.0
    %v2238 = vadd.f32 %v2236, %v2237
    %v2239 = vrot.slane %v2238, 4
    %v2240 = vadd.f32 %v2238, %v2239
    %v2241 = vrot.slane %v2240, 2
    %v2242 = vadd.f32 %v2240, %v2241
    %v2243 = vrot.slane %v2242, 1
    %v2244 = vadd.f32 %v2242, %v2243
    %v2245 = vsel %vm2133, %v1925, 0.0
    %v2246 = vsel %vm2133, %v1926, 0.0
    %v2247 = vadd.f32 %v2245, %v2246
    %v2248 = vsel %vm2133, %v1927, 0.0
    %v2249 = vadd.f32 %v2247, %v2248
    %v2250 = vsel %vm2133, %v1928, 0.0
    %v2251 = vadd.f32 %v2249, %v2250
    %v2252 = vsel %vm2133, %v1929, 0.0
    %v2253 = vadd.f32 %v2251, %v2252
    %v2254 = vsel %vm2133, %v1930, 0.0
    %v2255 = vadd.f32 %v2253, %v2254
    %v2256 = vsel %vm2133, %v1931, 0.0
    %v2257 = vadd.f32 %v2255, %v2256
    %v2258 = vsel %vm2133, %v1932, 0.0
    %v2259 = vadd.f32 %v2257, %v2258
    %v2260 = vsel %vm2133, %v1933, 0.0
    %v2261 = vadd.f32 %v2259, %v2260
    %v2262 = vsel %vm2133, %v1934, 0.0
    %v2263 = vadd.f32 %v2261, %v2262
    %v2264 = vsel %vm2133, %v1935, 0.0
    %v2265 = vadd.f32 %v2263, %v2264
    %v2266 = vsel %vm2133, %v1936, 0.0
    %v2267 = vadd.f32 %v2265, %v2266
    %v2268 = vsel %vm2133, %v1937, 0.0
    %v2269 = vadd.f32 %v2267, %v2268
    %v2270 = vsel %vm2133, %v1938, 0.0
    %v2271 = vadd.f32 %v2269, %v2270
    %v2272 = vsel %vm2133, %v1939, 0.0
    %v2273 = vadd.f32 %v2271, %v2272
    %v2274 = vsel %vm2133, %v1940, 0.0
    %v2275 = vadd.f32 %v2273, %v2274
    %v2276 = vrot.slane %v2275, 4
    %v2277 = vadd.f32 %v2275, %v2276
    %v2278 = vrot.slane %v2277, 2
    %v2279 = vadd.f32 %v2277, %v2278
    %v2280 = vrot.slane %v2279, 1
    %v2281 = vadd.f32 %v2279, %v2280
    %v2282 = vsel %vm2133, %v1941, 0.0
    %v2283 = vsel %vm2133, %v1942, 0.0
    %v2284 = vadd.f32 %v2282, %v2283
    %v2285 = vsel %vm2133, %v1943, 0.0
    %v2286 = vadd.f32 %v2284, %v2285
    %v2287 = vsel %vm2133, %v1944, 0.0
    %v2288 = vadd.f32 %v2286, %v2287
    %v2289 = vsel %vm2133, %v1945, 0.0
    %v2290 = vadd.f32 %v2288, %v2289
    %v2291 = vsel %vm2133, %v1946, 0.0
    %v2292 = vadd.f32 %v2290, %v2291
    %v2293 = vsel %vm2133, %v1947, 0.0
    %v2294 = vadd.f32 %v2292, %v2293
    %v2295 = vsel %vm2133, %v1948, 0.0
    %v2296 = vadd.f32 %v2294, %v2295
    %v2297 = vsel %vm2133, %v1949, 0.0
    %v2298 = vadd.f32 %v2296, %v2297
    %v2299 = vsel %vm2133, %v1950, 0.0
    %v2300 = vadd.f32 %v2298, %v2299
    %v2301 = vsel %vm2133, %v1951, 0.0
    %v2302 = vadd.f32 %v2300, %v2301
    %v2303 = vsel %vm2133, %v1952, 0.0
    %v2304 = vadd.f32 %v2302, %v2303
    %v2305 = vsel %vm2133, %v1953, 0.0
    %v2306 = vadd.f32 %v2304, %v2305
    %v2307 = vsel %vm2133, %v1954, 0.0
    %v2308 = vadd.f32 %v2306, %v2307
    %v2309 = vsel %vm2133, %v1955, 0.0
    %v2310 = vadd.f32 %v2308, %v2309
    %v2311 = vsel %vm2133, %v1956, 0.0
    %v2312 = vadd.f32 %v2310, %v2311
    %v2313 = vrot.slane %v2312, 4
    %v2314 = vadd.f32 %v2312, %v2313
    %v2315 = vrot.slane %v2314, 2
    %v2316 = vadd.f32 %v2314, %v2315
    %v2317 = vrot.slane %v2316, 1
    %v2318 = vadd.f32 %v2316, %v2317
    %v2319 = vsel %vm2133, %v1957, 0.0
    %v2320 = vsel %vm2133, %v1958, 0.0
    %v2321 = vadd.f32 %v2319, %v2320
    %v2322 = vsel %vm2133, %v1959, 0.0
    %v2323 = vadd.f32 %v2321, %v2322
    %v2324 = vsel %vm2133, %v1960, 0.0
    %v2325 = vadd.f32 %v2323, %v2324
    %v2326 = vsel %vm2133, %v1961, 0.0
    %v2327 = vadd.f32 %v2325, %v2326
    %v2328 = vsel %vm2133, %v1962, 0.0
    %v2329 = vadd.f32 %v2327, %v2328
    %v2330 = vsel %vm2133, %v1963, 0.0
    %v2331 = vadd.f32 %v2329, %v2330
    %v2332 = vsel %vm2133, %v1964, 0.0
    %v2333 = vadd.f32 %v2331, %v2332
    %v2334 = vsel %vm2133, %v1965, 0.0
    %v2335 = vadd.f32 %v2333, %v2334
    %v2336 = vsel %vm2133, %v1966, 0.0
    %v2337 = vadd.f32 %v2335, %v2336
    %v2338 = vsel %vm2133, %v1967, 0.0
    %v2339 = vadd.f32 %v2337, %v2338
    %v2340 = vsel %vm2133, %v1968, 0.0
    %v2341 = vadd.f32 %v2339, %v2340
    %v2342 = vsel %vm2133, %v1969, 0.0
    %v2343 = vadd.f32 %v2341, %v2342
    %v2344 = vsel %vm2133, %v1970, 0.0
    %v2345 = vadd.f32 %v2343, %v2344
    %v2346 = vsel %vm2133, %v1971, 0.0
    %v2347 = vadd.f32 %v2345, %v2346
    %v2348 = vsel %vm2133, %v1972, 0.0
    %v2349 = vadd.f32 %v2347, %v2348
    %v2350 = vrot.slane %v2349, 4
    %v2351 = vadd.f32 %v2349, %v2350
    %v2352 = vrot.slane %v2351, 2
    %v2353 = vadd.f32 %v2351, %v2352
    %v2354 = vrot.slane %v2353, 1
    %v2355 = vadd.f32 %v2353, %v2354
    %v2356 = vsel %vm2133, %v1973, 0.0
    %v2357 = vsel %vm2133, %v1974, 0.0
    %v2358 = vadd.f32 %v2356, %v2357
    %v2359 = vsel %vm2133, %v1975, 0.0
    %v2360 = vadd.f32 %v2358, %v2359
    %v2361 = vsel %vm2133, %v1976, 0.0
    %v2362 = vadd.f32 %v2360, %v2361
    %v2363 = vsel %vm2133, %v1977, 0.0
    %v2364 = vadd.f32 %v2362, %v2363
    %v2365 = vsel %vm2133, %v1978, 0.0
    %v2366 = vadd.f32 %v2364, %v2365
    %v2367 = vsel %vm2133, %v1979, 0.0
    %v2368 = vadd.f32 %v2366, %v2367
    %v2369 = vsel %vm2133, %v1980, 0.0
    %v2370 = vadd.f32 %v2368, %v2369
    %v2371 = vsel %vm2133, %v1981, 0.0
    %v2372 = vadd.f32 %v2370, %v2371
    %v2373 = vsel %vm2133, %v1982, 0.0
    %v2374 = vadd.f32 %v2372, %v2373
    %v2375 = vsel %vm2133, %v1983, 0.0
    %v2376 = vadd.f32 %v2374, %v2375
    %v2377 = vsel %vm2133, %v1984, 0.0
    %v2378 = vadd.f32 %v2376, %v2377
    %v2379 = vsel %vm2133, %v1985, 0.0
    %v2380 = vadd.f32 %v2378, %v2379
    %v2381 = vsel %vm2133, %v1986, 0.0
    %v2382 = vadd.f32 %v2380, %v2381
    %v2383 = vsel %vm2133, %v1987, 0.0
    %v2384 = vadd.f32 %v2382, %v2383
    %v2385 = vsel %vm2133, %v1988, 0.0
    %v2386 = vadd.f32 %v2384, %v2385
    %v2387 = vrot.slane %v2386, 4
    %v2388 = vadd.f32 %v2386, %v2387
    %v2389 = vrot.slane %v2388, 2
    %v2390 = vadd.f32 %v2388, %v2389
    %v2391 = vrot.slane %v2390, 1
    %v2392 = vadd.f32 %v2390, %v2391
    %v2393 = vsel %vm2133, %v1989, 0.0
    %v2394 = vsel %vm2133, %v1990, 0.0
    %v2395 = vadd.f32 %v2393, %v2394
    %v2396 = vsel %vm2133, %v1991, 0.0
    %v2397 = vadd.f32 %v2395, %v2396
    %v2398 = vsel %vm2133, %v1992, 0.0
    %v2399 = vadd.f32 %v2397, %v2398
    %v2400 = vsel %vm2133, %v1993, 0.0
    %v2401 = vadd.f32 %v2399, %v2400
    %v2402 = vsel %vm2133, %v1994, 0.0
    %v2403 = vadd.f32 %v2401, %v2402
    %v2404 = vsel %vm2133, %v1995, 0.0
    %v2405 = vadd.f32 %v2403, %v2404
    %v2406 = vsel %vm2133, %v1996, 0.0
    %v2407 = vadd.f32 %v2405, %v2406
    %v2408 = vsel %vm2133, %v1997, 0.0
    %v2409 = vadd.f32 %v2407, %v2408
    %v2410 = vsel %vm2133, %v1998, 0.0
    %v2411 = vadd.f32 %v2409, %v2410
    %v2412 = vsel %vm2133, %v1999, 0.0
    %v2413 = vadd.f32 %v2411, %v2412
    %v2414 = vsel %vm2133, %v2000, 0.0
    %v2415 = vadd.f32 %v2413, %v2414
    %v2416 = vsel %vm2133, %v2001, 0.0
    %v2417 = vadd.f32 %v2415, %v2416
    %v2418 = vsel %vm2133, %v2002, 0.0
    %v2419 = vadd.f32 %v2417, %v2418
    %v2420 = vsel %vm2133, %v2003, 0.0
    %v2421 = vadd.f32 %v2419, %v2420
    %v2422 = vsel %vm2133, %v2004, 0.0
    %v2423 = vadd.f32 %v2421, %v2422
    %v2424 = vrot.slane %v2423, 4
    %v2425 = vadd.f32 %v2423, %v2424
    %v2426 = vrot.slane %v2425, 2
    %v2427 = vadd.f32 %v2425, %v2426
    %v2428 = vrot.slane %v2427, 1
    %v2429 = vadd.f32 %v2427, %v2428
    %v2430 = vsel %vm2133, %v2005, 0.0
    %v2431 = vsel %vm2133, %v2006, 0.0
    %v2432 = vadd.f32 %v2430, %v2431
    %v2433 = vsel %vm2133, %v2007, 0.0
    %v2434 = vadd.f32 %v2432, %v2433
    %v2435 = vsel %vm2133, %v2008, 0.0
    %v2436 = vadd.f32 %v2434, %v2435
    %v2437 = vsel %vm2133, %v2009, 0.0
    %v2438 = vadd.f32 %v2436, %v2437
    %v2439 = vsel %vm2133, %v2010, 0.0
    %v2440 = vadd.f32 %v2438, %v2439
    %v2441 = vsel %vm2133, %v2011, 0.0
    %v2442 = vadd.f32 %v2440, %v2441
    %v2443 = vsel %vm2133, %v2012, 0.0
    %v2444 = vadd.f32 %v2442, %v2443
    %v2445 = vsel %vm2133, %v2013, 0.0
    %v2446 = vadd.f32 %v2444, %v2445
    %v2447 = vsel %vm2133, %v2014, 0.0
    %v2448 = vadd.f32 %v2446, %v2447
    %v2449 = vsel %vm2133, %v2015, 0.0
    %v2450 = vadd.f32 %v2448, %v2449
    %v2451 = vsel %vm2133, %v2016, 0.0
    %v2452 = vadd.f32 %v2450, %v2451
    %v2453 = vsel %vm2133, %v2017, 0.0
    %v2454 = vadd.f32 %v2452, %v2453
    %v2455 = vsel %vm2133, %v2018, 0.0
    %v2456 = vadd.f32 %v2454, %v2455
    %v2457 = vsel %vm2133, %v2019, 0.0
    %v2458 = vadd.f32 %v2456, %v2457
    %v2459 = vsel %vm2133, %v2020, 0.0
    %v2460 = vadd.f32 %v2458, %v2459
    %v2461 = vrot.slane %v2460, 4
    %v2462 = vadd.f32 %v2460, %v2461
    %v2463 = vrot.slane %v2462, 2
    %v2464 = vadd.f32 %v2462, %v2463
    %v2465 = vrot.slane %v2464, 1
    %v2466 = vadd.f32 %v2464, %v2465
    %v2467 = vsel %vm2133, %v2021, 0.0
    %v2468 = vsel %vm2133, %v2022, 0.0
    %v2469 = vadd.f32 %v2467, %v2468
    %v2470 = vsel %vm2133, %v2023, 0.0
    %v2471 = vadd.f32 %v2469, %v2470
    %v2472 = vsel %vm2133, %v2024, 0.0
    %v2473 = vadd.f32 %v2471, %v2472
    %v2474 = vsel %vm2133, %v2025, 0.0
    %v2475 = vadd.f32 %v2473, %v2474
    %v2476 = vsel %vm2133, %v2026, 0.0
    %v2477 = vadd.f32 %v2475, %v2476
    %v2478 = vsel %vm2133, %v2027, 0.0
    %v2479 = vadd.f32 %v2477, %v2478
    %v2480 = vsel %vm2133, %v2028, 0.0
    %v2481 = vadd.f32 %v2479, %v2480
    %v2482 = vsel %vm2133, %v2029, 0.0
    %v2483 = vadd.f32 %v2481, %v2482
    %v2484 = vsel %vm2133, %v2030, 0.0
    %v2485 = vadd.f32 %v2483, %v2484
    %v2486 = vsel %vm2133, %v2031, 0.0
    %v2487 = vadd.f32 %v2485, %v2486
    %v2488 = vsel %vm2133, %v2032, 0.0
    %v2489 = vadd.f32 %v2487, %v2488
    %v2490 = vsel %vm2133, %v2033, 0.0
    %v2491 = vadd.f32 %v2489, %v2490
    %v2492 = vsel %vm2133, %v2034, 0.0
    %v2493 = vadd.f32 %v2491, %v2492
    %v2494 = vsel %vm2133, %v2035, 0.0
    %v2495 = vadd.f32 %v2493, %v2494
    %v2496 = vsel %vm2133, %v2036, 0.0
    %v2497 = vadd.f32 %v2495, %v2496
    %v2498 = vrot.slane %v2497, 4
    %v2499 = vadd.f32 %v2497, %v2498
    %v2500 = vrot.slane %v2499, 2
    %v2501 = vadd.f32 %v2499, %v2500
    %v2502 = vrot.slane %v2501, 1
    %v2503 = vadd.f32 %v2501, %v2502
    %v2504 = vsel %vm2133, %v2037, 0.0
    %v2505 = vsel %vm2133, %v2038, 0.0
    %v2506 = vadd.f32 %v2504, %v2505
    %v2507 = vsel %vm2133, %v2039, 0.0
    %v2508 = vadd.f32 %v2506, %v2507
    %v2509 = vsel %vm2133, %v2040, 0.0
    %v2510 = vadd.f32 %v2508, %v2509
    %v2511 = vsel %vm2133, %v2041, 0.0
    %v2512 = vadd.f32 %v2510, %v2511
    %v2513 = vsel %vm2133, %v2042, 0.0
    %v2514 = vadd.f32 %v2512, %v2513
    %v2515 = vsel %vm2133, %v2043, 0.0
    %v2516 = vadd.f32 %v2514, %v2515
    %v2517 = vsel %vm2133, %v2044, 0.0
    %v2518 = vadd.f32 %v2516, %v2517
    %v2519 = vsel %vm2133, %v2045, 0.0
    %v2520 = vadd.f32 %v2518, %v2519
    %v2521 = vsel %vm2133, %v2046, 0.0
    %v2522 = vadd.f32 %v2520, %v2521
    %v2523 = vsel %vm2133, %v2047, 0.0
    %v2524 = vadd.f32 %v2522, %v2523
    %v2525 = vsel %vm2133, %v2048, 0.0
    %v2526 = vadd.f32 %v2524, %v2525
    %v2527 = vsel %vm2133, %v2049, 0.0
    %v2528 = vadd.f32 %v2526, %v2527
    %v2529 = vsel %vm2133, %v2050, 0.0
    %v2530 = vadd.f32 %v2528, %v2529
    %v2531 = vsel %vm2133, %v2051, 0.0
    %v2532 = vadd.f32 %v2530, %v2531
    %v2533 = vsel %vm2133, %v2052, 0.0
    %v2534 = vadd.f32 %v2532, %v2533
    %v2535 = vrot.slane %v2534, 4
    %v2536 = vadd.f32 %v2534, %v2535
    %v2537 = vrot.slane %v2536, 2
    %v2538 = vadd.f32 %v2536, %v2537
    %v2539 = vrot.slane %v2538, 1
    %v2540 = vadd.f32 %v2538, %v2539
    %v2541 = vsel %vm2133, %v2053, 0.0
    %v2542 = vsel %vm2133, %v2054, 0.0
    %v2543 = vadd.f32 %v2541, %v2542
    %v2544 = vsel %vm2133, %v2055, 0.0
    %v2545 = vadd.f32 %v2543, %v2544
    %v2546 = vsel %vm2133, %v2056, 0.0
    %v2547 = vadd.f32 %v2545, %v2546
    %v2548 = vsel %vm2133, %v2057, 0.0
    %v2549 = vadd.f32 %v2547, %v2548
    %v2550 = vsel %vm2133, %v2058, 0.0
    %v2551 = vadd.f32 %v2549, %v2550
    %v2552 = vsel %vm2133, %v2059, 0.0
    %v2553 = vadd.f32 %v2551, %v2552
    %v2554 = vsel %vm2133, %v2060, 0.0
    %v2555 = vadd.f32 %v2553, %v2554
    %v2556 = vsel %vm2133, %v2061, 0.0
    %v2557 = vadd.f32 %v2555, %v2556
    %v2558 = vsel %vm2133, %v2062, 0.0
    %v2559 = vadd.f32 %v2557, %v2558
    %v2560 = vsel %vm2133, %v2063, 0.0
    %v2561 = vadd.f32 %v2559, %v2560
    %v2562 = vsel %vm2133, %v2064, 0.0
    %v2563 = vadd.f32 %v2561, %v2562
    %v2564 = vsel %vm2133, %v2065, 0.0
    %v2565 = vadd.f32 %v2563, %v2564
    %v2566 = vsel %vm2133, %v2066, 0.0
    %v2567 = vadd.f32 %v2565, %v2566
    %v2568 = vsel %vm2133, %v2067, 0.0
    %v2569 = vadd.f32 %v2567, %v2568
    %v2570 = vsel %vm2133, %v2068, 0.0
    %v2571 = vadd.f32 %v2569, %v2570
    %v2572 = vrot.slane %v2571, 4
    %v2573 = vadd.f32 %v2571, %v2572
    %v2574 = vrot.slane %v2573, 2
    %v2575 = vadd.f32 %v2573, %v2574
    %v2576 = vrot.slane %v2575, 1
    %v2577 = vadd.f32 %v2575, %v2576
    %v2578 = vsel %vm2133, %v2069, 0.0
    %v2579 = vsel %vm2133, %v2070, 0.0
    %v2580 = vadd.f32 %v2578, %v2579
    %v2581 = vsel %vm2133, %v2071, 0.0
    %v2582 = vadd.f32 %v2580, %v2581
    %v2583 = vsel %vm2133, %v2072, 0.0
    %v2584 = vadd.f32 %v2582, %v2583
    %v2585 = vsel %vm2133, %v2073, 0.0
    %v2586 = vadd.f32 %v2584, %v2585
    %v2587 = vsel %vm2133, %v2074, 0.0
    %v2588 = vadd.f32 %v2586, %v2587
    %v2589 = vsel %vm2133, %v2075, 0.0
    %v2590 = vadd.f32 %v2588, %v2589
    %v2591 = vsel %vm2133, %v2076, 0.0
    %v2592 = vadd.f32 %v2590, %v2591
    %v2593 = vsel %vm2133, %v2077, 0.0
    %v2594 = vadd.f32 %v2592, %v2593
    %v2595 = vsel %vm2133, %v2078, 0.0
    %v2596 = vadd.f32 %v2594, %v2595
    %v2597 = vsel %vm2133, %v2079, 0.0
    %v2598 = vadd.f32 %v2596, %v2597
    %v2599 = vsel %vm2133, %v2080, 0.0
    %v2600 = vadd.f32 %v2598, %v2599
    %v2601 = vsel %vm2133, %v2081, 0.0
    %v2602 = vadd.f32 %v2600, %v2601
    %v2603 = vsel %vm2133, %v2082, 0.0
    %v2604 = vadd.f32 %v2602, %v2603
    %v2605 = vsel %vm2133, %v2083, 0.0
    %v2606 = vadd.f32 %v2604, %v2605
    %v2607 = vsel %vm2133, %v2084, 0.0
    %v2608 = vadd.f32 %v2606, %v2607
    %v2609 = vrot.slane %v2608, 4
    %v2610 = vadd.f32 %v2608, %v2609
    %v2611 = vrot.slane %v2610, 2
    %v2612 = vadd.f32 %v2610, %v2611
    %v2613 = vrot.slane %v2612, 1
    %v2614 = vadd.f32 %v2612, %v2613
    %v2615 = vsel %vm2133, %v2085, 0.0
    %v2616 = vsel %vm2133, %v2086, 0.0
    %v2617 = vadd.f32 %v2615, %v2616
    %v2618 = vsel %vm2133, %v2087, 0.0
    %v2619 = vadd.f32 %v2617, %v2618
    %v2620 = vsel %vm2133, %v2088, 0.0
    %v2621 = vadd.f32 %v2619, %v2620
    %v2622 = vsel %vm2133, %v2089, 0.0
    %v2623 = vadd.f32 %v2621, %v2622
    %v2624 = vsel %vm2133, %v2090, 0.0
    %v2625 = vadd.f32 %v2623, %v2624
    %v2626 = vsel %vm2133, %v2091, 0.0
    %v2627 = vadd.f32 %v2625, %v2626
    %v2628 = vsel %vm2133, %v2092, 0.0
    %v2629 = vadd.f32 %v2627, %v2628
    %v2630 = vsel %vm2133, %v2093, 0.0
    %v2631 = vadd.f32 %v2629, %v2630
    %v2632 = vsel %vm2133, %v2094, 0.0
    %v2633 = vadd.f32 %v2631, %v2632
    %v2634 = vsel %vm2133, %v2095, 0.0
    %v2635 = vadd.f32 %v2633, %v2634
    %v2636 = vsel %vm2133, %v2096, 0.0
    %v2637 = vadd.f32 %v2635, %v2636
    %v2638 = vsel %vm2133, %v2097, 0.0
    %v2639 = vadd.f32 %v2637, %v2638
    %v2640 = vsel %vm2133, %v2098, 0.0
    %v2641 = vadd.f32 %v2639, %v2640
    %v2642 = vsel %vm2133, %v2099, 0.0
    %v2643 = vadd.f32 %v2641, %v2642
    %v2644 = vsel %vm2133, %v2100, 0.0
    %v2645 = vadd.f32 %v2643, %v2644
    %v2646 = vrot.slane %v2645, 4
    %v2647 = vadd.f32 %v2645, %v2646
    %v2648 = vrot.slane %v2647, 2
    %v2649 = vadd.f32 %v2647, %v2648
    %v2650 = vrot.slane %v2649, 1
    %v2651 = vadd.f32 %v2649, %v2650
    %v2652 = vsel %vm2133, %v2101, 0.0
    %v2653 = vsel %vm2133, %v2102, 0.0
    %v2654 = vadd.f32 %v2652, %v2653
    %v2655 = vsel %vm2133, %v2103, 0.0
    %v2656 = vadd.f32 %v2654, %v2655
    %v2657 = vsel %vm2133, %v2104, 0.0
    %v2658 = vadd.f32 %v2656, %v2657
    %v2659 = vsel %vm2133, %v2105, 0.0
    %v2660 = vadd.f32 %v2658, %v2659
    %v2661 = vsel %vm2133, %v2106, 0.0
    %v2662 = vadd.f32 %v2660, %v2661
    %v2663 = vsel %vm2133, %v2107, 0.0
    %v2664 = vadd.f32 %v2662, %v2663
    %v2665 = vsel %vm2133, %v2108, 0.0
    %v2666 = vadd.f32 %v2664, %v2665
    %v2667 = vsel %vm2133, %v2109, 0.0
    %v2668 = vadd.f32 %v2666, %v2667
    %v2669 = vsel %vm2133, %v2110, 0.0
    %v2670 = vadd.f32 %v2668, %v2669
    %v2671 = vsel %vm2133, %v2111, 0.0
    %v2672 = vadd.f32 %v2670, %v2671
    %v2673 = vsel %vm2133, %v2112, 0.0
    %v2674 = vadd.f32 %v2672, %v2673
    %v2675 = vsel %vm2133, %v2113, 0.0
    %v2676 = vadd.f32 %v2674, %v2675
    %v2677 = vsel %vm2133, %v2114, 0.0
    %v2678 = vadd.f32 %v2676, %v2677
    %v2679 = vsel %vm2133, %v2115, 0.0
    %v2680 = vadd.f32 %v2678, %v2679
    %v2681 = vsel %vm2133, %v2116, 0.0
    %v2682 = vadd.f32 %v2680, %v2681
    %v2683 = vrot.slane %v2682, 4
    %v2684 = vadd.f32 %v2682, %v2683
    %v2685 = vrot.slane %v2684, 2
    %v2686 = vadd.f32 %v2684, %v2685
    %v2687 = vrot.slane %v2686, 1
    %v2688 = vadd.f32 %v2686, %v2687
    %v2689 = vsel %vm2133, %v2117, 0.0
    %v2690 = vsel %vm2133, %v2118, 0.0
    %v2691 = vadd.f32 %v2689, %v2690
    %v2692 = vsel %vm2133, %v2119, 0.0
    %v2693 = vadd.f32 %v2691, %v2692
    %v2694 = vsel %vm2133, %v2120, 0.0
    %v2695 = vadd.f32 %v2693, %v2694
    %v2696 = vsel %vm2133, %v2121, 0.0
    %v2697 = vadd.f32 %v2695, %v2696
    %v2698 = vsel %vm2133, %v2122, 0.0
    %v2699 = vadd.f32 %v2697, %v2698
    %v2700 = vsel %vm2133, %v2123, 0.0
    %v2701 = vadd.f32 %v2699, %v2700
    %v2702 = vsel %vm2133, %v2124, 0.0
    %v2703 = vadd.f32 %v2701, %v2702
    %v2704 = vsel %vm2133, %v2125, 0.0
    %v2705 = vadd.f32 %v2703, %v2704
    %v2706 = vsel %vm2133, %v2126, 0.0
    %v2707 = vadd.f32 %v2705, %v2706
    %v2708 = vsel %vm2133, %v2127, 0.0
    %v2709 = vadd.f32 %v2707, %v2708
    %v2710 = vsel %vm2133, %v2128, 0.0
    %v2711 = vadd.f32 %v2709, %v2710
    %v2712 = vsel %vm2133, %v2129, 0.0
    %v2713 = vadd.f32 %v2711, %v2712
    %v2714 = vsel %vm2133, %v2130, 0.0
    %v2715 = vadd.f32 %v2713, %v2714
    %v2716 = vsel %vm2133, %v2131, 0.0
    %v2717 = vadd.f32 %v2715, %v2716
    %v2718 = vsel %vm2133, %v2132, 0.0
    %v2719 = vadd.f32 %v2717, %v2718
    %v2720 = vrot.slane %v2719, 4
    %v2721 = vadd.f32 %v2719, %v2720
    %v2722 = vrot.slane %v2721, 2
    %v2723 = vadd.f32 %v2721, %v2722
    %v2724 = vrot.slane %v2723, 1
    %v2725 = vadd.f32 %v2723, %v2724
    %v2726 = vmul.f32 %v26, %v2170
    %v2727 = vmul.f32 %v27, %v2170
    %v2728 = vmul.f32 %v28, %v2170
    %v2729 = vmul.f32 %v29, %v2170
    %v2730 = vmul.f32 %v30, %v2170
    %v2731 = vmul.f32 %v31, %v2170
    %v2732 = vmul.f32 %v32, %v2170
    %v2733 = vmul.f32 %v33, %v2170
    %v2734 = vmul.f32 %v34, %v2170
    %v2735 = vmul.f32 %v35, %v2170
    %v2736 = vmul.f32 %v36, %v2170
    %v2737 = vmul.f32 %v37, %v2170
    %v2738 = vmul.f32 %v38, %v2170
    %v2739 = vmul.f32 %v39, %v2170
    %v2740 = vmul.f32 %v40, %v2170
    %v2741 = vmul.f32 %v41, %v2170
    %v2742 = vmul.f32 %v42, %v2207
    %v2743 = vmul.f32 %v43, %v2207
    %v2744 = vmul.f32 %v44, %v2207
    %v2745 = vmul.f32 %v45, %v2207
    %v2746 = vmul.f32 %v46, %v2207
    %v2747 = vmul.f32 %v47, %v2207
    %v2748 = vmul.f32 %v48, %v2207
    %v2749 = vmul.f32 %v49, %v2207
    %v2750 = vmul.f32 %v50, %v2207
    %v2751 = vmul.f32 %v51, %v2207
    %v2752 = vmul.f32 %v52, %v2207
    %v2753 = vmul.f32 %v53, %v2207
    %v2754 = vmul.f32 %v54, %v2207
    %v2755 = vmul.f32 %v55, %v2207
    %v2756 = vmul.f32 %v56, %v2207
    %v2757 = vmul.f32 %v57, %v2207
    %v2758 = vmul.f32 %v58, %v2244
    %v2759 = vmul.f32 %v59, %v2244
    %v2760 = vmul.f32 %v60, %v2244
    %v2761 = vmul.f32 %v61, %v2244
    %v2762 = vmul.f32 %v62, %v2244
    %v2763 = vmul.f32 %v63, %v2244
    %v2764 = vmul.f32 %v64, %v2244
    %v2765 = vmul.f32 %v65, %v2244
    %v2766 = vmul.f32 %v66, %v2244
    %v2767 = vmul.f32 %v67, %v2244
    %v2768 = vmul.f32 %v68, %v2244
    %v2769 = vmul.f32 %v69, %v2244
    %v2770 = vmul.f32 %v70, %v2244
    %v2771 = vmul.f32 %v71, %v2244
    %v2772 = vmul.f32 %v72, %v2244
    %v2773 = vmul.f32 %v73, %v2244
    %v2774 = vmul.f32 %v74, %v2281
    %v2775 = vmul.f32 %v75, %v2281
    %v2776 = vmul.f32 %v76, %v2281
    %v2777 = vmul.f32 %v77, %v2281
    %v2778 = vmul.f32 %v78, %v2281
    %v2779 = vmul.f32 %v79, %v2281
    %v2780 = vmul.f32 %v80, %v2281
    %v2781 = vmul.f32 %v81, %v2281
    %v2782 = vmul.f32 %v82, %v2281
    %v2783 = vmul.f32 %v83, %v2281
    %v2784 = vmul.f32 %v84, %v2281
    %v2785 = vmul.f32 %v85, %v2281
    %v2786 = vmul.f32 %v86, %v2281
    %v2787 = vmul.f32 %v87, %v2281
    %v2788 = vmul.f32 %v88, %v2281
    %v2789 = vmul.f32 %v89, %v2281
    %v2790 = vmul.f32 %v90, %v2318
    %v2791 = vmul.f32 %v91, %v2318
    %v2792 = vmul.f32 %v92, %v2318
    %v2793 = vmul.f32 %v93, %v2318
    %v2794 = vmul.f32 %v94, %v2318
    %v2795 = vmul.f32 %v95, %v2318
    %v2796 = vmul.f32 %v96, %v2318
    %v2797 = vmul.f32 %v97, %v2318
    %v2798 = vmul.f32 %v98, %v2318
    %v2799 = vmul.f32 %v99, %v2318
    %v2800 = vmul.f32 %v100, %v2318
    %v2801 = vmul.f32 %v101, %v2318
    %v2802 = vmul.f32 %v102, %v2318
    %v2803 = vmul.f32 %v103, %v2318
    %v2804 = vmul.f32 %v104, %v2318
    %v2805 = vmul.f32 %v105, %v2318
    %v2806 = vmul.f32 %v106, %v2355
    %v2807 = vmul.f32 %v107, %v2355
    %v2808 = vmul.f32 %v108, %v2355
    %v2809 = vmul.f32 %v109, %v2355
    %v2810 = vmul.f32 %v110, %v2355
    %v2811 = vmul.f32 %v111, %v2355
    %v2812 = vmul.f32 %v112, %v2355
    %v2813 = vmul.f32 %v113, %v2355
    %v2814 = vmul.f32 %v114, %v2355
    %v2815 = vmul.f32 %v115, %v2355
    %v2816 = vmul.f32 %v116, %v2355
    %v2817 = vmul.f32 %v117, %v2355
    %v2818 = vmul.f32 %v118, %v2355
    %v2819 = vmul.f32 %v119, %v2355
    %v2820 = vmul.f32 %v120, %v2355
    %v2821 = vmul.f32 %v121, %v2355
    %v2822 = vmul.f32 %v122, %v2392
    %v2823 = vmul.f32 %v123, %v2392
    %v2824 = vmul.f32 %v124, %v2392
    %v2825 = vmul.f32 %v125, %v2392
    %v2826 = vmul.f32 %v126, %v2392
    %v2827 = vmul.f32 %v127, %v2392
    %v2828 = vmul.f32 %v128, %v2392
    %v2829 = vmul.f32 %v129, %v2392
    %v2830 = vmul.f32 %v130, %v2392
    %v2831 = vmul.f32 %v131, %v2392
    %v2832 = vmul.f32 %v132, %v2392
    %v2833 = vmul.f32 %v133, %v2392
    %v2834 = vmul.f32 %v134, %v2392
    %v2835 = vmul.f32 %v135, %v2392
    %v2836 = vmul.f32 %v136, %v2392
    %v2837 = vmul.f32 %v137, %v2392
    %v2838 = vmul.f32 %v138, %v2429
    %v2839 = vmul.f32 %v139, %v2429
    %v2840 = vmul.f32 %v140, %v2429
    %v2841 = vmul.f32 %v141, %v2429
    %v2842 = vmul.f32 %v142, %v2429
    %v2843 = vmul.f32 %v143, %v2429
    %v2844 = vmul.f32 %v144, %v2429
    %v2845 = vmul.f32 %v145, %v2429
    %v2846 = vmul.f32 %v146, %v2429
    %v2847 = vmul.f32 %v147, %v2429
    %v2848 = vmul.f32 %v148, %v2429
    %v2849 = vmul.f32 %v149, %v2429
    %v2850 = vmul.f32 %v150, %v2429
    %v2851 = vmul.f32 %v151, %v2429
    %v2852 = vmul.f32 %v152, %v2429
    %v2853 = vmul.f32 %v153, %v2429
    %v2854 = vmul.f32 %v154, %v2466
    %v2855 = vmul.f32 %v155, %v2466
    %v2856 = vmul.f32 %v156, %v2466
    %v2857 = vmul.f32 %v157, %v2466
    %v2858 = vmul.f32 %v158, %v2466
    %v2859 = vmul.f32 %v159, %v2466
    %v2860 = vmul.f32 %v160, %v2466
    %v2861 = vmul.f32 %v161, %v2466
    %v2862 = vmul.f32 %v162, %v2466
    %v2863 = vmul.f32 %v163, %v2466
    %v2864 = vmul.f32 %v164, %v2466
    %v2865 = vmul.f32 %v165, %v2466
    %v2866 = vmul.f32 %v166, %v2466
    %v2867 = vmul.f32 %v167, %v2466
    %v2868 = vmul.f32 %v168, %v2466
    %v2869 = vmul.f32 %v169, %v2466
    %v2870 = vmul.f32 %v170, %v2503
    %v2871 = vmul.f32 %v171, %v2503
    %v2872 = vmul.f32 %v172, %v2503
    %v2873 = vmul.f32 %v173, %v2503
    %v2874 = vmul.f32 %v174, %v2503
    %v2875 = vmul.f32 %v175, %v2503
    %v2876 = vmul.f32 %v176, %v2503
    %v2877 = vmul.f32 %v177, %v2503
    %v2878 = vmul.f32 %v178, %v2503
    %v2879 = vmul.f32 %v179, %v2503
    %v2880 = vmul.f32 %v180, %v2503
    %v2881 = vmul.f32 %v181, %v2503
    %v2882 = vmul.f32 %v182, %v2503
    %v2883 = vmul.f32 %v183, %v2503
    %v2884 = vmul.f32 %v184, %v2503
    %v2885 = vmul.f32 %v185, %v2503
    %v2886 = vmul.f32 %v186, %v2540
    %v2887 = vmul.f32 %v187, %v2540
    %v2888 = vmul.f32 %v188, %v2540
    %v2889 = vmul.f32 %v189, %v2540
    %v2890 = vmul.f32 %v190, %v2540
    %v2891 = vmul.f32 %v191, %v2540
    %v2892 = vmul.f32 %v192, %v2540
    %v2893 = vmul.f32 %v193, %v2540
    %v2894 = vmul.f32 %v194, %v2540
    %v2895 = vmul.f32 %v195, %v2540
    %v2896 = vmul.f32 %v196, %v2540
    %v2897 = vmul.f32 %v197, %v2540
    %v2898 = vmul.f32 %v198, %v2540
    %v2899 = vmul.f32 %v199, %v2540
    %v2900 = vmul.f32 %v200, %v2540
    %v2901 = vmul.f32 %v201, %v2540
    %v2902 = vmul.f32 %v202, %v2577
    %v2903 = vmul.f32 %v203, %v2577
    %v2904 = vmul.f32 %v204, %v2577
    %v2905 = vmul.f32 %v205, %v2577
    %v2906 = vmul.f32 %v206, %v2577
    %v2907 = vmul.f32 %v207, %v2577
    %v2908 = vmul.f32 %v208, %v2577
    %v2909 = vmul.f32 %v209, %v2577
    %v2910 = vmul.f32 %v210, %v2577
    %v2911 = vmul.f32 %v211, %v2577
    %v2912 = vmul.f32 %v212, %v2577
    %v2913 = vmul.f32 %v213, %v2577
    %v2914 = vmul.f32 %v214, %v2577
    %v2915 = vmul.f32 %v215, %v2577
    %v2916 = vmul.f32 %v216, %v2577
    %v2917 = vmul.f32 %v217, %v2577
    %v2918 = vmul.f32 %v218, %v2614
    %v2919 = vmul.f32 %v219, %v2614
    %v2920 = vmul.f32 %v220, %v2614
    %v2921 = vmul.f32 %v221, %v2614
    %v2922 = vmul.f32 %v222, %v2614
    %v2923 = vmul.f32 %v223, %v2614
    %v2924 = vmul.f32 %v224, %v2614
    %v2925 = vmul.f32 %v225, %v2614
    %v2926 = vmul.f32 %v226, %v2614
    %v2927 = vmul.f32 %v227, %v2614
    %v2928 = vmul.f32 %v228, %v2614
    %v2929 = vmul.f32 %v229, %v2614
    %v2930 = vmul.f32 %v230, %v2614
    %v2931 = vmul.f32 %v231, %v2614
    %v2932 = vmul.f32 %v232, %v2614
    %v2933 = vmul.f32 %v233, %v2614
    %v2934 = vmul.f32 %v234, %v2651
    %v2935 = vmul.f32 %v235, %v2651
    %v2936 = vmul.f32 %v236, %v2651
    %v2937 = vmul.f32 %v237, %v2651
    %v2938 = vmul.f32 %v238, %v2651
    %v2939 = vmul.f32 %v239, %v2651
    %v2940 = vmul.f32 %v240, %v2651
    %v2941 = vmul.f32 %v241, %v2651
    %v2942 = vmul.f32 %v242, %v2651
    %v2943 = vmul.f32 %v243, %v2651
    %v2944 = vmul.f32 %v244, %v2651
    %v2945 = vmul.f32 %v245, %v2651
    %v2946 = vmul.f32 %v246, %v2651
    %v2947 = vmul.f32 %v247, %v2651
    %v2948 = vmul.f32 %v248, %v2651
    %v2949 = vmul.f32 %v249, %v2651
    %v2950 = vmul.f32 %v250, %v2688
    %v2951 = vmul.f32 %v251, %v2688
    %v2952 = vmul.f32 %v252, %v2688
    %v2953 = vmul.f32 %v253, %v2688
    %v2954 = vmul.f32 %v254, %v2688
    %v2955 = vmul.f32 %v255, %v2688
    %v2956 = vmul.f32 %v256, %v2688
    %v2957 = vmul.f32 %v257, %v2688
    %v2958 = vmul.f32 %v258, %v2688
    %v2959 = vmul.f32 %v259, %v2688
    %v2960 = vmul.f32 %v260, %v2688
    %v2961 = vmul.f32 %v261, %v2688
    %v2962 = vmul.f32 %v262, %v2688
    %v2963 = vmul.f32 %v263, %v2688
    %v2964 = vmul.f32 %v264, %v2688
    %v2965 = vmul.f32 %v265, %v2688
    %v2966 = vmul.f32 %v266, %v2725
    %v2967 = vmul.f32 %v267, %v2725
    %v2968 = vmul.f32 %v268, %v2725
    %v2969 = vmul.f32 %v269, %v2725
    %v2970 = vmul.f32 %v270, %v2725
    %v2971 = vmul.f32 %v271, %v2725
    %v2972 = vmul.f32 %v272, %v2725
    %v2973 = vmul.f32 %v273, %v2725
    %v2974 = vmul.f32 %v274, %v2725
    %v2975 = vmul.f32 %v275, %v2725
    %v2976 = vmul.f32 %v276, %v2725
    %v2977 = vmul.f32 %v277, %v2725
    %v2978 = vmul.f32 %v278, %v2725
    %v2979 = vmul.f32 %v279, %v2725
    %v2980 = vmul.f32 %v280, %v2725
    %v2981 = vmul.f32 %v281, %v2725
    %v2982 = vsel %vm2133, %v2726, 0.0
    %2983 = vadd.xlane.f32.xlu0 %v2982
    %v2984 = vpop.xlane.xlu0 %2983
    %v2985 = vsel %vm2133, %v2727, 0.0
    %2986 = vadd.xlane.f32.xlu0 %v2985
    %v2987 = vpop.xlane.xlu0 %2986
    %v2988 = vsel %vm2133, %v2728, 0.0
    %2989 = vadd.xlane.f32.xlu0 %v2988
    %v2990 = vpop.xlane.xlu0 %2989
    %v2991 = vsel %vm2133, %v2729, 0.0
    %2992 = vadd.xlane.f32.xlu0 %v2991
    %v2993 = vpop.xlane.xlu0 %2992
    %v2994 = vsel %vm2133, %v2730, 0.0
    %2995 = vadd.xlane.f32.xlu0 %v2994
    %v2996 = vpop.xlane.xlu0 %2995
    %v2997 = vsel %vm2133, %v2731, 0.0
    %2998 = vadd.xlane.f32.xlu0 %v2997
    %v2999 = vpop.xlane.xlu0 %2998
    %v3000 = vsel %vm2133, %v2732, 0.0
    %3001 = vadd.xlane.f32.xlu0 %v3000
    %v3002 = vpop.xlane.xlu0 %3001
    %v3003 = vsel %vm2133, %v2733, 0.0
    %3004 = vadd.xlane.f32.xlu0 %v3003
    %v3005 = vpop.xlane.xlu0 %3004
    %v3006 = vsel %vm2133, %v2734, 0.0
    %3007 = vadd.xlane.f32.xlu0 %v3006
    %v3008 = vpop.xlane.xlu0 %3007
    %v3009 = vsel %vm2133, %v2735, 0.0
    %3010 = vadd.xlane.f32.xlu0 %v3009
    %v3011 = vpop.xlane.xlu0 %3010
    %v3012 = vsel %vm2133, %v2736, 0.0
    %3013 = vadd.xlane.f32.xlu0 %v3012
    %v3014 = vpop.xlane.xlu0 %3013
    %v3015 = vsel %vm2133, %v2737, 0.0
    %3016 = vadd.xlane.f32.xlu0 %v3015
    %v3017 = vpop.xlane.xlu0 %3016
    %v3018 = vsel %vm2133, %v2738, 0.0
    %3019 = vadd.xlane.f32.xlu0 %v3018
    %v3020 = vpop.xlane.xlu0 %3019
    %v3021 = vsel %vm2133, %v2739, 0.0
    %3022 = vadd.xlane.f32.xlu0 %v3021
    %v3023 = vpop.xlane.xlu0 %3022
    %v3024 = vsel %vm2133, %v2740, 0.0
    %3025 = vadd.xlane.f32.xlu0 %v3024
    %v3026 = vpop.xlane.xlu0 %3025
    %v3027 = vsel %vm2133, %v2741, 0.0
    %3028 = vadd.xlane.f32.xlu0 %v3027
    %v3029 = vpop.xlane.xlu0 %3028
    %v3030 = vsel %vm2133, %v2742, 0.0
    %3031 = vadd.xlane.f32.xlu0 %v3030
    %v3032 = vpop.xlane.xlu0 %3031
    %v3033 = vsel %vm2133, %v2743, 0.0
    %3034 = vadd.xlane.f32.xlu0 %v3033
    %v3035 = vpop.xlane.xlu0 %3034
    %v3036 = vsel %vm2133, %v2744, 0.0
    %3037 = vadd.xlane.f32.xlu0 %v3036
    %v3038 = vpop.xlane.xlu0 %3037
    %v3039 = vsel %vm2133, %v2745, 0.0
    %3040 = vadd.xlane.f32.xlu0 %v3039
    %v3041 = vpop.xlane.xlu0 %3040
    %v3042 = vsel %vm2133, %v2746, 0.0
    %3043 = vadd.xlane.f32.xlu0 %v3042
    %v3044 = vpop.xlane.xlu0 %3043
    %v3045 = vsel %vm2133, %v2747, 0.0
    %3046 = vadd.xlane.f32.xlu0 %v3045
    %v3047 = vpop.xlane.xlu0 %3046
    %v3048 = vsel %vm2133, %v2748, 0.0
    %3049 = vadd.xlane.f32.xlu0 %v3048
    %v3050 = vpop.xlane.xlu0 %3049
    %v3051 = vsel %vm2133, %v2749, 0.0
    %3052 = vadd.xlane.f32.xlu0 %v3051
    %v3053 = vpop.xlane.xlu0 %3052
    %v3054 = vsel %vm2133, %v2750, 0.0
    %3055 = vadd.xlane.f32.xlu0 %v3054
    %v3056 = vpop.xlane.xlu0 %3055
    %v3057 = vsel %vm2133, %v2751, 0.0
    %3058 = vadd.xlane.f32.xlu0 %v3057
    %v3059 = vpop.xlane.xlu0 %3058
    %v3060 = vsel %vm2133, %v2752, 0.0
    %3061 = vadd.xlane.f32.xlu0 %v3060
    %v3062 = vpop.xlane.xlu0 %3061
    %v3063 = vsel %vm2133, %v2753, 0.0
    %3064 = vadd.xlane.f32.xlu0 %v3063
    %v3065 = vpop.xlane.xlu0 %3064
    %v3066 = vsel %vm2133, %v2754, 0.0
    %3067 = vadd.xlane.f32.xlu0 %v3066
    %v3068 = vpop.xlane.xlu0 %3067
    %v3069 = vsel %vm2133, %v2755, 0.0
    %3070 = vadd.xlane.f32.xlu0 %v3069
    %v3071 = vpop.xlane.xlu0 %3070
    %v3072 = vsel %vm2133, %v2756, 0.0
    %3073 = vadd.xlane.f32.xlu0 %v3072
    %v3074 = vpop.xlane.xlu0 %3073
    %v3075 = vsel %vm2133, %v2757, 0.0
    %3076 = vadd.xlane.f32.xlu0 %v3075
    %v3077 = vpop.xlane.xlu0 %3076
    %v3078 = vsel %vm2133, %v2758, 0.0
    %3079 = vadd.xlane.f32.xlu0 %v3078
    %v3080 = vpop.xlane.xlu0 %3079
    %v3081 = vsel %vm2133, %v2759, 0.0
    %3082 = vadd.xlane.f32.xlu0 %v3081
    %v3083 = vpop.xlane.xlu0 %3082
    %v3084 = vsel %vm2133, %v2760, 0.0
    %3085 = vadd.xlane.f32.xlu0 %v3084
    %v3086 = vpop.xlane.xlu0 %3085
    %v3087 = vsel %vm2133, %v2761, 0.0
    %3088 = vadd.xlane.f32.xlu0 %v3087
    %v3089 = vpop.xlane.xlu0 %3088
    %v3090 = vsel %vm2133, %v2762, 0.0
    %3091 = vadd.xlane.f32.xlu0 %v3090
    %v3092 = vpop.xlane.xlu0 %3091
    %v3093 = vsel %vm2133, %v2763, 0.0
    %3094 = vadd.xlane.f32.xlu0 %v3093
    %v3095 = vpop.xlane.xlu0 %3094
    %v3096 = vsel %vm2133, %v2764, 0.0
    %3097 = vadd.xlane.f32.xlu0 %v3096
    %v3098 = vpop.xlane.xlu0 %3097
    %v3099 = vsel %vm2133, %v2765, 0.0
    %3100 = vadd.xlane.f32.xlu0 %v3099
    %v3101 = vpop.xlane.xlu0 %3100
    %v3102 = vsel %vm2133, %v2766, 0.0
    %3103 = vadd.xlane.f32.xlu0 %v3102
    %v3104 = vpop.xlane.xlu0 %3103
    %v3105 = vsel %vm2133, %v2767, 0.0
    %3106 = vadd.xlane.f32.xlu0 %v3105
    %v3107 = vpop.xlane.xlu0 %3106
    %v3108 = vsel %vm2133, %v2768, 0.0
    %3109 = vadd.xlane.f32.xlu0 %v3108
    %v3110 = vpop.xlane.xlu0 %3109
    %v3111 = vsel %vm2133, %v2769, 0.0
    %3112 = vadd.xlane.f32.xlu0 %v3111
    %v3113 = vpop.xlane.xlu0 %3112
    %v3114 = vsel %vm2133, %v2770, 0.0
    %3115 = vadd.xlane.f32.xlu0 %v3114
    %v3116 = vpop.xlane.xlu0 %3115
    %v3117 = vsel %vm2133, %v2771, 0.0
    %3118 = vadd.xlane.f32.xlu0 %v3117
    %v3119 = vpop.xlane.xlu0 %3118
    %v3120 = vsel %vm2133, %v2772, 0.0
    %3121 = vadd.xlane.f32.xlu0 %v3120
    %v3122 = vpop.xlane.xlu0 %3121
    %v3123 = vsel %vm2133, %v2773, 0.0
    %3124 = vadd.xlane.f32.xlu0 %v3123
    %v3125 = vpop.xlane.xlu0 %3124
    %v3126 = vsel %vm2133, %v2774, 0.0
    %3127 = vadd.xlane.f32.xlu0 %v3126
    %v3128 = vpop.xlane.xlu0 %3127
    %v3129 = vsel %vm2133, %v2775, 0.0
    %3130 = vadd.xlane.f32.xlu0 %v3129
    %v3131 = vpop.xlane.xlu0 %3130
    %v3132 = vsel %vm2133, %v2776, 0.0
    %3133 = vadd.xlane.f32.xlu0 %v3132
    %v3134 = vpop.xlane.xlu0 %3133
    %v3135 = vsel %vm2133, %v2777, 0.0
    %3136 = vadd.xlane.f32.xlu0 %v3135
    %v3137 = vpop.xlane.xlu0 %3136
    %v3138 = vsel %vm2133, %v2778, 0.0
    %3139 = vadd.xlane.f32.xlu0 %v3138
    %v3140 = vpop.xlane.xlu0 %3139
    %v3141 = vsel %vm2133, %v2779, 0.0
    %3142 = vadd.xlane.f32.xlu0 %v3141
    %v3143 = vpop.xlane.xlu0 %3142
    %v3144 = vsel %vm2133, %v2780, 0.0
    %3145 = vadd.xlane.f32.xlu0 %v3144
    %v3146 = vpop.xlane.xlu0 %3145
    %v3147 = vsel %vm2133, %v2781, 0.0
    %3148 = vadd.xlane.f32.xlu0 %v3147
    %v3149 = vpop.xlane.xlu0 %3148
    %v3150 = vsel %vm2133, %v2782, 0.0
    %3151 = vadd.xlane.f32.xlu0 %v3150
    %v3152 = vpop.xlane.xlu0 %3151
    %v3153 = vsel %vm2133, %v2783, 0.0
    %3154 = vadd.xlane.f32.xlu0 %v3153
    %v3155 = vpop.xlane.xlu0 %3154
    %v3156 = vsel %vm2133, %v2784, 0.0
    %3157 = vadd.xlane.f32.xlu0 %v3156
    %v3158 = vpop.xlane.xlu0 %3157
    %v3159 = vsel %vm2133, %v2785, 0.0
    %3160 = vadd.xlane.f32.xlu0 %v3159
    %v3161 = vpop.xlane.xlu0 %3160
    %v3162 = vsel %vm2133, %v2786, 0.0
    %3163 = vadd.xlane.f32.xlu0 %v3162
    %v3164 = vpop.xlane.xlu0 %3163
    %v3165 = vsel %vm2133, %v2787, 0.0
    %3166 = vadd.xlane.f32.xlu0 %v3165
    %v3167 = vpop.xlane.xlu0 %3166
    %v3168 = vsel %vm2133, %v2788, 0.0
    %3169 = vadd.xlane.f32.xlu0 %v3168
    %v3170 = vpop.xlane.xlu0 %3169
    %v3171 = vsel %vm2133, %v2789, 0.0
    %3172 = vadd.xlane.f32.xlu0 %v3171
    %v3173 = vpop.xlane.xlu0 %3172
    %v3174 = vsel %vm2133, %v2790, 0.0
    %3175 = vadd.xlane.f32.xlu0 %v3174
    %v3176 = vpop.xlane.xlu0 %3175
    %v3177 = vsel %vm2133, %v2791, 0.0
    %3178 = vadd.xlane.f32.xlu0 %v3177
    %v3179 = vpop.xlane.xlu0 %3178
    %v3180 = vsel %vm2133, %v2792, 0.0
    %3181 = vadd.xlane.f32.xlu0 %v3180
    %v3182 = vpop.xlane.xlu0 %3181
    %v3183 = vsel %vm2133, %v2793, 0.0
    %3184 = vadd.xlane.f32.xlu0 %v3183
    %v3185 = vpop.xlane.xlu0 %3184
    %v3186 = vsel %vm2133, %v2794, 0.0
    %3187 = vadd.xlane.f32.xlu0 %v3186
    %v3188 = vpop.xlane.xlu0 %3187
    %v3189 = vsel %vm2133, %v2795, 0.0
    %3190 = vadd.xlane.f32.xlu0 %v3189
    %v3191 = vpop.xlane.xlu0 %3190
    %v3192 = vsel %vm2133, %v2796, 0.0
    %3193 = vadd.xlane.f32.xlu0 %v3192
    %v3194 = vpop.xlane.xlu0 %3193
    %v3195 = vsel %vm2133, %v2797, 0.0
    %3196 = vadd.xlane.f32.xlu0 %v3195
    %v3197 = vpop.xlane.xlu0 %3196
    %v3198 = vsel %vm2133, %v2798, 0.0
    %3199 = vadd.xlane.f32.xlu0 %v3198
    %v3200 = vpop.xlane.xlu0 %3199
    %v3201 = vsel %vm2133, %v2799, 0.0
    %3202 = vadd.xlane.f32.xlu0 %v3201
    %v3203 = vpop.xlane.xlu0 %3202
    %v3204 = vsel %vm2133, %v2800, 0.0
    %3205 = vadd.xlane.f32.xlu0 %v3204
    %v3206 = vpop.xlane.xlu0 %3205
    %v3207 = vsel %vm2133, %v2801, 0.0
    %3208 = vadd.xlane.f32.xlu0 %v3207
    %v3209 = vpop.xlane.xlu0 %3208
    %v3210 = vsel %vm2133, %v2802, 0.0
    %3211 = vadd.xlane.f32.xlu0 %v3210
    %v3212 = vpop.xlane.xlu0 %3211
    %v3213 = vsel %vm2133, %v2803, 0.0
    %3214 = vadd.xlane.f32.xlu0 %v3213
    %v3215 = vpop.xlane.xlu0 %3214
    %v3216 = vsel %vm2133, %v2804, 0.0
    %3217 = vadd.xlane.f32.xlu0 %v3216
    %v3218 = vpop.xlane.xlu0 %3217
    %v3219 = vsel %vm2133, %v2805, 0.0
    %3220 = vadd.xlane.f32.xlu0 %v3219
    %v3221 = vpop.xlane.xlu0 %3220
    %v3222 = vsel %vm2133, %v2806, 0.0
    %3223 = vadd.xlane.f32.xlu0 %v3222
    %v3224 = vpop.xlane.xlu0 %3223
    %v3225 = vsel %vm2133, %v2807, 0.0
    %3226 = vadd.xlane.f32.xlu0 %v3225
    %v3227 = vpop.xlane.xlu0 %3226
    %v3228 = vsel %vm2133, %v2808, 0.0
    %3229 = vadd.xlane.f32.xlu0 %v3228
    %v3230 = vpop.xlane.xlu0 %3229
    %v3231 = vsel %vm2133, %v2809, 0.0
    %3232 = vadd.xlane.f32.xlu0 %v3231
    %v3233 = vpop.xlane.xlu0 %3232
    %v3234 = vsel %vm2133, %v2810, 0.0
    %3235 = vadd.xlane.f32.xlu0 %v3234
    %v3236 = vpop.xlane.xlu0 %3235
    %v3237 = vsel %vm2133, %v2811, 0.0
    %3238 = vadd.xlane.f32.xlu0 %v3237
    %v3239 = vpop.xlane.xlu0 %3238
    %v3240 = vsel %vm2133, %v2812, 0.0
    %3241 = vadd.xlane.f32.xlu0 %v3240
    %v3242 = vpop.xlane.xlu0 %3241
    %v3243 = vsel %vm2133, %v2813, 0.0
    %3244 = vadd.xlane.f32.xlu0 %v3243
    %v3245 = vpop.xlane.xlu0 %3244
    %v3246 = vsel %vm2133, %v2814, 0.0
    %3247 = vadd.xlane.f32.xlu0 %v3246
    %v3248 = vpop.xlane.xlu0 %3247
    %v3249 = vsel %vm2133, %v2815, 0.0
    %3250 = vadd.xlane.f32.xlu0 %v3249
    %v3251 = vpop.xlane.xlu0 %3250
    %v3252 = vsel %vm2133, %v2816, 0.0
    %3253 = vadd.xlane.f32.xlu0 %v3252
    %v3254 = vpop.xlane.xlu0 %3253
    %v3255 = vsel %vm2133, %v2817, 0.0
    %3256 = vadd.xlane.f32.xlu0 %v3255
    %v3257 = vpop.xlane.xlu0 %3256
    %v3258 = vsel %vm2133, %v2818, 0.0
    %3259 = vadd.xlane.f32.xlu0 %v3258
    %v3260 = vpop.xlane.xlu0 %3259
    %v3261 = vsel %vm2133, %v2819, 0.0
    %3262 = vadd.xlane.f32.xlu0 %v3261
    %v3263 = vpop.xlane.xlu0 %3262
    %v3264 = vsel %vm2133, %v2820, 0.0
    %3265 = vadd.xlane.f32.xlu0 %v3264
    %v3266 = vpop.xlane.xlu0 %3265
    %v3267 = vsel %vm2133, %v2821, 0.0
    %3268 = vadd.xlane.f32.xlu0 %v3267
    %v3269 = vpop.xlane.xlu0 %3268
    %v3270 = vsel %vm2133, %v2822, 0.0
    %3271 = vadd.xlane.f32.xlu0 %v3270
    %v3272 = vpop.xlane.xlu0 %3271
    %v3273 = vsel %vm2133, %v2823, 0.0
    %3274 = vadd.xlane.f32.xlu0 %v3273
    %v3275 = vpop.xlane.xlu0 %3274
    %v3276 = vsel %vm2133, %v2824, 0.0
    %3277 = vadd.xlane.f32.xlu0 %v3276
    %v3278 = vpop.xlane.xlu0 %3277
    %v3279 = vsel %vm2133, %v2825, 0.0
    %3280 = vadd.xlane.f32.xlu0 %v3279
    %v3281 = vpop.xlane.xlu0 %3280
    %v3282 = vsel %vm2133, %v2826, 0.0
    %3283 = vadd.xlane.f32.xlu0 %v3282
    %v3284 = vpop.xlane.xlu0 %3283
    %v3285 = vsel %vm2133, %v2827, 0.0
    %3286 = vadd.xlane.f32.xlu0 %v3285
    %v3287 = vpop.xlane.xlu0 %3286
    %v3288 = vsel %vm2133, %v2828, 0.0
    %3289 = vadd.xlane.f32.xlu0 %v3288
    %v3290 = vpop.xlane.xlu0 %3289
    %v3291 = vsel %vm2133, %v2829, 0.0
    %3292 = vadd.xlane.f32.xlu0 %v3291
    %v3293 = vpop.xlane.xlu0 %3292
    %v3294 = vsel %vm2133, %v2830, 0.0
    %3295 = vadd.xlane.f32.xlu0 %v3294
    %v3296 = vpop.xlane.xlu0 %3295
    %v3297 = vsel %vm2133, %v2831, 0.0
    %3298 = vadd.xlane.f32.xlu0 %v3297
    %v3299 = vpop.xlane.xlu0 %3298
    %v3300 = vsel %vm2133, %v2832, 0.0
    %3301 = vadd.xlane.f32.xlu0 %v3300
    %v3302 = vpop.xlane.xlu0 %3301
    %v3303 = vsel %vm2133, %v2833, 0.0
    %3304 = vadd.xlane.f32.xlu0 %v3303
    %v3305 = vpop.xlane.xlu0 %3304
    %v3306 = vsel %vm2133, %v2834, 0.0
    %3307 = vadd.xlane.f32.xlu0 %v3306
    %v3308 = vpop.xlane.xlu0 %3307
    %v3309 = vsel %vm2133, %v2835, 0.0
    %3310 = vadd.xlane.f32.xlu0 %v3309
    %v3311 = vpop.xlane.xlu0 %3310
    %v3312 = vsel %vm2133, %v2836, 0.0
    %3313 = vadd.xlane.f32.xlu0 %v3312
    %v3314 = vpop.xlane.xlu0 %3313
    %v3315 = vsel %vm2133, %v2837, 0.0
    %3316 = vadd.xlane.f32.xlu0 %v3315
    %v3317 = vpop.xlane.xlu0 %3316
    %v3318 = vsel %vm2133, %v2838, 0.0
    %3319 = vadd.xlane.f32.xlu0 %v3318
    %v3320 = vpop.xlane.xlu0 %3319
    %v3321 = vsel %vm2133, %v2839, 0.0
    %3322 = vadd.xlane.f32.xlu0 %v3321
    %v3323 = vpop.xlane.xlu0 %3322
    %v3324 = vsel %vm2133, %v2840, 0.0
    %3325 = vadd.xlane.f32.xlu0 %v3324
    %v3326 = vpop.xlane.xlu0 %3325
    %v3327 = vsel %vm2133, %v2841, 0.0
    %3328 = vadd.xlane.f32.xlu0 %v3327
    %v3329 = vpop.xlane.xlu0 %3328
    %v3330 = vsel %vm2133, %v2842, 0.0
    %3331 = vadd.xlane.f32.xlu0 %v3330
    %v3332 = vpop.xlane.xlu0 %3331
    %v3333 = vsel %vm2133, %v2843, 0.0
    %3334 = vadd.xlane.f32.xlu0 %v3333
    %v3335 = vpop.xlane.xlu0 %3334
    %v3336 = vsel %vm2133, %v2844, 0.0
    %3337 = vadd.xlane.f32.xlu0 %v3336
    %v3338 = vpop.xlane.xlu0 %3337
    %v3339 = vsel %vm2133, %v2845, 0.0
    %3340 = vadd.xlane.f32.xlu0 %v3339
    %v3341 = vpop.xlane.xlu0 %3340
    %v3342 = vsel %vm2133, %v2846, 0.0
    %3343 = vadd.xlane.f32.xlu0 %v3342
    %v3344 = vpop.xlane.xlu0 %3343
    %v3345 = vsel %vm2133, %v2847, 0.0
    %3346 = vadd.xlane.f32.xlu0 %v3345
    %v3347 = vpop.xlane.xlu0 %3346
    %v3348 = vsel %vm2133, %v2848, 0.0
    %3349 = vadd.xlane.f32.xlu0 %v3348
    %v3350 = vpop.xlane.xlu0 %3349
    %v3351 = vsel %vm2133, %v2849, 0.0
    %3352 = vadd.xlane.f32.xlu0 %v3351
    %v3353 = vpop.xlane.xlu0 %3352
    %v3354 = vsel %vm2133, %v2850, 0.0
    %3355 = vadd.xlane.f32.xlu0 %v3354
    %v3356 = vpop.xlane.xlu0 %3355
    %v3357 = vsel %vm2133, %v2851, 0.0
    %3358 = vadd.xlane.f32.xlu0 %v3357
    %v3359 = vpop.xlane.xlu0 %3358
    %v3360 = vsel %vm2133, %v2852, 0.0
    %3361 = vadd.xlane.f32.xlu0 %v3360
    %v3362 = vpop.xlane.xlu0 %3361
    %v3363 = vsel %vm2133, %v2853, 0.0
    %3364 = vadd.xlane.f32.xlu0 %v3363
    %v3365 = vpop.xlane.xlu0 %3364
    %v3366 = vsel %vm2133, %v2854, 0.0
    %3367 = vadd.xlane.f32.xlu0 %v3366
    %v3368 = vpop.xlane.xlu0 %3367
    %v3369 = vsel %vm2133, %v2855, 0.0
    %3370 = vadd.xlane.f32.xlu0 %v3369
    %v3371 = vpop.xlane.xlu0 %3370
    %v3372 = vsel %vm2133, %v2856, 0.0
    %3373 = vadd.xlane.f32.xlu0 %v3372
    %v3374 = vpop.xlane.xlu0 %3373
    %v3375 = vsel %vm2133, %v2857, 0.0
    %3376 = vadd.xlane.f32.xlu0 %v3375
    %v3377 = vpop.xlane.xlu0 %3376
    %v3378 = vsel %vm2133, %v2858, 0.0
    %3379 = vadd.xlane.f32.xlu0 %v3378
    %v3380 = vpop.xlane.xlu0 %3379
    %v3381 = vsel %vm2133, %v2859, 0.0
    %3382 = vadd.xlane.f32.xlu0 %v3381
    %v3383 = vpop.xlane.xlu0 %3382
    %v3384 = vsel %vm2133, %v2860, 0.0
    %3385 = vadd.xlane.f32.xlu0 %v3384
    %v3386 = vpop.xlane.xlu0 %3385
    %v3387 = vsel %vm2133, %v2861, 0.0
    %3388 = vadd.xlane.f32.xlu0 %v3387
    %v3389 = vpop.xlane.xlu0 %3388
    %v3390 = vsel %vm2133, %v2862, 0.0
    %3391 = vadd.xlane.f32.xlu0 %v3390
    %v3392 = vpop.xlane.xlu0 %3391
    %v3393 = vsel %vm2133, %v2863, 0.0
    %3394 = vadd.xlane.f32.xlu0 %v3393
    %v3395 = vpop.xlane.xlu0 %3394
    %v3396 = vsel %vm2133, %v2864, 0.0
    %3397 = vadd.xlane.f32.xlu0 %v3396
    %v3398 = vpop.xlane.xlu0 %3397
    %v3399 = vsel %vm2133, %v2865, 0.0
    %3400 = vadd.xlane.f32.xlu0 %v3399
    %v3401 = vpop.xlane.xlu0 %3400
    %v3402 = vsel %vm2133, %v2866, 0.0
    %3403 = vadd.xlane.f32.xlu0 %v3402
    %v3404 = vpop.xlane.xlu0 %3403
    %v3405 = vsel %vm2133, %v2867, 0.0
    %3406 = vadd.xlane.f32.xlu0 %v3405
    %v3407 = vpop.xlane.xlu0 %3406
    %v3408 = vsel %vm2133, %v2868, 0.0
    %3409 = vadd.xlane.f32.xlu0 %v3408
    %v3410 = vpop.xlane.xlu0 %3409
    %v3411 = vsel %vm2133, %v2869, 0.0
    %3412 = vadd.xlane.f32.xlu0 %v3411
    %v3413 = vpop.xlane.xlu0 %3412
    %v3414 = vsel %vm2133, %v2870, 0.0
    %3415 = vadd.xlane.f32.xlu0 %v3414
    %v3416 = vpop.xlane.xlu0 %3415
    %v3417 = vsel %vm2133, %v2871, 0.0
    %3418 = vadd.xlane.f32.xlu0 %v3417
    %v3419 = vpop.xlane.xlu0 %3418
    %v3420 = vsel %vm2133, %v2872, 0.0
    %3421 = vadd.xlane.f32.xlu0 %v3420
    %v3422 = vpop.xlane.xlu0 %3421
    %v3423 = vsel %vm2133, %v2873, 0.0
    %3424 = vadd.xlane.f32.xlu0 %v3423
    %v3425 = vpop.xlane.xlu0 %3424
    %v3426 = vsel %vm2133, %v2874, 0.0
    %3427 = vadd.xlane.f32.xlu0 %v3426
    %v3428 = vpop.xlane.xlu0 %3427
    %v3429 = vsel %vm2133, %v2875, 0.0
    %3430 = vadd.xlane.f32.xlu0 %v3429
    %v3431 = vpop.xlane.xlu0 %3430
    %v3432 = vsel %vm2133, %v2876, 0.0
    %3433 = vadd.xlane.f32.xlu0 %v3432
    %v3434 = vpop.xlane.xlu0 %3433
    %v3435 = vsel %vm2133, %v2877, 0.0
    %3436 = vadd.xlane.f32.xlu0 %v3435
    %v3437 = vpop.xlane.xlu0 %3436
    %v3438 = vsel %vm2133, %v2878, 0.0
    %3439 = vadd.xlane.f32.xlu0 %v3438
    %v3440 = vpop.xlane.xlu0 %3439
    %v3441 = vsel %vm2133, %v2879, 0.0
    %3442 = vadd.xlane.f32.xlu0 %v3441
    %v3443 = vpop.xlane.xlu0 %3442
    %v3444 = vsel %vm2133, %v2880, 0.0
    %3445 = vadd.xlane.f32.xlu0 %v3444
    %v3446 = vpop.xlane.xlu0 %3445
    %v3447 = vsel %vm2133, %v2881, 0.0
    %3448 = vadd.xlane.f32.xlu0 %v3447
    %v3449 = vpop.xlane.xlu0 %3448
    %v3450 = vsel %vm2133, %v2882, 0.0
    %3451 = vadd.xlane.f32.xlu0 %v3450
    %v3452 = vpop.xlane.xlu0 %3451
    %v3453 = vsel %vm2133, %v2883, 0.0
    %3454 = vadd.xlane.f32.xlu0 %v3453
    %v3455 = vpop.xlane.xlu0 %3454
    %v3456 = vsel %vm2133, %v2884, 0.0
    %3457 = vadd.xlane.f32.xlu0 %v3456
    %v3458 = vpop.xlane.xlu0 %3457
    %v3459 = vsel %vm2133, %v2885, 0.0
    %3460 = vadd.xlane.f32.xlu0 %v3459
    %v3461 = vpop.xlane.xlu0 %3460
    %v3462 = vsel %vm2133, %v2886, 0.0
    %3463 = vadd.xlane.f32.xlu0 %v3462
    %v3464 = vpop.xlane.xlu0 %3463
    %v3465 = vsel %vm2133, %v2887, 0.0
    %3466 = vadd.xlane.f32.xlu0 %v3465
    %v3467 = vpop.xlane.xlu0 %3466
    %v3468 = vsel %vm2133, %v2888, 0.0
    %3469 = vadd.xlane.f32.xlu0 %v3468
    %v3470 = vpop.xlane.xlu0 %3469
    %v3471 = vsel %vm2133, %v2889, 0.0
    %3472 = vadd.xlane.f32.xlu0 %v3471
    %v3473 = vpop.xlane.xlu0 %3472
    %v3474 = vsel %vm2133, %v2890, 0.0
    %3475 = vadd.xlane.f32.xlu0 %v3474
    %v3476 = vpop.xlane.xlu0 %3475
    %v3477 = vsel %vm2133, %v2891, 0.0
    %3478 = vadd.xlane.f32.xlu0 %v3477
    %v3479 = vpop.xlane.xlu0 %3478
    %v3480 = vsel %vm2133, %v2892, 0.0
    %3481 = vadd.xlane.f32.xlu0 %v3480
    %v3482 = vpop.xlane.xlu0 %3481
    %v3483 = vsel %vm2133, %v2893, 0.0
    %3484 = vadd.xlane.f32.xlu0 %v3483
    %v3485 = vpop.xlane.xlu0 %3484
    %v3486 = vsel %vm2133, %v2894, 0.0
    %3487 = vadd.xlane.f32.xlu0 %v3486
    %v3488 = vpop.xlane.xlu0 %3487
    %v3489 = vsel %vm2133, %v2895, 0.0
    %3490 = vadd.xlane.f32.xlu0 %v3489
    %v3491 = vpop.xlane.xlu0 %3490
    %v3492 = vsel %vm2133, %v2896, 0.0
    %3493 = vadd.xlane.f32.xlu0 %v3492
    %v3494 = vpop.xlane.xlu0 %3493
    %v3495 = vsel %vm2133, %v2897, 0.0
    %3496 = vadd.xlane.f32.xlu0 %v3495
    %v3497 = vpop.xlane.xlu0 %3496
    %v3498 = vsel %vm2133, %v2898, 0.0
    %3499 = vadd.xlane.f32.xlu0 %v3498
    %v3500 = vpop.xlane.xlu0 %3499
    %v3501 = vsel %vm2133, %v2899, 0.0
    %3502 = vadd.xlane.f32.xlu0 %v3501
    %v3503 = vpop.xlane.xlu0 %3502
    %v3504 = vsel %vm2133, %v2900, 0.0
    %3505 = vadd.xlane.f32.xlu0 %v3504
    %v3506 = vpop.xlane.xlu0 %3505
    %v3507 = vsel %vm2133, %v2901, 0.0
    %3508 = vadd.xlane.f32.xlu0 %v3507
    %v3509 = vpop.xlane.xlu0 %3508
    %v3510 = vsel %vm2133, %v2902, 0.0
    %3511 = vadd.xlane.f32.xlu0 %v3510
    %v3512 = vpop.xlane.xlu0 %3511
    %v3513 = vsel %vm2133, %v2903, 0.0
    %3514 = vadd.xlane.f32.xlu0 %v3513
    %v3515 = vpop.xlane.xlu0 %3514
    %v3516 = vsel %vm2133, %v2904, 0.0
    %3517 = vadd.xlane.f32.xlu0 %v3516
    %v3518 = vpop.xlane.xlu0 %3517
    %v3519 = vsel %vm2133, %v2905, 0.0
    %3520 = vadd.xlane.f32.xlu0 %v3519
    %v3521 = vpop.xlane.xlu0 %3520
    %v3522 = vsel %vm2133, %v2906, 0.0
    %3523 = vadd.xlane.f32.xlu0 %v3522
    %v3524 = vpop.xlane.xlu0 %3523
    %v3525 = vsel %vm2133, %v2907, 0.0
    %3526 = vadd.xlane.f32.xlu0 %v3525
    %v3527 = vpop.xlane.xlu0 %3526
    %v3528 = vsel %vm2133, %v2908, 0.0
    %3529 = vadd.xlane.f32.xlu0 %v3528
    %v3530 = vpop.xlane.xlu0 %3529
    %v3531 = vsel %vm2133, %v2909, 0.0
    %3532 = vadd.xlane.f32.xlu0 %v3531
    %v3533 = vpop.xlane.xlu0 %3532
    %v3534 = vsel %vm2133, %v2910, 0.0
    %3535 = vadd.xlane.f32.xlu0 %v3534
    %v3536 = vpop.xlane.xlu0 %3535
    %v3537 = vsel %vm2133, %v2911, 0.0
    %3538 = vadd.xlane.f32.xlu0 %v3537
    %v3539 = vpop.xlane.xlu0 %3538
    %v3540 = vsel %vm2133, %v2912, 0.0
    %3541 = vadd.xlane.f32.xlu0 %v3540
    %v3542 = vpop.xlane.xlu0 %3541
    %v3543 = vsel %vm2133, %v2913, 0.0
    %3544 = vadd.xlane.f32.xlu0 %v3543
    %v3545 = vpop.xlane.xlu0 %3544
    %v3546 = vsel %vm2133, %v2914, 0.0
    %3547 = vadd.xlane.f32.xlu0 %v3546
    %v3548 = vpop.xlane.xlu0 %3547
    %v3549 = vsel %vm2133, %v2915, 0.0
    %3550 = vadd.xlane.f32.xlu0 %v3549
    %v3551 = vpop.xlane.xlu0 %3550
    %v3552 = vsel %vm2133, %v2916, 0.0
    %3553 = vadd.xlane.f32.xlu0 %v3552
    %v3554 = vpop.xlane.xlu0 %3553
    %v3555 = vsel %vm2133, %v2917, 0.0
    %3556 = vadd.xlane.f32.xlu0 %v3555
    %v3557 = vpop.xlane.xlu0 %3556
    %v3558 = vsel %vm2133, %v2918, 0.0
    %3559 = vadd.xlane.f32.xlu0 %v3558
    %v3560 = vpop.xlane.xlu0 %3559
    %v3561 = vsel %vm2133, %v2919, 0.0
    %3562 = vadd.xlane.f32.xlu0 %v3561
    %v3563 = vpop.xlane.xlu0 %3562
    %v3564 = vsel %vm2133, %v2920, 0.0
    %3565 = vadd.xlane.f32.xlu0 %v3564
    %v3566 = vpop.xlane.xlu0 %3565
    %v3567 = vsel %vm2133, %v2921, 0.0
    %3568 = vadd.xlane.f32.xlu0 %v3567
    %v3569 = vpop.xlane.xlu0 %3568
    %v3570 = vsel %vm2133, %v2922, 0.0
    %3571 = vadd.xlane.f32.xlu0 %v3570
    %v3572 = vpop.xlane.xlu0 %3571
    %v3573 = vsel %vm2133, %v2923, 0.0
    %3574 = vadd.xlane.f32.xlu0 %v3573
    %v3575 = vpop.xlane.xlu0 %3574
    %v3576 = vsel %vm2133, %v2924, 0.0
    %3577 = vadd.xlane.f32.xlu0 %v3576
    %v3578 = vpop.xlane.xlu0 %3577
    %v3579 = vsel %vm2133, %v2925, 0.0
    %3580 = vadd.xlane.f32.xlu0 %v3579
    %v3581 = vpop.xlane.xlu0 %3580
    %v3582 = vsel %vm2133, %v2926, 0.0
    %3583 = vadd.xlane.f32.xlu0 %v3582
    %v3584 = vpop.xlane.xlu0 %3583
    %v3585 = vsel %vm2133, %v2927, 0.0
    %3586 = vadd.xlane.f32.xlu0 %v3585
    %v3587 = vpop.xlane.xlu0 %3586
    %v3588 = vsel %vm2133, %v2928, 0.0
    %3589 = vadd.xlane.f32.xlu0 %v3588
    %v3590 = vpop.xlane.xlu0 %3589
    %v3591 = vsel %vm2133, %v2929, 0.0
    %3592 = vadd.xlane.f32.xlu0 %v3591
    %v3593 = vpop.xlane.xlu0 %3592
    %v3594 = vsel %vm2133, %v2930, 0.0
    %3595 = vadd.xlane.f32.xlu0 %v3594
    %v3596 = vpop.xlane.xlu0 %3595
    %v3597 = vsel %vm2133, %v2931, 0.0
    %3598 = vadd.xlane.f32.xlu0 %v3597
    %v3599 = vpop.xlane.xlu0 %3598
    %v3600 = vsel %vm2133, %v2932, 0.0
    %3601 = vadd.xlane.f32.xlu0 %v3600
    %v3602 = vpop.xlane.xlu0 %3601
    %v3603 = vsel %vm2133, %v2933, 0.0
    %3604 = vadd.xlane.f32.xlu0 %v3603
    %v3605 = vpop.xlane.xlu0 %3604
    %v3606 = vsel %vm2133, %v2934, 0.0
    %3607 = vadd.xlane.f32.xlu0 %v3606
    %v3608 = vpop.xlane.xlu0 %3607
    %v3609 = vsel %vm2133, %v2935, 0.0
    %3610 = vadd.xlane.f32.xlu0 %v3609
    %v3611 = vpop.xlane.xlu0 %3610
    %v3612 = vsel %vm2133, %v2936, 0.0
    %3613 = vadd.xlane.f32.xlu0 %v3612
    %v3614 = vpop.xlane.xlu0 %3613
    %v3615 = vsel %vm2133, %v2937, 0.0
    %3616 = vadd.xlane.f32.xlu0 %v3615
    %v3617 = vpop.xlane.xlu0 %3616
    %v3618 = vsel %vm2133, %v2938, 0.0
    %3619 = vadd.xlane.f32.xlu0 %v3618
    %v3620 = vpop.xlane.xlu0 %3619
    %v3621 = vsel %vm2133, %v2939, 0.0
    %3622 = vadd.xlane.f32.xlu0 %v3621
    %v3623 = vpop.xlane.xlu0 %3622
    %v3624 = vsel %vm2133, %v2940, 0.0
    %3625 = vadd.xlane.f32.xlu0 %v3624
    %v3626 = vpop.xlane.xlu0 %3625
    %v3627 = vsel %vm2133, %v2941, 0.0
    %3628 = vadd.xlane.f32.xlu0 %v3627
    %v3629 = vpop.xlane.xlu0 %3628
    %v3630 = vsel %vm2133, %v2942, 0.0
    %3631 = vadd.xlane.f32.xlu0 %v3630
    %v3632 = vpop.xlane.xlu0 %3631
    %v3633 = vsel %vm2133, %v2943, 0.0
    %3634 = vadd.xlane.f32.xlu0 %v3633
    %v3635 = vpop.xlane.xlu0 %3634
    %v3636 = vsel %vm2133, %v2944, 0.0
    %3637 = vadd.xlane.f32.xlu0 %v3636
    %v3638 = vpop.xlane.xlu0 %3637
    %v3639 = vsel %vm2133, %v2945, 0.0
    %3640 = vadd.xlane.f32.xlu0 %v3639
    %v3641 = vpop.xlane.xlu0 %3640
    %v3642 = vsel %vm2133, %v2946, 0.0
    %3643 = vadd.xlane.f32.xlu0 %v3642
    %v3644 = vpop.xlane.xlu0 %3643
    %v3645 = vsel %vm2133, %v2947, 0.0
    %3646 = vadd.xlane.f32.xlu0 %v3645
    %v3647 = vpop.xlane.xlu0 %3646
    %v3648 = vsel %vm2133, %v2948, 0.0
    %3649 = vadd.xlane.f32.xlu0 %v3648
    %v3650 = vpop.xlane.xlu0 %3649
    %v3651 = vsel %vm2133, %v2949, 0.0
    %3652 = vadd.xlane.f32.xlu0 %v3651
    %v3653 = vpop.xlane.xlu0 %3652
    %v3654 = vsel %vm2133, %v2950, 0.0
    %3655 = vadd.xlane.f32.xlu0 %v3654
    %v3656 = vpop.xlane.xlu0 %3655
    %v3657 = vsel %vm2133, %v2951, 0.0
    %3658 = vadd.xlane.f32.xlu0 %v3657
    %v3659 = vpop.xlane.xlu0 %3658
    %v3660 = vsel %vm2133, %v2952, 0.0
    %3661 = vadd.xlane.f32.xlu0 %v3660
    %v3662 = vpop.xlane.xlu0 %3661
    %v3663 = vsel %vm2133, %v2953, 0.0
    %3664 = vadd.xlane.f32.xlu0 %v3663
    %v3665 = vpop.xlane.xlu0 %3664
    %v3666 = vsel %vm2133, %v2954, 0.0
    %3667 = vadd.xlane.f32.xlu0 %v3666
    %v3668 = vpop.xlane.xlu0 %3667
    %v3669 = vsel %vm2133, %v2955, 0.0
    %3670 = vadd.xlane.f32.xlu0 %v3669
    %v3671 = vpop.xlane.xlu0 %3670
    %v3672 = vsel %vm2133, %v2956, 0.0
    %3673 = vadd.xlane.f32.xlu0 %v3672
    %v3674 = vpop.xlane.xlu0 %3673
    %v3675 = vsel %vm2133, %v2957, 0.0
    %3676 = vadd.xlane.f32.xlu0 %v3675
    %v3677 = vpop.xlane.xlu0 %3676
    %v3678 = vsel %vm2133, %v2958, 0.0
    %3679 = vadd.xlane.f32.xlu0 %v3678
    %v3680 = vpop.xlane.xlu0 %3679
    %v3681 = vsel %vm2133, %v2959, 0.0
    %3682 = vadd.xlane.f32.xlu0 %v3681
    %v3683 = vpop.xlane.xlu0 %3682
    %v3684 = vsel %vm2133, %v2960, 0.0
    %3685 = vadd.xlane.f32.xlu0 %v3684
    %v3686 = vpop.xlane.xlu0 %3685
    %v3687 = vsel %vm2133, %v2961, 0.0
    %3688 = vadd.xlane.f32.xlu0 %v3687
    %v3689 = vpop.xlane.xlu0 %3688
    %v3690 = vsel %vm2133, %v2962, 0.0
    %3691 = vadd.xlane.f32.xlu0 %v3690
    %v3692 = vpop.xlane.xlu0 %3691
    %v3693 = vsel %vm2133, %v2963, 0.0
    %3694 = vadd.xlane.f32.xlu0 %v3693
    %v3695 = vpop.xlane.xlu0 %3694
    %v3696 = vsel %vm2133, %v2964, 0.0
    %3697 = vadd.xlane.f32.xlu0 %v3696
    %v3698 = vpop.xlane.xlu0 %3697
    %v3699 = vsel %vm2133, %v2965, 0.0
    %3700 = vadd.xlane.f32.xlu0 %v3699
    %v3701 = vpop.xlane.xlu0 %3700
    %v3702 = vsel %vm2133, %v2966, 0.0
    %3703 = vadd.xlane.f32.xlu0 %v3702
    %v3704 = vpop.xlane.xlu0 %3703
    %v3705 = vsel %vm2133, %v2967, 0.0
    %3706 = vadd.xlane.f32.xlu0 %v3705
    %v3707 = vpop.xlane.xlu0 %3706
    %v3708 = vsel %vm2133, %v2968, 0.0
    %3709 = vadd.xlane.f32.xlu0 %v3708
    %v3710 = vpop.xlane.xlu0 %3709
    %v3711 = vsel %vm2133, %v2969, 0.0
    %3712 = vadd.xlane.f32.xlu0 %v3711
    %v3713 = vpop.xlane.xlu0 %3712
    %v3714 = vsel %vm2133, %v2970, 0.0
    %3715 = vadd.xlane.f32.xlu0 %v3714
    %v3716 = vpop.xlane.xlu0 %3715
    %v3717 = vsel %vm2133, %v2971, 0.0
    %3718 = vadd.xlane.f32.xlu0 %v3717
    %v3719 = vpop.xlane.xlu0 %3718
    %v3720 = vsel %vm2133, %v2972, 0.0
    %3721 = vadd.xlane.f32.xlu0 %v3720
    %v3722 = vpop.xlane.xlu0 %3721
    %v3723 = vsel %vm2133, %v2973, 0.0
    %3724 = vadd.xlane.f32.xlu0 %v3723
    %v3725 = vpop.xlane.xlu0 %3724
    %v3726 = vsel %vm2133, %v2974, 0.0
    %3727 = vadd.xlane.f32.xlu0 %v3726
    %v3728 = vpop.xlane.xlu0 %3727
    %v3729 = vsel %vm2133, %v2975, 0.0
    %3730 = vadd.xlane.f32.xlu0 %v3729
    %v3731 = vpop.xlane.xlu0 %3730
    %v3732 = vsel %vm2133, %v2976, 0.0
    %3733 = vadd.xlane.f32.xlu0 %v3732
    %v3734 = vpop.xlane.xlu0 %3733
    %v3735 = vsel %vm2133, %v2977, 0.0
    %3736 = vadd.xlane.f32.xlu0 %v3735
    %v3737 = vpop.xlane.xlu0 %3736
    %v3738 = vsel %vm2133, %v2978, 0.0
    %3739 = vadd.xlane.f32.xlu0 %v3738
    %v3740 = vpop.xlane.xlu0 %3739
    %v3741 = vsel %vm2133, %v2979, 0.0
    %3742 = vadd.xlane.f32.xlu0 %v3741
    %v3743 = vpop.xlane.xlu0 %3742
    %v3744 = vsel %vm2133, %v2980, 0.0
    %3745 = vadd.xlane.f32.xlu0 %v3744
    %v3746 = vpop.xlane.xlu0 %3745
    %v3747 = vsel %vm2133, %v2981, 0.0
    %3748 = vadd.xlane.f32.xlu0 %v3747
    %v3749 = vpop.xlane.xlu0 %3748
    %v3750 = vld [vmem:[%s4] sm:$0xff]
    %v3751 = vld [vmem:[%s4 + $0x8] sm:$0xff]
    %v3752 = vld [vmem:[%s4 + $0x10] sm:$0xff]
    %v3753 = vld [vmem:[%s4 + $0x18] sm:$0xff]
    %v3754 = vld [vmem:[%s4 + $0x20] sm:$0xff]
    %v3755 = vld [vmem:[%s4 + $0x28] sm:$0xff]
    %v3756 = vld [vmem:[%s4 + $0x30] sm:$0xff]
    %v3757 = vld [vmem:[%s4 + $0x38] sm:$0xff]
    %v3758 = vld [vmem:[%s4 + $0x40] sm:$0xff]
    %v3759 = vld [vmem:[%s4 + $0x48] sm:$0xff]
    %v3760 = vld [vmem:[%s4 + $0x50] sm:$0xff]
    %v3761 = vld [vmem:[%s4 + $0x58] sm:$0xff]
    %v3762 = vld [vmem:[%s4 + $0x60] sm:$0xff]
    %v3763 = vld [vmem:[%s4 + $0x68] sm:$0xff]
    %v3764 = vld [vmem:[%s4 + $0x70] sm:$0xff]
    %v3765 = vld [vmem:[%s4 + $0x78] sm:$0xff]
    %v3766 = vld [vmem:[%s5] sm:$0x1]
    %v3768 = vperm.slane %v3766, 0
    %v4026 = vlaneseq
    %v4027 = vand.u32 %v4026, 127
    %v4028 = vperm.slane %v2984, %v4027
    %v4029 = vadd.s32 %v4027, 4294967288
    %v4030 = vperm.slane %v2987, %v4029
    %vm4031 = vcmask 130112
    %v4032 = vsel %vm4031, %v4030, %v4028
    %v4033 = vadd.s32 %v4027, 4294967280
    %v4034 = vperm.slane %v2990, %v4033
    %vm4035 = vcmask 195712
    %v4036 = vsel %vm4035, %v4034, %v4032
    %v4037 = vadd.s32 %v4027, 4294967272
    %v4038 = vperm.slane %v2993, %v4037
    %vm4039 = vcmask 261312
    %v4040 = vsel %vm4039, %v4038, %v4036
    %v4041 = vadd.s32 %v4027, 4294967264
    %v4042 = vperm.slane %v2996, %v4041
    %vm4043 = vcmask 326912
    %v4044 = vsel %vm4043, %v4042, %v4040
    %v4045 = vadd.s32 %v4027, 4294967256
    %v4046 = vperm.slane %v2999, %v4045
    %vm4047 = vcmask 392512
    %v4048 = vsel %vm4047, %v4046, %v4044
    %v4049 = vadd.s32 %v4027, 4294967248
    %v4050 = vperm.slane %v3002, %v4049
    %vm4051 = vcmask 458112
    %v4052 = vsel %vm4051, %v4050, %v4048
    %v4053 = vadd.s32 %v4027, 4294967240
    %v4054 = vperm.slane %v3005, %v4053
    %vm4055 = vcmask 523712
    %v4056 = vsel %vm4055, %v4054, %v4052
    %v4057 = vadd.s32 %v4027, 4294967232
    %v4058 = vperm.slane %v3008, %v4057
    %vm4059 = vcmask 589312
    %v4060 = vsel %vm4059, %v4058, %v4056
    %v4061 = vadd.s32 %v4027, 4294967224
    %v4062 = vperm.slane %v3011, %v4061
    %vm4063 = vcmask 654912
    %v4064 = vsel %vm4063, %v4062, %v4060
    %v4065 = vadd.s32 %v4027, 4294967216
    %v4066 = vperm.slane %v3014, %v4065
    %vm4067 = vcmask 720512
    %v4068 = vsel %vm4067, %v4066, %v4064
    %v4069 = vadd.s32 %v4027, 4294967208
    %v4070 = vperm.slane %v3017, %v4069
    %vm4071 = vcmask 786112
    %v4072 = vsel %vm4071, %v4070, %v4068
    %v4073 = vadd.s32 %v4027, 4294967200
    %v4074 = vperm.slane %v3020, %v4073
    %vm4075 = vcmask 851712
    %v4076 = vsel %vm4075, %v4074, %v4072
    %v4077 = vadd.s32 %v4027, 4294967192
    %v4078 = vperm.slane %v3023, %v4077
    %vm4079 = vcmask 917312
    %v4080 = vsel %vm4079, %v4078, %v4076
    %v4081 = vadd.s32 %v4027, 4294967184
    %v4082 = vperm.slane %v3026, %v4081
    %vm4083 = vcmask 982912
    %v4084 = vsel %vm4083, %v4082, %v4080
    %v4085 = vadd.s32 %v4027, 4294967176
    %v4086 = vperm.slane %v3029, %v4085
    %vm4087 = vcmask 1048512
    %v4088 = vsel %vm4087, %v4086, %v4084
    %v4089 = vperm.slane %v3032, %v4027
    %v4090 = vperm.slane %v3035, %v4029
    %v4091 = vsel %vm4031, %v4090, %v4089
    %v4092 = vperm.slane %v3038, %v4033
    %v4093 = vsel %vm4035, %v4092, %v4091
    %v4094 = vperm.slane %v3041, %v4037
    %v4095 = vsel %vm4039, %v4094, %v4093
    %v4096 = vperm.slane %v3044, %v4041
    %v4097 = vsel %vm4043, %v4096, %v4095
    %v4098 = vperm.slane %v3047, %v4045
    %v4099 = vsel %vm4047, %v4098, %v4097
    %v4100 = vperm.slane %v3050, %v4049
    %v4101 = vsel %vm4051, %v4100, %v4099
    %v4102 = vperm.slane %v3053, %v4053
    %v4103 = vsel %vm4055, %v4102, %v4101
    %v4104 = vperm.slane %v3056, %v4057
    %v4105 = vsel %vm4059, %v4104, %v4103
    %v4106 = vperm.slane %v3059, %v4061
    %v4107 = vsel %vm4063, %v4106, %v4105
    %v4108 = vperm.slane %v3062, %v4065
    %v4109 = vsel %vm4067, %v4108, %v4107
    %v4110 = vperm.slane %v3065, %v4069
    %v4111 = vsel %vm4071, %v4110, %v4109
    %v4112 = vperm.slane %v3068, %v4073
    %v4113 = vsel %vm4075, %v4112, %v4111
    %v4114 = vperm.slane %v3071, %v4077
    %v4115 = vsel %vm4079, %v4114, %v4113
    %v4116 = vperm.slane %v3074, %v4081
    %v4117 = vsel %vm4083, %v4116, %v4115
    %v4118 = vperm.slane %v3077, %v4085
    %v4119 = vsel %vm4087, %v4118, %v4117
    %v4120 = vperm.slane %v3080, %v4027
    %v4121 = vperm.slane %v3083, %v4029
    %v4122 = vsel %vm4031, %v4121, %v4120
    %v4123 = vperm.slane %v3086, %v4033
    %v4124 = vsel %vm4035, %v4123, %v4122
    %v4125 = vperm.slane %v3089, %v4037
    %v4126 = vsel %vm4039, %v4125, %v4124
    %v4127 = vperm.slane %v3092, %v4041
    %v4128 = vsel %vm4043, %v4127, %v4126
    %v4129 = vperm.slane %v3095, %v4045
    %v4130 = vsel %vm4047, %v4129, %v4128
    %v4131 = vperm.slane %v3098, %v4049
    %v4132 = vsel %vm4051, %v4131, %v4130
    %v4133 = vperm.slane %v3101, %v4053
    %v4134 = vsel %vm4055, %v4133, %v4132
    %v4135 = vperm.slane %v3104, %v4057
    %v4136 = vsel %vm4059, %v4135, %v4134
    %v4137 = vperm.slane %v3107, %v4061
    %v4138 = vsel %vm4063, %v4137, %v4136
    %v4139 = vperm.slane %v3110, %v4065
    %v4140 = vsel %vm4067, %v4139, %v4138
    %v4141 = vperm.slane %v3113, %v4069
    %v4142 = vsel %vm4071, %v4141, %v4140
    %v4143 = vperm.slane %v3116, %v4073
    %v4144 = vsel %vm4075, %v4143, %v4142
    %v4145 = vperm.slane %v3119, %v4077
    %v4146 = vsel %vm4079, %v4145, %v4144
    %v4147 = vperm.slane %v3122, %v4081
    %v4148 = vsel %vm4083, %v4147, %v4146
    %v4149 = vperm.slane %v3125, %v4085
    %v4150 = vsel %vm4087, %v4149, %v4148
    %v4151 = vperm.slane %v3128, %v4027
    %v4152 = vperm.slane %v3131, %v4029
    %v4153 = vsel %vm4031, %v4152, %v4151
    %v4154 = vperm.slane %v3134, %v4033
    %v4155 = vsel %vm4035, %v4154, %v4153
    %v4156 = vperm.slane %v3137, %v4037
    %v4157 = vsel %vm4039, %v4156, %v4155
    %v4158 = vperm.slane %v3140, %v4041
    %v4159 = vsel %vm4043, %v4158, %v4157
    %v4160 = vperm.slane %v3143, %v4045
    %v4161 = vsel %vm4047, %v4160, %v4159
    %v4162 = vperm.slane %v3146, %v4049
    %v4163 = vsel %vm4051, %v4162, %v4161
    %v4164 = vperm.slane %v3149, %v4053
    %v4165 = vsel %vm4055, %v4164, %v4163
    %v4166 = vperm.slane %v3152, %v4057
    %v4167 = vsel %vm4059, %v4166, %v4165
    %v4168 = vperm.slane %v3155, %v4061
    %v4169 = vsel %vm4063, %v4168, %v4167
    %v4170 = vperm.slane %v3158, %v4065
    %v4171 = vsel %vm4067, %v4170, %v4169
    %v4172 = vperm.slane %v3161, %v4069
    %v4173 = vsel %vm4071, %v4172, %v4171
    %v4174 = vperm.slane %v3164, %v4073
    %v4175 = vsel %vm4075, %v4174, %v4173
    %v4176 = vperm.slane %v3167, %v4077
    %v4177 = vsel %vm4079, %v4176, %v4175
    %v4178 = vperm.slane %v3170, %v4081
    %v4179 = vsel %vm4083, %v4178, %v4177
    %v4180 = vperm.slane %v3173, %v4085
    %v4181 = vsel %vm4087, %v4180, %v4179
    %v4182 = vperm.slane %v3176, %v4027
    %v4183 = vperm.slane %v3179, %v4029
    %v4184 = vsel %vm4031, %v4183, %v4182
    %v4185 = vperm.slane %v3182, %v4033
    %v4186 = vsel %vm4035, %v4185, %v4184
    %v4187 = vperm.slane %v3185, %v4037
    %v4188 = vsel %vm4039, %v4187, %v4186
    %v4189 = vperm.slane %v3188, %v4041
    %v4190 = vsel %vm4043, %v4189, %v4188
    %v4191 = vperm.slane %v3191, %v4045
    %v4192 = vsel %vm4047, %v4191, %v4190
    %v4193 = vperm.slane %v3194, %v4049
    %v4194 = vsel %vm4051, %v4193, %v4192
    %v4195 = vperm.slane %v3197, %v4053
    %v4196 = vsel %vm4055, %v4195, %v4194
    %v4197 = vperm.slane %v3200, %v4057
    %v4198 = vsel %vm4059, %v4197, %v4196
    %v4199 = vperm.slane %v3203, %v4061
    %v4200 = vsel %vm4063, %v4199, %v4198
    %v4201 = vperm.slane %v3206, %v4065
    %v4202 = vsel %vm4067, %v4201, %v4200
    %v4203 = vperm.slane %v3209, %v4069
    %v4204 = vsel %vm4071, %v4203, %v4202
    %v4205 = vperm.slane %v3212, %v4073
    %v4206 = vsel %vm4075, %v4205, %v4204
    %v4207 = vperm.slane %v3215, %v4077
    %v4208 = vsel %vm4079, %v4207, %v4206
    %v4209 = vperm.slane %v3218, %v4081
    %v4210 = vsel %vm4083, %v4209, %v4208
    %v4211 = vperm.slane %v3221, %v4085
    %v4212 = vsel %vm4087, %v4211, %v4210
    %v4213 = vperm.slane %v3224, %v4027
    %v4214 = vperm.slane %v3227, %v4029
    %v4215 = vsel %vm4031, %v4214, %v4213
    %v4216 = vperm.slane %v3230, %v4033
    %v4217 = vsel %vm4035, %v4216, %v4215
    %v4218 = vperm.slane %v3233, %v4037
    %v4219 = vsel %vm4039, %v4218, %v4217
    %v4220 = vperm.slane %v3236, %v4041
    %v4221 = vsel %vm4043, %v4220, %v4219
    %v4222 = vperm.slane %v3239, %v4045
    %v4223 = vsel %vm4047, %v4222, %v4221
    %v4224 = vperm.slane %v3242, %v4049
    %v4225 = vsel %vm4051, %v4224, %v4223
    %v4226 = vperm.slane %v3245, %v4053
    %v4227 = vsel %vm4055, %v4226, %v4225
    %v4228 = vperm.slane %v3248, %v4057
    %v4229 = vsel %vm4059, %v4228, %v4227
    %v4230 = vperm.slane %v3251, %v4061
    %v4231 = vsel %vm4063, %v4230, %v4229
    %v4232 = vperm.slane %v3254, %v4065
    %v4233 = vsel %vm4067, %v4232, %v4231
    %v4234 = vperm.slane %v3257, %v4069
    %v4235 = vsel %vm4071, %v4234, %v4233
    %v4236 = vperm.slane %v3260, %v4073
    %v4237 = vsel %vm4075, %v4236, %v4235
    %v4238 = vperm.slane %v3263, %v4077
    %v4239 = vsel %vm4079, %v4238, %v4237
    %v4240 = vperm.slane %v3266, %v4081
    %v4241 = vsel %vm4083, %v4240, %v4239
    %v4242 = vperm.slane %v3269, %v4085
    %v4243 = vsel %vm4087, %v4242, %v4241
    %v4244 = vperm.slane %v3272, %v4027
    %v4245 = vperm.slane %v3275, %v4029
    %v4246 = vsel %vm4031, %v4245, %v4244
    %v4247 = vperm.slane %v3278, %v4033
    %v4248 = vsel %vm4035, %v4247, %v4246
    %v4249 = vperm.slane %v3281, %v4037
    %v4250 = vsel %vm4039, %v4249, %v4248
    %v4251 = vperm.slane %v3284, %v4041
    %v4252 = vsel %vm4043, %v4251, %v4250
    %v4253 = vperm.slane %v3287, %v4045
    %v4254 = vsel %vm4047, %v4253, %v4252
    %v4255 = vperm.slane %v3290, %v4049
    %v4256 = vsel %vm4051, %v4255, %v4254
    %v4257 = vperm.slane %v3293, %v4053
    %v4258 = vsel %vm4055, %v4257, %v4256
    %v4259 = vperm.slane %v3296, %v4057
    %v4260 = vsel %vm4059, %v4259, %v4258
    %v4261 = vperm.slane %v3299, %v4061
    %v4262 = vsel %vm4063, %v4261, %v4260
    %v4263 = vperm.slane %v3302, %v4065
    %v4264 = vsel %vm4067, %v4263, %v4262
    %v4265 = vperm.slane %v3305, %v4069
    %v4266 = vsel %vm4071, %v4265, %v4264
    %v4267 = vperm.slane %v3308, %v4073
    %v4268 = vsel %vm4075, %v4267, %v4266
    %v4269 = vperm.slane %v3311, %v4077
    %v4270 = vsel %vm4079, %v4269, %v4268
    %v4271 = vperm.slane %v3314, %v4081
    %v4272 = vsel %vm4083, %v4271, %v4270
    %v4273 = vperm.slane %v3317, %v4085
    %v4274 = vsel %vm4087, %v4273, %v4272
    %v4275 = vperm.slane %v3320, %v4027
    %v4276 = vperm.slane %v3323, %v4029
    %v4277 = vsel %vm4031, %v4276, %v4275
    %v4278 = vperm.slane %v3326, %v4033
    %v4279 = vsel %vm4035, %v4278, %v4277
    %v4280 = vperm.slane %v3329, %v4037
    %v4281 = vsel %vm4039, %v4280, %v4279
    %v4282 = vperm.slane %v3332, %v4041
    %v4283 = vsel %vm4043, %v4282, %v4281
    %v4284 = vperm.slane %v3335, %v4045
    %v4285 = vsel %vm4047, %v4284, %v4283
    %v4286 = vperm.slane %v3338, %v4049
    %v4287 = vsel %vm4051, %v4286, %v4285
    %v4288 = vperm.slane %v3341, %v4053
    %v4289 = vsel %vm4055, %v4288, %v4287
    %v4290 = vperm.slane %v3344, %v4057
    %v4291 = vsel %vm4059, %v4290, %v4289
    %v4292 = vperm.slane %v3347, %v4061
    %v4293 = vsel %vm4063, %v4292, %v4291
    %v4294 = vperm.slane %v3350, %v4065
    %v4295 = vsel %vm4067, %v4294, %v4293
    %v4296 = vperm.slane %v3353, %v4069
    %v4297 = vsel %vm4071, %v4296, %v4295
    %v4298 = vperm.slane %v3356, %v4073
    %v4299 = vsel %vm4075, %v4298, %v4297
    %v4300 = vperm.slane %v3359, %v4077
    %v4301 = vsel %vm4079, %v4300, %v4299
    %v4302 = vperm.slane %v3362, %v4081
    %v4303 = vsel %vm4083, %v4302, %v4301
    %v4304 = vperm.slane %v3365, %v4085
    %v4305 = vsel %vm4087, %v4304, %v4303
    %v4306 = vperm.slane %v3368, %v4027
    %v4307 = vperm.slane %v3371, %v4029
    %v4308 = vsel %vm4031, %v4307, %v4306
    %v4309 = vperm.slane %v3374, %v4033
    %v4310 = vsel %vm4035, %v4309, %v4308
    %v4311 = vperm.slane %v3377, %v4037
    %v4312 = vsel %vm4039, %v4311, %v4310
    %v4313 = vperm.slane %v3380, %v4041
    %v4314 = vsel %vm4043, %v4313, %v4312
    %v4315 = vperm.slane %v3383, %v4045
    %v4316 = vsel %vm4047, %v4315, %v4314
    %v4317 = vperm.slane %v3386, %v4049
    %v4318 = vsel %vm4051, %v4317, %v4316
    %v4319 = vperm.slane %v3389, %v4053
    %v4320 = vsel %vm4055, %v4319, %v4318
    %v4321 = vperm.slane %v3392, %v4057
    %v4322 = vsel %vm4059, %v4321, %v4320
    %v4323 = vperm.slane %v3395, %v4061
    %v4324 = vsel %vm4063, %v4323, %v4322
    %v4325 = vperm.slane %v3398, %v4065
    %v4326 = vsel %vm4067, %v4325, %v4324
    %v4327 = vperm.slane %v3401, %v4069
    %v4328 = vsel %vm4071, %v4327, %v4326
    %v4329 = vperm.slane %v3404, %v4073
    %v4330 = vsel %vm4075, %v4329, %v4328
    %v4331 = vperm.slane %v3407, %v4077
    %v4332 = vsel %vm4079, %v4331, %v4330
    %v4333 = vperm.slane %v3410, %v4081
    %v4334 = vsel %vm4083, %v4333, %v4332
    %v4335 = vperm.slane %v3413, %v4085
    %v4336 = vsel %vm4087, %v4335, %v4334
    %v4337 = vperm.slane %v3416, %v4027
    %v4338 = vperm.slane %v3419, %v4029
    %v4339 = vsel %vm4031, %v4338, %v4337
    %v4340 = vperm.slane %v3422, %v4033
    %v4341 = vsel %vm4035, %v4340, %v4339
    %v4342 = vperm.slane %v3425, %v4037
    %v4343 = vsel %vm4039, %v4342, %v4341
    %v4344 = vperm.slane %v3428, %v4041
    %v4345 = vsel %vm4043, %v4344, %v4343
    %v4346 = vperm.slane %v3431, %v4045
    %v4347 = vsel %vm4047, %v4346, %v4345
    %v4348 = vperm.slane %v3434, %v4049
    %v4349 = vsel %vm4051, %v4348, %v4347
    %v4350 = vperm.slane %v3437, %v4053
    %v4351 = vsel %vm4055, %v4350, %v4349
    %v4352 = vperm.slane %v3440, %v4057
    %v4353 = vsel %vm4059, %v4352, %v4351
    %v4354 = vperm.slane %v3443, %v4061
    %v4355 = vsel %vm4063, %v4354, %v4353
    %v4356 = vperm.slane %v3446, %v4065
    %v4357 = vsel %vm4067, %v4356, %v4355
    %v4358 = vperm.slane %v3449, %v4069
    %v4359 = vsel %vm4071, %v4358, %v4357
    %v4360 = vperm.slane %v3452, %v4073
    %v4361 = vsel %vm4075, %v4360, %v4359
    %v4362 = vperm.slane %v3455, %v4077
    %v4363 = vsel %vm4079, %v4362, %v4361
    %v4364 = vperm.slane %v3458, %v4081
    %v4365 = vsel %vm4083, %v4364, %v4363
    %v4366 = vperm.slane %v3461, %v4085
    %v4367 = vsel %vm4087, %v4366, %v4365
    %v4368 = vperm.slane %v3464, %v4027
    %v4369 = vperm.slane %v3467, %v4029
    %v4370 = vsel %vm4031, %v4369, %v4368
    %v4371 = vperm.slane %v3470, %v4033
    %v4372 = vsel %vm4035, %v4371, %v4370
    %v4373 = vperm.slane %v3473, %v4037
    %v4374 = vsel %vm4039, %v4373, %v4372
    %v4375 = vperm.slane %v3476, %v4041
    %v4376 = vsel %vm4043, %v4375, %v4374
    %v4377 = vperm.slane %v3479, %v4045
    %v4378 = vsel %vm4047, %v4377, %v4376
    %v4379 = vperm.slane %v3482, %v4049
    %v4380 = vsel %vm4051, %v4379, %v4378
    %v4381 = vperm.slane %v3485, %v4053
    %v4382 = vsel %vm4055, %v4381, %v4380
    %v4383 = vperm.slane %v3488, %v4057
    %v4384 = vsel %vm4059, %v4383, %v4382
    %v4385 = vperm.slane %v3491, %v4061
    %v4386 = vsel %vm4063, %v4385, %v4384
    %v4387 = vperm.slane %v3494, %v4065
    %v4388 = vsel %vm4067, %v4387, %v4386
    %v4389 = vperm.slane %v3497, %v4069
    %v4390 = vsel %vm4071, %v4389, %v4388
    %v4391 = vperm.slane %v3500, %v4073
    %v4392 = vsel %vm4075, %v4391, %v4390
    %v4393 = vperm.slane %v3503, %v4077
    %v4394 = vsel %vm4079, %v4393, %v4392
    %v4395 = vperm.slane %v3506, %v4081
    %v4396 = vsel %vm4083, %v4395, %v4394
    %v4397 = vperm.slane %v3509, %v4085
    %v4398 = vsel %vm4087, %v4397, %v4396
    %v4399 = vperm.slane %v3512, %v4027
    %v4400 = vperm.slane %v3515, %v4029
    %v4401 = vsel %vm4031, %v4400, %v4399
    %v4402 = vperm.slane %v3518, %v4033
    %v4403 = vsel %vm4035, %v4402, %v4401
    %v4404 = vperm.slane %v3521, %v4037
    %v4405 = vsel %vm4039, %v4404, %v4403
    %v4406 = vperm.slane %v3524, %v4041
    %v4407 = vsel %vm4043, %v4406, %v4405
    %v4408 = vperm.slane %v3527, %v4045
    %v4409 = vsel %vm4047, %v4408, %v4407
    %v4410 = vperm.slane %v3530, %v4049
    %v4411 = vsel %vm4051, %v4410, %v4409
    %v4412 = vperm.slane %v3533, %v4053
    %v4413 = vsel %vm4055, %v4412, %v4411
    %v4414 = vperm.slane %v3536, %v4057
    %v4415 = vsel %vm4059, %v4414, %v4413
    %v4416 = vperm.slane %v3539, %v4061
    %v4417 = vsel %vm4063, %v4416, %v4415
    %v4418 = vperm.slane %v3542, %v4065
    %v4419 = vsel %vm4067, %v4418, %v4417
    %v4420 = vperm.slane %v3545, %v4069
    %v4421 = vsel %vm4071, %v4420, %v4419
    %v4422 = vperm.slane %v3548, %v4073
    %v4423 = vsel %vm4075, %v4422, %v4421
    %v4424 = vperm.slane %v3551, %v4077
    %v4425 = vsel %vm4079, %v4424, %v4423
    %v4426 = vperm.slane %v3554, %v4081
    %v4427 = vsel %vm4083, %v4426, %v4425
    %v4428 = vperm.slane %v3557, %v4085
    %v4429 = vsel %vm4087, %v4428, %v4427
    %v4430 = vperm.slane %v3560, %v4027
    %v4431 = vperm.slane %v3563, %v4029
    %v4432 = vsel %vm4031, %v4431, %v4430
    %v4433 = vperm.slane %v3566, %v4033
    %v4434 = vsel %vm4035, %v4433, %v4432
    %v4435 = vperm.slane %v3569, %v4037
    %v4436 = vsel %vm4039, %v4435, %v4434
    %v4437 = vperm.slane %v3572, %v4041
    %v4438 = vsel %vm4043, %v4437, %v4436
    %v4439 = vperm.slane %v3575, %v4045
    %v4440 = vsel %vm4047, %v4439, %v4438
    %v4441 = vperm.slane %v3578, %v4049
    %v4442 = vsel %vm4051, %v4441, %v4440
    %v4443 = vperm.slane %v3581, %v4053
    %v4444 = vsel %vm4055, %v4443, %v4442
    %v4445 = vperm.slane %v3584, %v4057
    %v4446 = vsel %vm4059, %v4445, %v4444
    %v4447 = vperm.slane %v3587, %v4061
    %v4448 = vsel %vm4063, %v4447, %v4446
    %v4449 = vperm.slane %v3590, %v4065
    %v4450 = vsel %vm4067, %v4449, %v4448
    %v4451 = vperm.slane %v3593, %v4069
    %v4452 = vsel %vm4071, %v4451, %v4450
    %v4453 = vperm.slane %v3596, %v4073
    %v4454 = vsel %vm4075, %v4453, %v4452
    %v4455 = vperm.slane %v3599, %v4077
    %v4456 = vsel %vm4079, %v4455, %v4454
    %v4457 = vperm.slane %v3602, %v4081
    %v4458 = vsel %vm4083, %v4457, %v4456
    %v4459 = vperm.slane %v3605, %v4085
    %v4460 = vsel %vm4087, %v4459, %v4458
    %v4461 = vperm.slane %v3608, %v4027
    %v4462 = vperm.slane %v3611, %v4029
    %v4463 = vsel %vm4031, %v4462, %v4461
    %v4464 = vperm.slane %v3614, %v4033
    %v4465 = vsel %vm4035, %v4464, %v4463
    %v4466 = vperm.slane %v3617, %v4037
    %v4467 = vsel %vm4039, %v4466, %v4465
    %v4468 = vperm.slane %v3620, %v4041
    %v4469 = vsel %vm4043, %v4468, %v4467
    %v4470 = vperm.slane %v3623, %v4045
    %v4471 = vsel %vm4047, %v4470, %v4469
    %v4472 = vperm.slane %v3626, %v4049
    %v4473 = vsel %vm4051, %v4472, %v4471
    %v4474 = vperm.slane %v3629, %v4053
    %v4475 = vsel %vm4055, %v4474, %v4473
    %v4476 = vperm.slane %v3632, %v4057
    %v4477 = vsel %vm4059, %v4476, %v4475
    %v4478 = vperm.slane %v3635, %v4061
    %v4479 = vsel %vm4063, %v4478, %v4477
    %v4480 = vperm.slane %v3638, %v4065
    %v4481 = vsel %vm4067, %v4480, %v4479
    %v4482 = vperm.slane %v3641, %v4069
    %v4483 = vsel %vm4071, %v4482, %v4481
    %v4484 = vperm.slane %v3644, %v4073
    %v4485 = vsel %vm4075, %v4484, %v4483
    %v4486 = vperm.slane %v3647, %v4077
    %v4487 = vsel %vm4079, %v4486, %v4485
    %v4488 = vperm.slane %v3650, %v4081
    %v4489 = vsel %vm4083, %v4488, %v4487
    %v4490 = vperm.slane %v3653, %v4085
    %v4491 = vsel %vm4087, %v4490, %v4489
    %v4492 = vperm.slane %v3656, %v4027
    %v4493 = vperm.slane %v3659, %v4029
    %v4494 = vsel %vm4031, %v4493, %v4492
    %v4495 = vperm.slane %v3662, %v4033
    %v4496 = vsel %vm4035, %v4495, %v4494
    %v4497 = vperm.slane %v3665, %v4037
    %v4498 = vsel %vm4039, %v4497, %v4496
    %v4499 = vperm.slane %v3668, %v4041
    %v4500 = vsel %vm4043, %v4499, %v4498
    %v4501 = vperm.slane %v3671, %v4045
    %v4502 = vsel %vm4047, %v4501, %v4500
    %v4503 = vperm.slane %v3674, %v4049
    %v4504 = vsel %vm4051, %v4503, %v4502
    %v4505 = vperm.slane %v3677, %v4053
    %v4506 = vsel %vm4055, %v4505, %v4504
    %v4507 = vperm.slane %v3680, %v4057
    %v4508 = vsel %vm4059, %v4507, %v4506
    %v4509 = vperm.slane %v3683, %v4061
    %v4510 = vsel %vm4063, %v4509, %v4508
    %v4511 = vperm.slane %v3686, %v4065
    %v4512 = vsel %vm4067, %v4511, %v4510
    %v4513 = vperm.slane %v3689, %v4069
    %v4514 = vsel %vm4071, %v4513, %v4512
    %v4515 = vperm.slane %v3692, %v4073
    %v4516 = vsel %vm4075, %v4515, %v4514
    %v4517 = vperm.slane %v3695, %v4077
    %v4518 = vsel %vm4079, %v4517, %v4516
    %v4519 = vperm.slane %v3698, %v4081
    %v4520 = vsel %vm4083, %v4519, %v4518
    %v4521 = vperm.slane %v3701, %v4085
    %v4522 = vsel %vm4087, %v4521, %v4520
    %v4523 = vperm.slane %v3704, %v4027
    %v4524 = vperm.slane %v3707, %v4029
    %v4525 = vsel %vm4031, %v4524, %v4523
    %v4526 = vperm.slane %v3710, %v4033
    %v4527 = vsel %vm4035, %v4526, %v4525
    %v4528 = vperm.slane %v3713, %v4037
    %v4529 = vsel %vm4039, %v4528, %v4527
    %v4530 = vperm.slane %v3716, %v4041
    %v4531 = vsel %vm4043, %v4530, %v4529
    %v4532 = vperm.slane %v3719, %v4045
    %v4533 = vsel %vm4047, %v4532, %v4531
    %v4534 = vperm.slane %v3722, %v4049
    %v4535 = vsel %vm4051, %v4534, %v4533
    %v4536 = vperm.slane %v3725, %v4053
    %v4537 = vsel %vm4055, %v4536, %v4535
    %v4538 = vperm.slane %v3728, %v4057
    %v4539 = vsel %vm4059, %v4538, %v4537
    %v4540 = vperm.slane %v3731, %v4061
    %v4541 = vsel %vm4063, %v4540, %v4539
    %v4542 = vperm.slane %v3734, %v4065
    %v4543 = vsel %vm4067, %v4542, %v4541
    %v4544 = vperm.slane %v3737, %v4069
    %v4545 = vsel %vm4071, %v4544, %v4543
    %v4546 = vperm.slane %v3740, %v4073
    %v4547 = vsel %vm4075, %v4546, %v4545
    %v4548 = vperm.slane %v3743, %v4077
    %v4549 = vsel %vm4079, %v4548, %v4547
    %v4550 = vperm.slane %v3746, %v4081
    %v4551 = vsel %vm4083, %v4550, %v4549
    %v4552 = vperm.slane %v3749, %v4085
    %v4553 = vsel %vm4087, %v4552, %v4551
    %vm4554 = vcmask 1041409
    %v4555 = vsel %vm4554, %v4119, %v4088
    %vm4556 = vcmask 1042434
    %v4557 = vsel %vm4556, %v4150, %v4555
    %vm4558 = vcmask 1043459
    %v4559 = vsel %vm4558, %v4181, %v4557
    %vm4560 = vcmask 1044484
    %v4561 = vsel %vm4560, %v4212, %v4559
    %vm4562 = vcmask 1045509
    %v4563 = vsel %vm4562, %v4243, %v4561
    %vm4564 = vcmask 1046534
    %v4565 = vsel %vm4564, %v4274, %v4563
    %vm4566 = vcmask 1047559
    %v4567 = vsel %vm4566, %v4305, %v4565
    %v4568 = vsel %vm4554, %v4367, %v4336
    %v4569 = vsel %vm4556, %v4398, %v4568
    %v4570 = vsel %vm4558, %v4429, %v4569
    %v4571 = vsel %vm4560, %v4460, %v4570
    %v4572 = vsel %vm4562, %v4491, %v4571
    %v4573 = vsel %vm4564, %v4522, %v4572
    %v4574 = vsel %vm4566, %v4553, %v4573
    %4577 = vmatpush.msra.mxu0 %v3765
    %4578 = vmatpush.msra.mxu0 %v3764
    %4579 = vmatpush.msra.mxu0 %v3763
    %4580 = vmatpush.msra.mxu0 %v3762
    %4581 = vmatpush.msra.mxu0 %v3761
    %4582 = vmatpush.msra.mxu0 %v3760
    %4583 = vmatpush.msra.mxu0 %v3759
    %4584 = vmatpush.msra.mxu0 %v3758
    %4585 = vmatpush.msra.mxu0 %v3757
    %4586 = vmatpush.msra.mxu0 %v3756
    %4587 = vmatpush.msra.mxu0 %v3755
    %4588 = vmatpush.msra.mxu0 %v3754
    %4589 = vmatpush.msra.mxu0 %v3753
    %4590 = vmatpush.msra.mxu0 %v3752
    %4591 = vmatpush.msra.mxu0 %v3751
    %4592 = vmatpush.msra.mxu0 %v3750
    %4593 = vmatmul.f32.gmra.mxu0 %v4567
    %v4594 = vpop.f32.mrf.mxu0
    %v4595 = vadd.f32 %v3768, %v4594
    %4596 = vmatmul.f32.gmra.mxu0 %v4574
    %v4597 = vpop.f32.mrf.mxu0
    %v4598 = vadd.f32 %v3768, %v4597
    %4599 = vdwg.mxu0
    %4600 = vst [vmem:[#allocation2] sm:$0xff] %v4595
    %4601 = vst [vmem:[#allocation2 + $0x8] sm:$0xff] %v4598
    // Predicated region
    $region26: #{tpu_custom_call.1} parent=1 // pred_check
      _
    $region27: #{tpu_custom_call.1} parent=1 // pred_check_branch
      %4603 = sbr.rel (0) target = $region29
    $region28: #{tpu_custom_call.1} parent=1 // pred_region
      %4605 = vsyncadd [#allocation3], 0
      %s4606 = sshll.u32 [#allocation2], 4
      %s4607 = int_to_ptr.vmem [resolvable:$true] %s4606
      %s4608 = sshll.u32 %s6, 4
      %s4609 = int_to_ptr.hbm [resolvable:$true] %s4608
      %4614 = dma.vmem_to_hbm [thread:$0]  %s4607, 256, %s4609, [#allocation3], 128, 128, 8
    $region29: #{tpu_custom_call.1} parent=1 // pred_fallthru
      _
    // Predicated region
    $region30: #{tpu_custom_call.1} parent=1 // pred_check
      _
    $region31: #{tpu_custom_call.1} parent=1 // pred_check_branch
      %4616 = sbr.rel (0) target = $region33
    $region32: #{tpu_custom_call.1} parent=1 // pred_region
      %4618 = dma.done [#allocation3], 256
    $region33: #{tpu_custom_call.1} parent=1 // pred_fallthru
      _
    %4619 = vsyncpa [#allocation3], 1

</llo_original>
